<compile_context>
chip_gen: v7x
topology: tpu7x:2x2x1
jax: 0.10.0
libtpu: 0.0.40
codegen_flags: <defaults>
</compile_context>

<pallas_src>
import jax
import jax.numpy as jnp
from jax.experimental import pallas as pl
from jax.experimental.pallas import tpu as pltpu

# ---------------- config (small, consistent with the module) ----------------
INPUT_DIM = 8
HIDDEN_DIM = 32
OUTPUT_DIM = 4
NUM_LAYERS = 2
BATCH = 2
ATTN_HEAD = 2
ATTN_SIZE = 16
SEQ_LEN = 8                      # x_frames
D_HEAD = ATTN_SIZE // ATTN_HEAD
REG_IN = ATTN_SIZE + HIDDEN_DIM  # regression_input_size


# ------------------------------ fused kernel ---------------------------------
def _lstm_dec_fused_kernel(
    x_ref, h0_ref, c0_ref, kv_ref,
    wih0_ref, whh0_ref, b0_ref,
    wih1_ref, whh1_ref, b1_ref,
    wq_ref, wk_ref, wv_ref, wo_ref,
    regw_ref, regb_ref,
    y_ref, attw_ref,
    seq0_sc, seq1_sc):
  f32 = jnp.float32
  H = HIDDEN_DIM
  S = SEQ_LEN
  B = BATCH
  L = NUM_LAYERS

  def run_lstm_layer(x_all, wih, whh, bias, h0, c0, store_h):
    # x_all: (S*B, Din), rows time-major [t0b0, t0b1, t1b0, ...].
    # Hoisted input projection: one (S*B, Din) @ (Din, 4H) matmul; only the
    # (B, H) @ (H, 4H) recurrence matmul stays inside the unrolled time loop.
    xg = jnp.dot(x_all, wih, preferred_element_type=f32) + bias    # (S*B, 4H)
    h = h0.astype(f32)                                             # (B, H)
    c = c0.astype(f32)
    for t in range(S):                       # static unroll, no grid overhead
      g = xg[t * B:(t + 1) * B, :] + jnp.dot(h, whh,
                                             preferred_element_type=f32)
      sg = jax.nn.sigmoid(g)                 # full-vreg sigmoid (4H = 128)
      th = jnp.tanh(g)                       # full-vreg tanh
      i_g = sg[:, 0:H]
      f_g = sg[:, H:2 * H]
      g_g = th[:, 2 * H:3 * H]
      o_g = sg[:, 3 * H:4 * H]
      c = f_g * c + i_g * g_g
      h = o_g * jnp.tanh(c)
      store_h(t, h)

  # ---- layer 0: output stored time-major into seq0_sc (feeds layer 1) ----
  def store_l0(t, h):
    seq0_sc[t * B:(t + 1) * B, :] = h
  run_lstm_layer(x_ref[...].astype(f32), wih0_ref[...], whh0_ref[...],
                 b0_ref[...], h0_ref[0], c0_ref[0], store_l0)

  # ---- layer 1: output stored batch-major into seq1_sc (== lstm_out) ----
  def store_l1(t, h):
    for b in range(B):
      seq1_sc[b * S + t:b * S + t + 1, :] = h[b:b + 1, :]
  run_lstm_layer(seq0_sc[...], wih1_ref[...], whh1_ref[...],
                 b1_ref[...], h0_ref[1], c0_ref[1], store_l1)

  # ---- attention (key/value = encoder h0) + ReLU(concat) + regressor ----
  kv = kv_ref[...].astype(f32)                                   # (B*L, H)
  k_all = jnp.dot(kv, wk_ref[...], preferred_element_type=f32)   # (B*L, A)
  v_all = jnp.dot(kv, wv_ref[...], preferred_element_type=f32)   # (B*L, A)
  wq = wq_ref[...]
  wo = wo_ref[...]
  regb = regb_ref[...].astype(f32)                               # (1, O)
  scale = 1.0 / (D_HEAD ** 0.5)

  for b in range(B):                         # static unroll over batch
    q_seq = seq1_sc[b * S:(b + 1) * S, :]                        # (S, H)
    qp = jnp.dot(q_seq, wq, preferred_element_type=f32)          # (S, A)
    kb = k_all[b * L:(b + 1) * L, :]                             # (L, A)
    vb = v_all[b * L:(b + 1) * L, :]                             # (L, A)
    heads = []
    for hd in range(ATTN_HEAD):              # static unroll over heads
      lo, hi = hd * D_HEAD, (hd + 1) * D_HEAD
      qh = qp[:, lo:hi]                                          # (S, Dh)
      kh = kb[:, lo:hi]                                          # (L, Dh)
      vh = vb[:, lo:hi]                                          # (L, Dh)
      scores = jax.lax.dot_general(
          qh, kh, (((1,), (1,)), ((), ())),
          preferred_element_type=f32) * scale                    # (S, L)
      scores = scores - jnp.max(scores, axis=-1, keepdims=True)
      e = jnp.exp(scores)
      w = e * pl.reciprocal(jnp.sum(e, axis=-1, keepdims=True), approx=True)
      attw_ref[b, hd] = w.astype(attw_ref.dtype)   # written once, tiny store
      heads.append(jnp.dot(w, vh, preferred_element_type=f32))   # (S, Dh)
    ctx = jnp.dot(jnp.concatenate(heads, axis=-1), wo,
                  preferred_element_type=f32)                    # (S, A)
    # ReLU(concat([attn_applied, lstm_out])) for this batch element.
    act = jnp.maximum(jnp.concatenate([ctx, q_seq], axis=-1), 0.0)  # (S, REG_IN)
    # Regressor: y = bias + sum_s act[s] @ W[s]  (W pre-reshaped to (S, REG_IN, O)
    # in the wrapper) -- equivalent to Linear(S*REG_IN, O) on the row-major flatten.
    y_b = regb
    for s in range(S):
      y_b = y_b + jnp.dot(act[s:s + 1, :], regw_ref[s],
                          preferred_element_type=f32)            # (1, O)
    y_ref[b:b + 1, :] = y_b.astype(y_ref.dtype)


def _full_spec(shape):
  n = len(shape)

  def idx(i):
    return (0,) * n

  return pl.BlockSpec(shape, idx)


# ------------------------------- full forward --------------------------------
def lstm_dec_forward(params, x, enc_h, enc_c):
  S, B, _ = x.shape
  # layout plumbing only (KB-sized arrays): time-major flatten of x, batch-major
  # flatten of the attention key/value (= encoder h0).
  x_flat = x.reshape(S * B, INPUT_DIM)
  kv_flat = jnp.transpose(enc_h, (1, 0, 2)).reshape(B * NUM_LAYERS, HIDDEN_DIM)

  inputs = (
      x_flat, enc_h, enc_c, kv_flat,
      params["w_ih_t_0"], params["w_hh_t_0"], params["b_0"],
      params["w_ih_t_1"], params["w_hh_t_1"], params["b_1"],
      params["wq"], params["wk"], params["wv"], params["wo"],
      params["reg_w3"], params["reg_b"],
  )
  out_shape = (
      jax.ShapeDtypeStruct((B, OUTPUT_DIM), x.dtype),
      jax.ShapeDtypeStruct((B, ATTN_HEAD, S, NUM_LAYERS), jnp.float32),
  )
  y_pred, attn_weights = pl.pallas_call(
      _lstm_dec_fused_kernel,
      out_shape=out_shape,
      grid_spec=pltpu.PrefetchScalarGridSpec(
          num_scalar_prefetch=0,
          grid=(1,),
          in_specs=[_full_spec(a.shape) for a in inputs],
          out_specs=[_full_spec((B, OUTPUT_DIM)),
                     _full_spec((B, ATTN_HEAD, S, NUM_LAYERS))],
          scratch_shapes=[pltpu.VMEM((S * B, HIDDEN_DIM), jnp.float32),
                          pltpu.VMEM((B * S, HIDDEN_DIM), jnp.float32)],
      ),
      compiler_params=pltpu.CompilerParams(
          dimension_semantics=("arbitrary",),
          vmem_limit_bytes=16 * 1024 * 1024),
  )(*inputs)
  return y_pred, attn_weights


# --------------------------- pure-JAX reference -------------------------------
def lstm_dec_reference(params, x, enc_h, enc_c):
  S, B, _ = x.shape
  H = HIDDEN_DIM
  layer_in = x
  for l in range(NUM_LAYERS):
    wih, whh, bias = params[f"w_ih_t_{l}"], params[f"w_hh_t_{l}"], params[f"b_{l}"]
    h, c = enc_h[l], enc_c[l]
    outs = []
    for t in range(S):
      g = layer_in[t] @ wih + h @ whh + bias
      i = jax.nn.sigmoid(g[:, 0:H])
      f = jax.nn.sigmoid(g[:, H:2 * H])
      gg = jnp.tanh(g[:, 2 * H:3 * H])
      o = jax.nn.sigmoid(g[:, 3 * H:4 * H])
      c = f * c + i * gg
      h = o * jnp.tanh(c)
      outs.append(h)
    layer_in = jnp.stack(outs, axis=0)
  lstm_out = jnp.transpose(layer_in, (1, 0, 2))            # (B, S, H)
  kv = jnp.transpose(enc_h, (1, 0, 2))                     # (B, L, H)
  q, k, v = lstm_out @ params["wq"], kv @ params["wk"], kv @ params["wv"]
  ws, ctxs = [], []
  for hd in range(ATTN_HEAD):
    sl = slice(hd * D_HEAD, (hd + 1) * D_HEAD)
    scores = jnp.einsum("bsd,bld->bsl", q[..., sl], k[..., sl]) / (D_HEAD ** 0.5)
    w = jax.nn.softmax(scores, axis=-1)
    ws.append(w)
    ctxs.append(jnp.einsum("bsl,bld->bsd", w, v[..., sl]))
  attw = jnp.stack(ws, axis=1)
  ctx = jnp.concatenate(ctxs, axis=-1) @ params["wo"]
  concat = jax.nn.relu(jnp.concatenate([ctx, lstm_out], axis=-1))
  flat = concat.reshape(B, S * REG_IN)
  y = flat @ params["reg_w3"].reshape(S * REG_IN, OUTPUT_DIM) + params["reg_b"]
  return y, attw


# ------------------------------ parameter init --------------------------------
def init_params(key):
  params = {}
  keys = iter(jax.random.split(key, 24))
  din = INPUT_DIM
  for l in range(NUM_LAYERS):
    w_ih = jax.random.normal(next(keys), (4 * HIDDEN_DIM, din), jnp.float32) * 0.1
    w_hh = jax.random.normal(next(keys), (4 * HIDDEN_DIM, HIDDEN_DIM), jnp.float32) * 0.1
    b_ih = jax.random.normal(next(keys), (4 * HIDDEN_DIM,), jnp.float32) * 0.1
    b_hh = jax.random.normal(next(keys), (4 * HIDDEN_DIM,), jnp.float32) * 0.1
    params[f"w_ih_t_{l}"] = w_ih.T                       # (Din, 4H)
    params[f"w_hh_t_{l}"] = w_hh.T                       # (H, 4H)
    params[f"b_{l}"] = (b_ih + b_hh).reshape(1, 4 * HIDDEN_DIM)
    din = HIDDEN_DIM
  params["wq"] = jax.random.normal(next(keys), (HIDDEN_DIM, ATTN_SIZE), jnp.float32) * 0.1
  params["wk"] = jax.random.normal(next(keys), (HIDDEN_DIM, ATTN_SIZE), jnp.float32) * 0.1
  params["wv"] = jax.random.normal(next(keys), (HIDDEN_DIM, ATTN_SIZE), jnp.float32) * 0.1
  params["wo"] = jax.random.normal(next(keys), (ATTN_SIZE, ATTN_SIZE), jnp.float32) * 0.1
  reg_w = jax.random.normal(next(keys), (OUTPUT_DIM, SEQ_LEN * REG_IN), jnp.float32) * 0.1
  params["reg_w3"] = reg_w.T.reshape(SEQ_LEN, REG_IN, OUTPUT_DIM)   # (S, REG_IN, O)
  params["reg_b"] = jax.random.normal(next(keys), (1, OUTPUT_DIM), jnp.float32) * 0.1
  return params


if __name__ == "__main__":
  root = jax.random.PRNGKey(0)
  kx, kh, kc, kp = jax.random.split(root, 4)
  x = jax.random.normal(kx, (SEQ_LEN, BATCH, INPUT_DIM), jnp.float32)
  enc_h = jax.random.normal(kh, (NUM_LAYERS, BATCH, HIDDEN_DIM), jnp.float32)
  enc_c = jax.random.normal(kc, (NUM_LAYERS, BATCH, HIDDEN_DIM), jnp.float32)
  params = init_params(kp)

  y_pred, attn_w = jax.jit(lstm_dec_forward)(params, x, enc_h, enc_c)
  jax.block_until_ready((y_pred, attn_w))

  y_ref, attw_ref = jax.jit(lstm_dec_reference)(params, x, enc_h, enc_c)
  jax.block_until_ready((y_ref, attw_ref))

  assert y_pred.shape == (BATCH, OUTPUT_DIM)
  assert attn_w.shape == (BATCH, ATTN_HEAD, SEQ_LEN, NUM_LAYERS)
  assert bool(jnp.all(jnp.isfinite(y_pred)))
  # loose tolerance: kernel uses approximate (EUP) reciprocal in the softmax
  assert bool(jnp.allclose(y_pred, y_ref, rtol=2e-2, atol=2e-2))
  assert bool(jnp.allclose(attn_w, attw_ref, rtol=2e-2, atol=2e-2))
  print("KERNEL_OK")
</pallas_src>

<mosaic_0001>
module attributes {stable_mosaic.version = 11 : i64} {
  func.func @_lstm_dec_fused_kernel(%arg0: i32, %arg1: memref<16x8xf32, #tpu.memory_space<vmem>>, %arg2: memref<2x2x32xf32, #tpu.memory_space<vmem>>, %arg3: memref<2x2x32xf32, #tpu.memory_space<vmem>>, %arg4: memref<4x32xf32, #tpu.memory_space<vmem>>, %arg5: memref<8x128xf32, #tpu.memory_space<vmem>>, %arg6: memref<32x128xf32, #tpu.memory_space<vmem>>, %arg7: memref<1x128xf32, #tpu.memory_space<vmem>>, %arg8: memref<32x128xf32, #tpu.memory_space<vmem>>, %arg9: memref<32x128xf32, #tpu.memory_space<vmem>>, %arg10: memref<1x128xf32, #tpu.memory_space<vmem>>, %arg11: memref<32x16xf32, #tpu.memory_space<vmem>>, %arg12: memref<32x16xf32, #tpu.memory_space<vmem>>, %arg13: memref<32x16xf32, #tpu.memory_space<vmem>>, %arg14: memref<16x16xf32, #tpu.memory_space<vmem>>, %arg15: memref<8x48x4xf32, #tpu.memory_space<vmem>>, %arg16: memref<1x4xf32, #tpu.memory_space<vmem>>, %arg17: memref<2x4xf32, #tpu.memory_space<vmem>>, %arg18: memref<2x2x8x2xf32, #tpu.memory_space<vmem>>, %arg19: memref<16x32xf32, #tpu.memory_space<vmem>>, %arg20: memref<16x32xf32, #tpu.memory_space<vmem>>) attributes {dimension_semantics = [#tpu.dimension_semantics<arbitrary>], iteration_bounds = array<i64: 1>, scalar_prefetch = 0 : i64, scratch_operands = 2 : i64, tpu.core_type = #tpu.core_type<tc>, window_params = [{pipeline_mode = #tpu.pipeline_mode<synchronous>, transform_indices = @transform_0, window_bounds = array<i64: 16, 8>}, {pipeline_mode = #tpu.pipeline_mode<synchronous>, transform_indices = @transform_1, window_bounds = array<i64: 2, 2, 32>}, {pipeline_mode = #tpu.pipeline_mode<synchronous>, transform_indices = @transform_2, window_bounds = array<i64: 2, 2, 32>}, {pipeline_mode = #tpu.pipeline_mode<synchronous>, transform_indices = @transform_3, window_bounds = array<i64: 4, 32>}, {pipeline_mode = #tpu.pipeline_mode<synchronous>, transform_indices = @transform_4, window_bounds = array<i64: 8, 128>}, {pipeline_mode = #tpu.pipeline_mode<synchronous>, transform_indices = @transform_5, window_bounds = array<i64: 32, 128>}, {pipeline_mode = #tpu.pipeline_mode<synchronous>, transform_indices = @transform_6, window_bounds = array<i64: 1, 128>}, {pipeline_mode = #tpu.pipeline_mode<synchronous>, transform_indices = @transform_7, window_bounds = array<i64: 32, 128>}, {pipeline_mode = #tpu.pipeline_mode<synchronous>, transform_indices = @transform_8, window_bounds = array<i64: 32, 128>}, {pipeline_mode = #tpu.pipeline_mode<synchronous>, transform_indices = @transform_9, window_bounds = array<i64: 1, 128>}, {pipeline_mode = #tpu.pipeline_mode<synchronous>, transform_indices = @transform_10, window_bounds = array<i64: 32, 16>}, {pipeline_mode = #tpu.pipeline_mode<synchronous>, transform_indices = @transform_11, window_bounds = array<i64: 32, 16>}, {pipeline_mode = #tpu.pipeline_mode<synchronous>, transform_indices = @transform_12, window_bounds = array<i64: 32, 16>}, {pipeline_mode = #tpu.pipeline_mode<synchronous>, transform_indices = @transform_13, window_bounds = array<i64: 16, 16>}, {pipeline_mode = #tpu.pipeline_mode<synchronous>, transform_indices = @transform_14, window_bounds = array<i64: 8, 48, 4>}, {pipeline_mode = #tpu.pipeline_mode<synchronous>, transform_indices = @transform_15, window_bounds = array<i64: 1, 4>}, {pipeline_mode = #tpu.pipeline_mode<synchronous>, transform_indices = @transform_16, window_bounds = array<i64: 2, 4>}, {pipeline_mode = #tpu.pipeline_mode<synchronous>, transform_indices = @transform_17, window_bounds = array<i64: 2, 2, 8, 2>}]} {
    %c0 = arith.constant 0 : index
    %c0_0 = arith.constant 0 : index
    %0 = vector.load %arg1[%c0, %c0_0] : memref<16x8xf32, #tpu.memory_space<vmem>>, vector<16x8xf32>
    %c0_1 = arith.constant 0 : index
    %c0_2 = arith.constant 0 : index
    %1 = vector.load %arg5[%c0_1, %c0_2] : memref<8x128xf32, #tpu.memory_space<vmem>>, vector<8x128xf32>
    %c0_3 = arith.constant 0 : index
    %c0_4 = arith.constant 0 : index
    %2 = vector.load %arg6[%c0_3, %c0_4] : memref<32x128xf32, #tpu.memory_space<vmem>>, vector<32x128xf32>
    %c0_5 = arith.constant 0 : index
    %c0_6 = arith.constant 0 : index
    %3 = vector.load %arg7[%c0_5, %c0_6] : memref<1x128xf32, #tpu.memory_space<vmem>>, vector<1x128xf32>
    %c0_7 = arith.constant 0 : index
    %c0_8 = arith.constant 0 : index
    %c0_9 = arith.constant 0 : index
    %4 = vector.load %arg2[%c0_7, %c0_8, %c0_9] : memref<2x2x32xf32, #tpu.memory_space<vmem>>, vector<1x2x32xf32>
    %5 = vector.shape_cast %4 : vector<1x2x32xf32> to vector<2x32xf32>
    %c0_10 = arith.constant 0 : index
    %c0_11 = arith.constant 0 : index
    %c0_12 = arith.constant 0 : index
    %6 = vector.load %arg3[%c0_10, %c0_11, %c0_12] : memref<2x2x32xf32, #tpu.memory_space<vmem>>, vector<1x2x32xf32>
    %7 = vector.shape_cast %6 : vector<1x2x32xf32> to vector<2x32xf32>
    %cst = arith.constant dense<0.000000e+00> : vector<16x128xf32>
    %8 = tpu.matmul %0, %1, %cst {dimension_numbers = #tpu.dot_dimension_numbers<[1], [0], [0], [1], [0, 0, 1, 1], [], []>} : vector<16x8xf32>, vector<8x128xf32>, vector<16x128xf32> -> vector<16x128xf32>
    %9 = vector.broadcast %3 : vector<1x128xf32> to vector<16x128xf32>
    %10 = arith.addf %8, %9 : vector<16x128xf32>
    %11 = vector.extract_strided_slice %10 {offsets = [0, 0], sizes = [2, 128], strides = [1, 1]} : vector<16x128xf32> to vector<2x128xf32>
    %cst_13 = arith.constant dense<0.000000e+00> : vector<2x128xf32>
    %12 = tpu.matmul %5, %2, %cst_13 {dimension_numbers = #tpu.dot_dimension_numbers<[1], [0], [0], [1], [0, 0, 1, 1], [], []>} : vector<2x32xf32>, vector<32x128xf32>, vector<2x128xf32> -> vector<2x128xf32>
    %13 = arith.addf %11, %12 : vector<2x128xf32>
    %14 = arith.negf %13 : vector<2x128xf32>
    %15 = math.exp %14 : vector<2x128xf32>
    %cst_14 = arith.constant 1.000000e+00 : f32
    %16 = vector.broadcast %cst_14 : f32 to vector<2x128xf32>
    %17 = arith.addf %16, %15 : vector<2x128xf32>
    %18 = arith.divf %16, %17 : vector<2x128xf32>
    %19 = math.tanh %13 : vector<2x128xf32>
    %20 = vector.extract_strided_slice %18 {offsets = [0, 0], sizes = [2, 32], strides = [1, 1]} : vector<2x128xf32> to vector<2x32xf32>
    %21 = vector.extract_strided_slice %18 {offsets = [0, 32], sizes = [2, 32], strides = [1, 1]} : vector<2x128xf32> to vector<2x32xf32>
    %22 = vector.extract_strided_slice %19 {offsets = [0, 64], sizes = [2, 32], strides = [1, 1]} : vector<2x128xf32> to vector<2x32xf32>
    %23 = vector.extract_strided_slice %18 {offsets = [0, 96], sizes = [2, 32], strides = [1, 1]} : vector<2x128xf32> to vector<2x32xf32>
    %24 = arith.mulf %21, %7 : vector<2x32xf32>
    %25 = arith.mulf %20, %22 : vector<2x32xf32>
    %26 = arith.addf %24, %25 : vector<2x32xf32>
    %27 = math.tanh %26 : vector<2x32xf32>
    %28 = arith.mulf %23, %27 : vector<2x32xf32>
    %c0_15 = arith.constant 0 : index
    %c0_16 = arith.constant 0 : index
    %29 = vector.load %arg19[%c0_15, %c0_16] : memref<16x32xf32, #tpu.memory_space<vmem>>, vector<2x32xf32>
    tpu.vector_store %arg19[%c0_15, %c0_16], %28 {strides = array<i32>} : memref<16x32xf32, #tpu.memory_space<vmem>>, vector<2x32xf32>,
    %30 = vector.extract_strided_slice %10 {offsets = [2, 0], sizes = [2, 128], strides = [1, 1]} : vector<16x128xf32> to vector<2x128xf32>
    %cst_17 = arith.constant dense<0.000000e+00> : vector<2x128xf32>
    %31 = tpu.matmul %28, %2, %cst_17 {dimension_numbers = #tpu.dot_dimension_numbers<[1], [0], [0], [1], [0, 0, 1, 1], [], []>} : vector<2x32xf32>, vector<32x128xf32>, vector<2x128xf32> -> vector<2x128xf32>
    %32 = arith.addf %30, %31 : vector<2x128xf32>
    %33 = arith.negf %32 : vector<2x128xf32>
    %34 = math.exp %33 : vector<2x128xf32>
    %cst_18 = arith.constant 1.000000e+00 : f32
    %35 = vector.broadcast %cst_18 : f32 to vector<2x128xf32>
    %36 = arith.addf %35, %34 : vector<2x128xf32>
    %37 = arith.divf %35, %36 : vector<2x128xf32>
    %38 = math.tanh %32 : vector<2x128xf32>
    %39 = vector.extract_strided_slice %37 {offsets = [0, 0], sizes = [2, 32], strides = [1, 1]} : vector<2x128xf32> to vector<2x32xf32>
    %40 = vector.extract_strided_slice %37 {offsets = [0, 32], sizes = [2, 32], strides = [1, 1]} : vector<2x128xf32> to vector<2x32xf32>
    %41 = vector.extract_strided_slice %38 {offsets = [0, 64], sizes = [2, 32], strides = [1, 1]} : vector<2x128xf32> to vector<2x32xf32>
    %42 = vector.extract_strided_slice %37 {offsets = [0, 96], sizes = [2, 32], strides = [1, 1]} : vector<2x128xf32> to vector<2x32xf32>
    %43 = arith.mulf %40, %26 : vector<2x32xf32>
    %44 = arith.mulf %39, %41 : vector<2x32xf32>
    %45 = arith.addf %43, %44 : vector<2x32xf32>
    %46 = math.tanh %45 : vector<2x32xf32>
    %47 = arith.mulf %42, %46 : vector<2x32xf32>
    %c2 = arith.constant 2 : index
    %c0_19 = arith.constant 0 : index
    %48 = vector.load %arg19[%c2, %c0_19] : memref<16x32xf32, #tpu.memory_space<vmem>>, vector<2x32xf32>
    tpu.vector_store %arg19[%c2, %c0_19], %47 {strides = array<i32>} : memref<16x32xf32, #tpu.memory_space<vmem>>, vector<2x32xf32>,
    %49 = vector.extract_strided_slice %10 {offsets = [4, 0], sizes = [2, 128], strides = [1, 1]} : vector<16x128xf32> to vector<2x128xf32>
    %cst_20 = arith.constant dense<0.000000e+00> : vector<2x128xf32>
    %50 = tpu.matmul %47, %2, %cst_20 {dimension_numbers = #tpu.dot_dimension_numbers<[1], [0], [0], [1], [0, 0, 1, 1], [], []>} : vector<2x32xf32>, vector<32x128xf32>, vector<2x128xf32> -> vector<2x128xf32>
    %51 = arith.addf %49, %50 : vector<2x128xf32>
    %52 = arith.negf %51 : vector<2x128xf32>
    %53 = math.exp %52 : vector<2x128xf32>
    %cst_21 = arith.constant 1.000000e+00 : f32
    %54 = vector.broadcast %cst_21 : f32 to vector<2x128xf32>
    %55 = arith.addf %54, %53 : vector<2x128xf32>
    %56 = arith.divf %54, %55 : vector<2x128xf32>
    %57 = math.tanh %51 : vector<2x128xf32>
    %58 = vector.extract_strided_slice %56 {offsets = [0, 0], sizes = [2, 32], strides = [1, 1]} : vector<2x128xf32> to vector<2x32xf32>
    %59 = vector.extract_strided_slice %56 {offsets = [0, 32], sizes = [2, 32], strides = [1, 1]} : vector<2x128xf32> to vector<2x32xf32>
    %60 = vector.extract_strided_slice %57 {offsets = [0, 64], sizes = [2, 32], strides = [1, 1]} : vector<2x128xf32> to vector<2x32xf32>
    %61 = vector.extract_strided_slice %56 {offsets = [0, 96], sizes = [2, 32], strides = [1, 1]} : vector<2x128xf32> to vector<2x32xf32>
    %62 = arith.mulf %59, %45 : vector<2x32xf32>
    %63 = arith.mulf %58, %60 : vector<2x32xf32>
    %64 = arith.addf %62, %63 : vector<2x32xf32>
    %65 = math.tanh %64 : vector<2x32xf32>
    %66 = arith.mulf %61, %65 : vector<2x32xf32>
    %c4 = arith.constant 4 : index
    %c0_22 = arith.constant 0 : index
    %67 = vector.load %arg19[%c4, %c0_22] : memref<16x32xf32, #tpu.memory_space<vmem>>, vector<2x32xf32>
    tpu.vector_store %arg19[%c4, %c0_22], %66 {strides = array<i32>} : memref<16x32xf32, #tpu.memory_space<vmem>>, vector<2x32xf32>,
    %68 = vector.extract_strided_slice %10 {offsets = [6, 0], sizes = [2, 128], strides = [1, 1]} : vector<16x128xf32> to vector<2x128xf32>
    %cst_23 = arith.constant dense<0.000000e+00> : vector<2x128xf32>
    %69 = tpu.matmul %66, %2, %cst_23 {dimension_numbers = #tpu.dot_dimension_numbers<[1], [0], [0], [1], [0, 0, 1, 1], [], []>} : vector<2x32xf32>, vector<32x128xf32>, vector<2x128xf32> -> vector<2x128xf32>
    %70 = arith.addf %68, %69 : vector<2x128xf32>
    %71 = arith.negf %70 : vector<2x128xf32>
    %72 = math.exp %71 : vector<2x128xf32>
    %cst_24 = arith.constant 1.000000e+00 : f32
    %73 = vector.broadcast %cst_24 : f32 to vector<2x128xf32>
    %74 = arith.addf %73, %72 : vector<2x128xf32>
    %75 = arith.divf %73, %74 : vector<2x128xf32>
    %76 = math.tanh %70 : vector<2x128xf32>
    %77 = vector.extract_strided_slice %75 {offsets = [0, 0], sizes = [2, 32], strides = [1, 1]} : vector<2x128xf32> to vector<2x32xf32>
    %78 = vector.extract_strided_slice %75 {offsets = [0, 32], sizes = [2, 32], strides = [1, 1]} : vector<2x128xf32> to vector<2x32xf32>
    %79 = vector.extract_strided_slice %76 {offsets = [0, 64], sizes = [2, 32], strides = [1, 1]} : vector<2x128xf32> to vector<2x32xf32>
    %80 = vector.extract_strided_slice %75 {offsets = [0, 96], sizes = [2, 32], strides = [1, 1]} : vector<2x128xf32> to vector<2x32xf32>
    %81 = arith.mulf %78, %64 : vector<2x32xf32>
    %82 = arith.mulf %77, %79 : vector<2x32xf32>
    %83 = arith.addf %81, %82 : vector<2x32xf32>
    %84 = math.tanh %83 : vector<2x32xf32>
    %85 = arith.mulf %80, %84 : vector<2x32xf32>
    %c6 = arith.constant 6 : index
    %c0_25 = arith.constant 0 : index
    %86 = vector.load %arg19[%c6, %c0_25] : memref<16x32xf32, #tpu.memory_space<vmem>>, vector<2x32xf32>
    tpu.vector_store %arg19[%c6, %c0_25], %85 {strides = array<i32>} : memref<16x32xf32, #tpu.memory_space<vmem>>, vector<2x32xf32>,
    %87 = vector.extract_strided_slice %10 {offsets = [8, 0], sizes = [2, 128], strides = [1, 1]} : vector<16x128xf32> to vector<2x128xf32>
    %cst_26 = arith.constant dense<0.000000e+00> : vector<2x128xf32>
    %88 = tpu.matmul %85, %2, %cst_26 {dimension_numbers = #tpu.dot_dimension_numbers<[1], [0], [0], [1], [0, 0, 1, 1], [], []>} : vector<2x32xf32>, vector<32x128xf32>, vector<2x128xf32> -> vector<2x128xf32>
    %89 = arith.addf %87, %88 : vector<2x128xf32>
    %90 = arith.negf %89 : vector<2x128xf32>
    %91 = math.exp %90 : vector<2x128xf32>
    %cst_27 = arith.constant 1.000000e+00 : f32
    %92 = vector.broadcast %cst_27 : f32 to vector<2x128xf32>
    %93 = arith.addf %92, %91 : vector<2x128xf32>
    %94 = arith.divf %92, %93 : vector<2x128xf32>
    %95 = math.tanh %89 : vector<2x128xf32>
    %96 = vector.extract_strided_slice %94 {offsets = [0, 0], sizes = [2, 32], strides = [1, 1]} : vector<2x128xf32> to vector<2x32xf32>
    %97 = vector.extract_strided_slice %94 {offsets = [0, 32], sizes = [2, 32], strides = [1, 1]} : vector<2x128xf32> to vector<2x32xf32>
    %98 = vector.extract_strided_slice %95 {offsets = [0, 64], sizes = [2, 32], strides = [1, 1]} : vector<2x128xf32> to vector<2x32xf32>
    %99 = vector.extract_strided_slice %94 {offsets = [0, 96], sizes = [2, 32], strides = [1, 1]} : vector<2x128xf32> to vector<2x32xf32>
    %100 = arith.mulf %97, %83 : vector<2x32xf32>
    %101 = arith.mulf %96, %98 : vector<2x32xf32>
    %102 = arith.addf %100, %101 : vector<2x32xf32>
    %103 = math.tanh %102 : vector<2x32xf32>
    %104 = arith.mulf %99, %103 : vector<2x32xf32>
    %c8 = arith.constant 8 : index
    %c0_28 = arith.constant 0 : index
    %105 = vector.load %arg19[%c8, %c0_28] : memref<16x32xf32, #tpu.memory_space<vmem>>, vector<2x32xf32>
    tpu.vector_store %arg19[%c8, %c0_28], %104 {strides = array<i32>} : memref<16x32xf32, #tpu.memory_space<vmem>>, vector<2x32xf32>,
    %106 = vector.extract_strided_slice %10 {offsets = [10, 0], sizes = [2, 128], strides = [1, 1]} : vector<16x128xf32> to vector<2x128xf32>
    %cst_29 = arith.constant dense<0.000000e+00> : vector<2x128xf32>
    %107 = tpu.matmul %104, %2, %cst_29 {dimension_numbers = #tpu.dot_dimension_numbers<[1], [0], [0], [1], [0, 0, 1, 1], [], []>} : vector<2x32xf32>, vector<32x128xf32>, vector<2x128xf32> -> vector<2x128xf32>
    %108 = arith.addf %106, %107 : vector<2x128xf32>
    %109 = arith.negf %108 : vector<2x128xf32>
    %110 = math.exp %109 : vector<2x128xf32>
    %cst_30 = arith.constant 1.000000e+00 : f32
    %111 = vector.broadcast %cst_30 : f32 to vector<2x128xf32>
    %112 = arith.addf %111, %110 : vector<2x128xf32>
    %113 = arith.divf %111, %112 : vector<2x128xf32>
    %114 = math.tanh %108 : vector<2x128xf32>
    %115 = vector.extract_strided_slice %113 {offsets = [0, 0], sizes = [2, 32], strides = [1, 1]} : vector<2x128xf32> to vector<2x32xf32>
    %116 = vector.extract_strided_slice %113 {offsets = [0, 32], sizes = [2, 32], strides = [1, 1]} : vector<2x128xf32> to vector<2x32xf32>
    %117 = vector.extract_strided_slice %114 {offsets = [0, 64], sizes = [2, 32], strides = [1, 1]} : vector<2x128xf32> to vector<2x32xf32>
    %118 = vector.extract_strided_slice %113 {offsets = [0, 96], sizes = [2, 32], strides = [1, 1]} : vector<2x128xf32> to vector<2x32xf32>
    %119 = arith.mulf %116, %102 : vector<2x32xf32>
    %120 = arith.mulf %115, %117 : vector<2x32xf32>
    %121 = arith.addf %119, %120 : vector<2x32xf32>
    %122 = math.tanh %121 : vector<2x32xf32>
    %123 = arith.mulf %118, %122 : vector<2x32xf32>
    %c10 = arith.constant 10 : index
    %c0_31 = arith.constant 0 : index
    %124 = vector.load %arg19[%c10, %c0_31] : memref<16x32xf32, #tpu.memory_space<vmem>>, vector<2x32xf32>
    tpu.vector_store %arg19[%c10, %c0_31], %123 {strides = array<i32>} : memref<16x32xf32, #tpu.memory_space<vmem>>, vector<2x32xf32>,
    %125 = vector.extract_strided_slice %10 {offsets = [12, 0], sizes = [2, 128], strides = [1, 1]} : vector<16x128xf32> to vector<2x128xf32>
    %cst_32 = arith.constant dense<0.000000e+00> : vector<2x128xf32>
    %126 = tpu.matmul %123, %2, %cst_32 {dimension_numbers = #tpu.dot_dimension_numbers<[1], [0], [0], [1], [0, 0, 1, 1], [], []>} : vector<2x32xf32>, vector<32x128xf32>, vector<2x128xf32> -> vector<2x128xf32>
    %127 = arith.addf %125, %126 : vector<2x128xf32>
    %128 = arith.negf %127 : vector<2x128xf32>
    %129 = math.exp %128 : vector<2x128xf32>
    %cst_33 = arith.constant 1.000000e+00 : f32
    %130 = vector.broadcast %cst_33 : f32 to vector<2x128xf32>
    %131 = arith.addf %130, %129 : vector<2x128xf32>
    %132 = arith.divf %130, %131 : vector<2x128xf32>
    %133 = math.tanh %127 : vector<2x128xf32>
    %134 = vector.extract_strided_slice %132 {offsets = [0, 0], sizes = [2, 32], strides = [1, 1]} : vector<2x128xf32> to vector<2x32xf32>
    %135 = vector.extract_strided_slice %132 {offsets = [0, 32], sizes = [2, 32], strides = [1, 1]} : vector<2x128xf32> to vector<2x32xf32>
    %136 = vector.extract_strided_slice %133 {offsets = [0, 64], sizes = [2, 32], strides = [1, 1]} : vector<2x128xf32> to vector<2x32xf32>
    %137 = vector.extract_strided_slice %132 {offsets = [0, 96], sizes = [2, 32], strides = [1, 1]} : vector<2x128xf32> to vector<2x32xf32>
    %138 = arith.mulf %135, %121 : vector<2x32xf32>
    %139 = arith.mulf %134, %136 : vector<2x32xf32>
    %140 = arith.addf %138, %139 : vector<2x32xf32>
    %141 = math.tanh %140 : vector<2x32xf32>
    %142 = arith.mulf %137, %141 : vector<2x32xf32>
    %c12 = arith.constant 12 : index
    %c0_34 = arith.constant 0 : index
    %143 = vector.load %arg19[%c12, %c0_34] : memref<16x32xf32, #tpu.memory_space<vmem>>, vector<2x32xf32>
    tpu.vector_store %arg19[%c12, %c0_34], %142 {strides = array<i32>} : memref<16x32xf32, #tpu.memory_space<vmem>>, vector<2x32xf32>,
    %144 = vector.extract_strided_slice %10 {offsets = [14, 0], sizes = [2, 128], strides = [1, 1]} : vector<16x128xf32> to vector<2x128xf32>
    %cst_35 = arith.constant dense<0.000000e+00> : vector<2x128xf32>
    %145 = tpu.matmul %142, %2, %cst_35 {dimension_numbers = #tpu.dot_dimension_numbers<[1], [0], [0], [1], [0, 0, 1, 1], [], []>} : vector<2x32xf32>, vector<32x128xf32>, vector<2x128xf32> -> vector<2x128xf32>
    %146 = arith.addf %144, %145 : vector<2x128xf32>
    %147 = arith.negf %146 : vector<2x128xf32>
    %148 = math.exp %147 : vector<2x128xf32>
    %cst_36 = arith.constant 1.000000e+00 : f32
    %149 = vector.broadcast %cst_36 : f32 to vector<2x128xf32>
    %150 = arith.addf %149, %148 : vector<2x128xf32>
    %151 = arith.divf %149, %150 : vector<2x128xf32>
    %152 = math.tanh %146 : vector<2x128xf32>
    %153 = vector.extract_strided_slice %151 {offsets = [0, 0], sizes = [2, 32], strides = [1, 1]} : vector<2x128xf32> to vector<2x32xf32>
    %154 = vector.extract_strided_slice %151 {offsets = [0, 32], sizes = [2, 32], strides = [1, 1]} : vector<2x128xf32> to vector<2x32xf32>
    %155 = vector.extract_strided_slice %152 {offsets = [0, 64], sizes = [2, 32], strides = [1, 1]} : vector<2x128xf32> to vector<2x32xf32>
    %156 = vector.extract_strided_slice %151 {offsets = [0, 96], sizes = [2, 32], strides = [1, 1]} : vector<2x128xf32> to vector<2x32xf32>
    %157 = arith.mulf %154, %140 : vector<2x32xf32>
    %158 = arith.mulf %153, %155 : vector<2x32xf32>
    %159 = arith.addf %157, %158 : vector<2x32xf32>
    %160 = math.tanh %159 : vector<2x32xf32>
    %161 = arith.mulf %156, %160 : vector<2x32xf32>
    %c14 = arith.constant 14 : index
    %c0_37 = arith.constant 0 : index
    %162 = vector.load %arg19[%c14, %c0_37] : memref<16x32xf32, #tpu.memory_space<vmem>>, vector<2x32xf32>
    tpu.vector_store %arg19[%c14, %c0_37], %161 {strides = array<i32>} : memref<16x32xf32, #tpu.memory_space<vmem>>, vector<2x32xf32>,
    %c0_38 = arith.constant 0 : index
    %c0_39 = arith.constant 0 : index
    %163 = vector.load %arg19[%c0_38, %c0_39] : memref<16x32xf32, #tpu.memory_space<vmem>>, vector<16x32xf32>
    %c0_40 = arith.constant 0 : index
    %c0_41 = arith.constant 0 : index
    %164 = vector.load %arg8[%c0_40, %c0_41] : memref<32x128xf32, #tpu.memory_space<vmem>>, vector<32x128xf32>
    %c0_42 = arith.constant 0 : index
    %c0_43 = arith.constant 0 : index
    %165 = vector.load %arg9[%c0_42, %c0_43] : memref<32x128xf32, #tpu.memory_space<vmem>>, vector<32x128xf32>
    %c0_44 = arith.constant 0 : index
    %c0_45 = arith.constant 0 : index
    %166 = vector.load %arg10[%c0_44, %c0_45] : memref<1x128xf32, #tpu.memory_space<vmem>>, vector<1x128xf32>
    %c1 = arith.constant 1 : index
    %c0_46 = arith.constant 0 : index
    %c0_47 = arith.constant 0 : index
    %167 = vector.load %arg2[%c1, %c0_46, %c0_47] : memref<2x2x32xf32, #tpu.memory_space<vmem>>, vector<1x2x32xf32>
    %168 = vector.shape_cast %167 : vector<1x2x32xf32> to vector<2x32xf32>
    %c1_48 = arith.constant 1 : index
    %c0_49 = arith.constant 0 : index
    %c0_50 = arith.constant 0 : index
    %169 = vector.load %arg3[%c1_48, %c0_49, %c0_50] : memref<2x2x32xf32, #tpu.memory_space<vmem>>, vector<1x2x32xf32>
    %170 = vector.shape_cast %169 : vector<1x2x32xf32> to vector<2x32xf32>
    %cst_51 = arith.constant dense<0.000000e+00> : vector<16x128xf32>
    %171 = tpu.matmul %163, %164, %cst_51 {dimension_numbers = #tpu.dot_dimension_numbers<[1], [0], [0], [1], [0, 0, 1, 1], [], []>} : vector<16x32xf32>, vector<32x128xf32>, vector<16x128xf32> -> vector<16x128xf32>
    %172 = vector.broadcast %166 : vector<1x128xf32> to vector<16x128xf32>
    %173 = arith.addf %171, %172 : vector<16x128xf32>
    %174 = vector.extract_strided_slice %173 {offsets = [0, 0], sizes = [2, 128], strides = [1, 1]} : vector<16x128xf32> to vector<2x128xf32>
    %cst_52 = arith.constant dense<0.000000e+00> : vector<2x128xf32>
    %175 = tpu.matmul %168, %165, %cst_52 {dimension_numbers = #tpu.dot_dimension_numbers<[1], [0], [0], [1], [0, 0, 1, 1], [], []>} : vector<2x32xf32>, vector<32x128xf32>, vector<2x128xf32> -> vector<2x128xf32>
    %176 = arith.addf %174, %175 : vector<2x128xf32>
    %177 = arith.negf %176 : vector<2x128xf32>
    %178 = math.exp %177 : vector<2x128xf32>
    %cst_53 = arith.constant 1.000000e+00 : f32
    %179 = vector.broadcast %cst_53 : f32 to vector<2x128xf32>
    %180 = arith.addf %179, %178 : vector<2x128xf32>
    %181 = arith.divf %179, %180 : vector<2x128xf32>
    %182 = math.tanh %176 : vector<2x128xf32>
    %183 = vector.extract_strided_slice %181 {offsets = [0, 0], sizes = [2, 32], strides = [1, 1]} : vector<2x128xf32> to vector<2x32xf32>
    %184 = vector.extract_strided_slice %181 {offsets = [0, 32], sizes = [2, 32], strides = [1, 1]} : vector<2x128xf32> to vector<2x32xf32>
    %185 = vector.extract_strided_slice %182 {offsets = [0, 64], sizes = [2, 32], strides = [1, 1]} : vector<2x128xf32> to vector<2x32xf32>
    %186 = vector.extract_strided_slice %181 {offsets = [0, 96], sizes = [2, 32], strides = [1, 1]} : vector<2x128xf32> to vector<2x32xf32>
    %187 = arith.mulf %184, %170 : vector<2x32xf32>
    %188 = arith.mulf %183, %185 : vector<2x32xf32>
    %189 = arith.addf %187, %188 : vector<2x32xf32>
    %190 = math.tanh %189 : vector<2x32xf32>
    %191 = arith.mulf %186, %190 : vector<2x32xf32>
    %192 = vector.extract_strided_slice %191 {offsets = [0, 0], sizes = [1, 32], strides = [1, 1]} : vector<2x32xf32> to vector<1x32xf32>
    %c0_54 = arith.constant 0 : index
    %c0_55 = arith.constant 0 : index
    %193 = vector.load %arg20[%c0_54, %c0_55] : memref<16x32xf32, #tpu.memory_space<vmem>>, vector<1x32xf32>
    tpu.vector_store %arg20[%c0_54, %c0_55], %192 {strides = array<i32>} : memref<16x32xf32, #tpu.memory_space<vmem>>, vector<1x32xf32>,
    %194 = vector.extract_strided_slice %191 {offsets = [1, 0], sizes = [1, 32], strides = [1, 1]} : vector<2x32xf32> to vector<1x32xf32>
    %c8_56 = arith.constant 8 : index
    %c0_57 = arith.constant 0 : index
    %195 = vector.load %arg20[%c8_56, %c0_57] : memref<16x32xf32, #tpu.memory_space<vmem>>, vector<1x32xf32>
    tpu.vector_store %arg20[%c8_56, %c0_57], %194 {strides = array<i32>} : memref<16x32xf32, #tpu.memory_space<vmem>>, vector<1x32xf32>,
    %196 = vector.extract_strided_slice %173 {offsets = [2, 0], sizes = [2, 128], strides = [1, 1]} : vector<16x128xf32> to vector<2x128xf32>
    %cst_58 = arith.constant dense<0.000000e+00> : vector<2x128xf32>
    %197 = tpu.matmul %191, %165, %cst_58 {dimension_numbers = #tpu.dot_dimension_numbers<[1], [0], [0], [1], [0, 0, 1, 1], [], []>} : vector<2x32xf32>, vector<32x128xf32>, vector<2x128xf32> -> vector<2x128xf32>
    %198 = arith.addf %196, %197 : vector<2x128xf32>
    %199 = arith.negf %198 : vector<2x128xf32>
    %200 = math.exp %199 : vector<2x128xf32>
    %cst_59 = arith.constant 1.000000e+00 : f32
    %201 = vector.broadcast %cst_59 : f32 to vector<2x128xf32>
    %202 = arith.addf %201, %200 : vector<2x128xf32>
    %203 = arith.divf %201, %202 : vector<2x128xf32>
    %204 = math.tanh %198 : vector<2x128xf32>
    %205 = vector.extract_strided_slice %203 {offsets = [0, 0], sizes = [2, 32], strides = [1, 1]} : vector<2x128xf32> to vector<2x32xf32>
    %206 = vector.extract_strided_slice %203 {offsets = [0, 32], sizes = [2, 32], strides = [1, 1]} : vector<2x128xf32> to vector<2x32xf32>
    %207 = vector.extract_strided_slice %204 {offsets = [0, 64], sizes = [2, 32], strides = [1, 1]} : vector<2x128xf32> to vector<2x32xf32>
    %208 = vector.extract_strided_slice %203 {offsets = [0, 96], sizes = [2, 32], strides = [1, 1]} : vector<2x128xf32> to vector<2x32xf32>
    %209 = arith.mulf %206, %189 : vector<2x32xf32>
    %210 = arith.mulf %205, %207 : vector<2x32xf32>
    %211 = arith.addf %209, %210 : vector<2x32xf32>
    %212 = math.tanh %211 : vector<2x32xf32>
    %213 = arith.mulf %208, %212 : vector<2x32xf32>
    %214 = vector.extract_strided_slice %213 {offsets = [0, 0], sizes = [1, 32], strides = [1, 1]} : vector<2x32xf32> to vector<1x32xf32>
    %c1_60 = arith.constant 1 : index
    %c0_61 = arith.constant 0 : index
    %215 = vector.load %arg20[%c1_60, %c0_61] : memref<16x32xf32, #tpu.memory_space<vmem>>, vector<1x32xf32>
    tpu.vector_store %arg20[%c1_60, %c0_61], %214 {strides = array<i32>} : memref<16x32xf32, #tpu.memory_space<vmem>>, vector<1x32xf32>,
    %216 = vector.extract_strided_slice %213 {offsets = [1, 0], sizes = [1, 32], strides = [1, 1]} : vector<2x32xf32> to vector<1x32xf32>
    %c9 = arith.constant 9 : index
    %c0_62 = arith.constant 0 : index
    %217 = vector.load %arg20[%c9, %c0_62] : memref<16x32xf32, #tpu.memory_space<vmem>>, vector<1x32xf32>
    tpu.vector_store %arg20[%c9, %c0_62], %216 {strides = array<i32>} : memref<16x32xf32, #tpu.memory_space<vmem>>, vector<1x32xf32>,
    %218 = vector.extract_strided_slice %173 {offsets = [4, 0], sizes = [2, 128], strides = [1, 1]} : vector<16x128xf32> to vector<2x128xf32>
    %cst_63 = arith.constant dense<0.000000e+00> : vector<2x128xf32>
    %219 = tpu.matmul %213, %165, %cst_63 {dimension_numbers = #tpu.dot_dimension_numbers<[1], [0], [0], [1], [0, 0, 1, 1], [], []>} : vector<2x32xf32>, vector<32x128xf32>, vector<2x128xf32> -> vector<2x128xf32>
    %220 = arith.addf %218, %219 : vector<2x128xf32>
    %221 = arith.negf %220 : vector<2x128xf32>
    %222 = math.exp %221 : vector<2x128xf32>
    %cst_64 = arith.constant 1.000000e+00 : f32
    %223 = vector.broadcast %cst_64 : f32 to vector<2x128xf32>
    %224 = arith.addf %223, %222 : vector<2x128xf32>
    %225 = arith.divf %223, %224 : vector<2x128xf32>
    %226 = math.tanh %220 : vector<2x128xf32>
    %227 = vector.extract_strided_slice %225 {offsets = [0, 0], sizes = [2, 32], strides = [1, 1]} : vector<2x128xf32> to vector<2x32xf32>
    %228 = vector.extract_strided_slice %225 {offsets = [0, 32], sizes = [2, 32], strides = [1, 1]} : vector<2x128xf32> to vector<2x32xf32>
    %229 = vector.extract_strided_slice %226 {offsets = [0, 64], sizes = [2, 32], strides = [1, 1]} : vector<2x128xf32> to vector<2x32xf32>
    %230 = vector.extract_strided_slice %225 {offsets = [0, 96], sizes = [2, 32], strides = [1, 1]} : vector<2x128xf32> to vector<2x32xf32>
    %231 = arith.mulf %228, %211 : vector<2x32xf32>
    %232 = arith.mulf %227, %229 : vector<2x32xf32>
    %233 = arith.addf %231, %232 : vector<2x32xf32>
    %234 = math.tanh %233 : vector<2x32xf32>
    %235 = arith.mulf %230, %234 : vector<2x32xf32>
    %236 = vector.extract_strided_slice %235 {offsets = [0, 0], sizes = [1, 32], strides = [1, 1]} : vector<2x32xf32> to vector<1x32xf32>
    %c2_65 = arith.constant 2 : index
    %c0_66 = arith.constant 0 : index
    %237 = vector.load %arg20[%c2_65, %c0_66] : memref<16x32xf32, #tpu.memory_space<vmem>>, vector<1x32xf32>
    tpu.vector_store %arg20[%c2_65, %c0_66], %236 {strides = array<i32>} : memref<16x32xf32, #tpu.memory_space<vmem>>, vector<1x32xf32>,
    %238 = vector.extract_strided_slice %235 {offsets = [1, 0], sizes = [1, 32], strides = [1, 1]} : vector<2x32xf32> to vector<1x32xf32>
    %c10_67 = arith.constant 10 : index
    %c0_68 = arith.constant 0 : index
    %239 = vector.load %arg20[%c10_67, %c0_68] : memref<16x32xf32, #tpu.memory_space<vmem>>, vector<1x32xf32>
    tpu.vector_store %arg20[%c10_67, %c0_68], %238 {strides = array<i32>} : memref<16x32xf32, #tpu.memory_space<vmem>>, vector<1x32xf32>,
    %240 = vector.extract_strided_slice %173 {offsets = [6, 0], sizes = [2, 128], strides = [1, 1]} : vector<16x128xf32> to vector<2x128xf32>
    %cst_69 = arith.constant dense<0.000000e+00> : vector<2x128xf32>
    %241 = tpu.matmul %235, %165, %cst_69 {dimension_numbers = #tpu.dot_dimension_numbers<[1], [0], [0], [1], [0, 0, 1, 1], [], []>} : vector<2x32xf32>, vector<32x128xf32>, vector<2x128xf32> -> vector<2x128xf32>
    %242 = arith.addf %240, %241 : vector<2x128xf32>
    %243 = arith.negf %242 : vector<2x128xf32>
    %244 = math.exp %243 : vector<2x128xf32>
    %cst_70 = arith.constant 1.000000e+00 : f32
    %245 = vector.broadcast %cst_70 : f32 to vector<2x128xf32>
    %246 = arith.addf %245, %244 : vector<2x128xf32>
    %247 = arith.divf %245, %246 : vector<2x128xf32>
    %248 = math.tanh %242 : vector<2x128xf32>
    %249 = vector.extract_strided_slice %247 {offsets = [0, 0], sizes = [2, 32], strides = [1, 1]} : vector<2x128xf32> to vector<2x32xf32>
    %250 = vector.extract_strided_slice %247 {offsets = [0, 32], sizes = [2, 32], strides = [1, 1]} : vector<2x128xf32> to vector<2x32xf32>
    %251 = vector.extract_strided_slice %248 {offsets = [0, 64], sizes = [2, 32], strides = [1, 1]} : vector<2x128xf32> to vector<2x32xf32>
    %252 = vector.extract_strided_slice %247 {offsets = [0, 96], sizes = [2, 32], strides = [1, 1]} : vector<2x128xf32> to vector<2x32xf32>
    %253 = arith.mulf %250, %233 : vector<2x32xf32>
    %254 = arith.mulf %249, %251 : vector<2x32xf32>
    %255 = arith.addf %253, %254 : vector<2x32xf32>
    %256 = math.tanh %255 : vector<2x32xf32>
    %257 = arith.mulf %252, %256 : vector<2x32xf32>
    %258 = vector.extract_strided_slice %257 {offsets = [0, 0], sizes = [1, 32], strides = [1, 1]} : vector<2x32xf32> to vector<1x32xf32>
    %c3 = arith.constant 3 : index
    %c0_71 = arith.constant 0 : index
    %259 = vector.load %arg20[%c3, %c0_71] : memref<16x32xf32, #tpu.memory_space<vmem>>, vector<1x32xf32>
    tpu.vector_store %arg20[%c3, %c0_71], %258 {strides = array<i32>} : memref<16x32xf32, #tpu.memory_space<vmem>>, vector<1x32xf32>,
    %260 = vector.extract_strided_slice %257 {offsets = [1, 0], sizes = [1, 32], strides = [1, 1]} : vector<2x32xf32> to vector<1x32xf32>
    %c11 = arith.constant 11 : index
    %c0_72 = arith.constant 0 : index
    %261 = vector.load %arg20[%c11, %c0_72] : memref<16x32xf32, #tpu.memory_space<vmem>>, vector<1x32xf32>
    tpu.vector_store %arg20[%c11, %c0_72], %260 {strides = array<i32>} : memref<16x32xf32, #tpu.memory_space<vmem>>, vector<1x32xf32>,
    %262 = vector.extract_strided_slice %173 {offsets = [8, 0], sizes = [2, 128], strides = [1, 1]} : vector<16x128xf32> to vector<2x128xf32>
    %cst_73 = arith.constant dense<0.000000e+00> : vector<2x128xf32>
    %263 = tpu.matmul %257, %165, %cst_73 {dimension_numbers = #tpu.dot_dimension_numbers<[1], [0], [0], [1], [0, 0, 1, 1], [], []>} : vector<2x32xf32>, vector<32x128xf32>, vector<2x128xf32> -> vector<2x128xf32>
    %264 = arith.addf %262, %263 : vector<2x128xf32>
    %265 = arith.negf %264 : vector<2x128xf32>
    %266 = math.exp %265 : vector<2x128xf32>
    %cst_74 = arith.constant 1.000000e+00 : f32
    %267 = vector.broadcast %cst_74 : f32 to vector<2x128xf32>
    %268 = arith.addf %267, %266 : vector<2x128xf32>
    %269 = arith.divf %267, %268 : vector<2x128xf32>
    %270 = math.tanh %264 : vector<2x128xf32>
    %271 = vector.extract_strided_slice %269 {offsets = [0, 0], sizes = [2, 32], strides = [1, 1]} : vector<2x128xf32> to vector<2x32xf32>
    %272 = vector.extract_strided_slice %269 {offsets = [0, 32], sizes = [2, 32], strides = [1, 1]} : vector<2x128xf32> to vector<2x32xf32>
    %273 = vector.extract_strided_slice %270 {offsets = [0, 64], sizes = [2, 32], strides = [1, 1]} : vector<2x128xf32> to vector<2x32xf32>
    %274 = vector.extract_strided_slice %269 {offsets = [0, 96], sizes = [2, 32], strides = [1, 1]} : vector<2x128xf32> to vector<2x32xf32>
    %275 = arith.mulf %272, %255 : vector<2x32xf32>
    %276 = arith.mulf %271, %273 : vector<2x32xf32>
    %277 = arith.addf %275, %276 : vector<2x32xf32>
    %278 = math.tanh %277 : vector<2x32xf32>
    %279 = arith.mulf %274, %278 : vector<2x32xf32>
    %280 = vector.extract_strided_slice %279 {offsets = [0, 0], sizes = [1, 32], strides = [1, 1]} : vector<2x32xf32> to vector<1x32xf32>
    %c4_75 = arith.constant 4 : index
    %c0_76 = arith.constant 0 : index
    %281 = vector.load %arg20[%c4_75, %c0_76] : memref<16x32xf32, #tpu.memory_space<vmem>>, vector<1x32xf32>
    tpu.vector_store %arg20[%c4_75, %c0_76], %280 {strides = array<i32>} : memref<16x32xf32, #tpu.memory_space<vmem>>, vector<1x32xf32>,
    %282 = vector.extract_strided_slice %279 {offsets = [1, 0], sizes = [1, 32], strides = [1, 1]} : vector<2x32xf32> to vector<1x32xf32>
    %c12_77 = arith.constant 12 : index
    %c0_78 = arith.constant 0 : index
    %283 = vector.load %arg20[%c12_77, %c0_78] : memref<16x32xf32, #tpu.memory_space<vmem>>, vector<1x32xf32>
    tpu.vector_store %arg20[%c12_77, %c0_78], %282 {strides = array<i32>} : memref<16x32xf32, #tpu.memory_space<vmem>>, vector<1x32xf32>,
    %284 = vector.extract_strided_slice %173 {offsets = [10, 0], sizes = [2, 128], strides = [1, 1]} : vector<16x128xf32> to vector<2x128xf32>
    %cst_79 = arith.constant dense<0.000000e+00> : vector<2x128xf32>
    %285 = tpu.matmul %279, %165, %cst_79 {dimension_numbers = #tpu.dot_dimension_numbers<[1], [0], [0], [1], [0, 0, 1, 1], [], []>} : vector<2x32xf32>, vector<32x128xf32>, vector<2x128xf32> -> vector<2x128xf32>
    %286 = arith.addf %284, %285 : vector<2x128xf32>
    %287 = arith.negf %286 : vector<2x128xf32>
    %288 = math.exp %287 : vector<2x128xf32>
    %cst_80 = arith.constant 1.000000e+00 : f32
    %289 = vector.broadcast %cst_80 : f32 to vector<2x128xf32>
    %290 = arith.addf %289, %288 : vector<2x128xf32>
    %291 = arith.divf %289, %290 : vector<2x128xf32>
    %292 = math.tanh %286 : vector<2x128xf32>
    %293 = vector.extract_strided_slice %291 {offsets = [0, 0], sizes = [2, 32], strides = [1, 1]} : vector<2x128xf32> to vector<2x32xf32>
    %294 = vector.extract_strided_slice %291 {offsets = [0, 32], sizes = [2, 32], strides = [1, 1]} : vector<2x128xf32> to vector<2x32xf32>
    %295 = vector.extract_strided_slice %292 {offsets = [0, 64], sizes = [2, 32], strides = [1, 1]} : vector<2x128xf32> to vector<2x32xf32>
    %296 = vector.extract_strided_slice %291 {offsets = [0, 96], sizes = [2, 32], strides = [1, 1]} : vector<2x128xf32> to vector<2x32xf32>
    %297 = arith.mulf %294, %277 : vector<2x32xf32>
    %298 = arith.mulf %293, %295 : vector<2x32xf32>
    %299 = arith.addf %297, %298 : vector<2x32xf32>
    %300 = math.tanh %299 : vector<2x32xf32>
    %301 = arith.mulf %296, %300 : vector<2x32xf32>
    %302 = vector.extract_strided_slice %301 {offsets = [0, 0], sizes = [1, 32], strides = [1, 1]} : vector<2x32xf32> to vector<1x32xf32>
    %c5 = arith.constant 5 : index
    %c0_81 = arith.constant 0 : index
    %303 = vector.load %arg20[%c5, %c0_81] : memref<16x32xf32, #tpu.memory_space<vmem>>, vector<1x32xf32>
    tpu.vector_store %arg20[%c5, %c0_81], %302 {strides = array<i32>} : memref<16x32xf32, #tpu.memory_space<vmem>>, vector<1x32xf32>,
    %304 = vector.extract_strided_slice %301 {offsets = [1, 0], sizes = [1, 32], strides = [1, 1]} : vector<2x32xf32> to vector<1x32xf32>
    %c13 = arith.constant 13 : index
    %c0_82 = arith.constant 0 : index
    %305 = vector.load %arg20[%c13, %c0_82] : memref<16x32xf32, #tpu.memory_space<vmem>>, vector<1x32xf32>
    tpu.vector_store %arg20[%c13, %c0_82], %304 {strides = array<i32>} : memref<16x32xf32, #tpu.memory_space<vmem>>, vector<1x32xf32>,
    %306 = vector.extract_strided_slice %173 {offsets = [12, 0], sizes = [2, 128], strides = [1, 1]} : vector<16x128xf32> to vector<2x128xf32>
    %cst_83 = arith.constant dense<0.000000e+00> : vector<2x128xf32>
    %307 = tpu.matmul %301, %165, %cst_83 {dimension_numbers = #tpu.dot_dimension_numbers<[1], [0], [0], [1], [0, 0, 1, 1], [], []>} : vector<2x32xf32>, vector<32x128xf32>, vector<2x128xf32> -> vector<2x128xf32>
    %308 = arith.addf %306, %307 : vector<2x128xf32>
    %309 = arith.negf %308 : vector<2x128xf32>
    %310 = math.exp %309 : vector<2x128xf32>
    %cst_84 = arith.constant 1.000000e+00 : f32
    %311 = vector.broadcast %cst_84 : f32 to vector<2x128xf32>
    %312 = arith.addf %311, %310 : vector<2x128xf32>
    %313 = arith.divf %311, %312 : vector<2x128xf32>
    %314 = math.tanh %308 : vector<2x128xf32>
    %315 = vector.extract_strided_slice %313 {offsets = [0, 0], sizes = [2, 32], strides = [1, 1]} : vector<2x128xf32> to vector<2x32xf32>
    %316 = vector.extract_strided_slice %313 {offsets = [0, 32], sizes = [2, 32], strides = [1, 1]} : vector<2x128xf32> to vector<2x32xf32>
    %317 = vector.extract_strided_slice %314 {offsets = [0, 64], sizes = [2, 32], strides = [1, 1]} : vector<2x128xf32> to vector<2x32xf32>
    %318 = vector.extract_strided_slice %313 {offsets = [0, 96], sizes = [2, 32], strides = [1, 1]} : vector<2x128xf32> to vector<2x32xf32>
    %319 = arith.mulf %316, %299 : vector<2x32xf32>
    %320 = arith.mulf %315, %317 : vector<2x32xf32>
    %321 = arith.addf %319, %320 : vector<2x32xf32>
    %322 = math.tanh %321 : vector<2x32xf32>
    %323 = arith.mulf %318, %322 : vector<2x32xf32>
    %324 = vector.extract_strided_slice %323 {offsets = [0, 0], sizes = [1, 32], strides = [1, 1]} : vector<2x32xf32> to vector<1x32xf32>
    %c6_85 = arith.constant 6 : index
    %c0_86 = arith.constant 0 : index
    %325 = vector.load %arg20[%c6_85, %c0_86] : memref<16x32xf32, #tpu.memory_space<vmem>>, vector<1x32xf32>
    tpu.vector_store %arg20[%c6_85, %c0_86], %324 {strides = array<i32>} : memref<16x32xf32, #tpu.memory_space<vmem>>, vector<1x32xf32>,
    %326 = vector.extract_strided_slice %323 {offsets = [1, 0], sizes = [1, 32], strides = [1, 1]} : vector<2x32xf32> to vector<1x32xf32>
    %c14_87 = arith.constant 14 : index
    %c0_88 = arith.constant 0 : index
    %327 = vector.load %arg20[%c14_87, %c0_88] : memref<16x32xf32, #tpu.memory_space<vmem>>, vector<1x32xf32>
    tpu.vector_store %arg20[%c14_87, %c0_88], %326 {strides = array<i32>} : memref<16x32xf32, #tpu.memory_space<vmem>>, vector<1x32xf32>,
    %328 = vector.extract_strided_slice %173 {offsets = [14, 0], sizes = [2, 128], strides = [1, 1]} : vector<16x128xf32> to vector<2x128xf32>
    %cst_89 = arith.constant dense<0.000000e+00> : vector<2x128xf32>
    %329 = tpu.matmul %323, %165, %cst_89 {dimension_numbers = #tpu.dot_dimension_numbers<[1], [0], [0], [1], [0, 0, 1, 1], [], []>} : vector<2x32xf32>, vector<32x128xf32>, vector<2x128xf32> -> vector<2x128xf32>
    %330 = arith.addf %328, %329 : vector<2x128xf32>
    %331 = arith.negf %330 : vector<2x128xf32>
    %332 = math.exp %331 : vector<2x128xf32>
    %cst_90 = arith.constant 1.000000e+00 : f32
    %333 = vector.broadcast %cst_90 : f32 to vector<2x128xf32>
    %334 = arith.addf %333, %332 : vector<2x128xf32>
    %335 = arith.divf %333, %334 : vector<2x128xf32>
    %336 = math.tanh %330 : vector<2x128xf32>
    %337 = vector.extract_strided_slice %335 {offsets = [0, 0], sizes = [2, 32], strides = [1, 1]} : vector<2x128xf32> to vector<2x32xf32>
    %338 = vector.extract_strided_slice %335 {offsets = [0, 32], sizes = [2, 32], strides = [1, 1]} : vector<2x128xf32> to vector<2x32xf32>
    %339 = vector.extract_strided_slice %336 {offsets = [0, 64], sizes = [2, 32], strides = [1, 1]} : vector<2x128xf32> to vector<2x32xf32>
    %340 = vector.extract_strided_slice %335 {offsets = [0, 96], sizes = [2, 32], strides = [1, 1]} : vector<2x128xf32> to vector<2x32xf32>
    %341 = arith.mulf %338, %321 : vector<2x32xf32>
    %342 = arith.mulf %337, %339 : vector<2x32xf32>
    %343 = arith.addf %341, %342 : vector<2x32xf32>
    %344 = math.tanh %343 : vector<2x32xf32>
    %345 = arith.mulf %340, %344 : vector<2x32xf32>
    %346 = vector.extract_strided_slice %345 {offsets = [0, 0], sizes = [1, 32], strides = [1, 1]} : vector<2x32xf32> to vector<1x32xf32>
    %c7 = arith.constant 7 : index
    %c0_91 = arith.constant 0 : index
    %347 = vector.load %arg20[%c7, %c0_91] : memref<16x32xf32, #tpu.memory_space<vmem>>, vector<1x32xf32>
    tpu.vector_store %arg20[%c7, %c0_91], %346 {strides = array<i32>} : memref<16x32xf32, #tpu.memory_space<vmem>>, vector<1x32xf32>,
    %348 = vector.extract_strided_slice %345 {offsets = [1, 0], sizes = [1, 32], strides = [1, 1]} : vector<2x32xf32> to vector<1x32xf32>
    %c15 = arith.constant 15 : index
    %c0_92 = arith.constant 0 : index
    %349 = vector.load %arg20[%c15, %c0_92] : memref<16x32xf32, #tpu.memory_space<vmem>>, vector<1x32xf32>
    tpu.vector_store %arg20[%c15, %c0_92], %348 {strides = array<i32>} : memref<16x32xf32, #tpu.memory_space<vmem>>, vector<1x32xf32>,
    %c0_93 = arith.constant 0 : index
    %c0_94 = arith.constant 0 : index
    %350 = vector.load %arg4[%c0_93, %c0_94] : memref<4x32xf32, #tpu.memory_space<vmem>>, vector<4x32xf32>
    %c0_95 = arith.constant 0 : index
    %c0_96 = arith.constant 0 : index
    %351 = vector.load %arg12[%c0_95, %c0_96] : memref<32x16xf32, #tpu.memory_space<vmem>>, vector<32x16xf32>
    %cst_97 = arith.constant dense<0.000000e+00> : vector<4x16xf32>
    %352 = tpu.matmul %350, %351, %cst_97 {dimension_numbers = #tpu.dot_dimension_numbers<[1], [0], [0], [1], [0, 0, 1, 1], [], []>} : vector<4x32xf32>, vector<32x16xf32>, vector<4x16xf32> -> vector<4x16xf32>
    %c0_98 = arith.constant 0 : index
    %c0_99 = arith.constant 0 : index
    %353 = vector.load %arg13[%c0_98, %c0_99] : memref<32x16xf32, #tpu.memory_space<vmem>>, vector<32x16xf32>
    %cst_100 = arith.constant dense<0.000000e+00> : vector<4x16xf32>
    %354 = tpu.matmul %350, %353, %cst_100 {dimension_numbers = #tpu.dot_dimension_numbers<[1], [0], [0], [1], [0, 0, 1, 1], [], []>} : vector<4x32xf32>, vector<32x16xf32>, vector<4x16xf32> -> vector<4x16xf32>
    %c0_101 = arith.constant 0 : index
    %c0_102 = arith.constant 0 : index
    %355 = vector.load %arg11[%c0_101, %c0_102] : memref<32x16xf32, #tpu.memory_space<vmem>>, vector<32x16xf32>
    %c0_103 = arith.constant 0 : index
    %c0_104 = arith.constant 0 : index
    %356 = vector.load %arg14[%c0_103, %c0_104] : memref<16x16xf32, #tpu.memory_space<vmem>>, vector<16x16xf32>
    %c0_105 = arith.constant 0 : index
    %c0_106 = arith.constant 0 : index
    %357 = vector.load %arg16[%c0_105, %c0_106] : memref<1x4xf32, #tpu.memory_space<vmem>>, vector<1x4xf32>
    %c0_107 = arith.constant 0 : index
    %c0_108 = arith.constant 0 : index
    %358 = vector.load %arg20[%c0_107, %c0_108] : memref<16x32xf32, #tpu.memory_space<vmem>>, vector<8x32xf32>
    %cst_109 = arith.constant dense<0.000000e+00> : vector<8x16xf32>
    %359 = tpu.matmul %358, %355, %cst_109 {dimension_numbers = #tpu.dot_dimension_numbers<[1], [0], [0], [1], [0, 0, 1, 1], [], []>} : vector<8x32xf32>, vector<32x16xf32>, vector<8x16xf32> -> vector<8x16xf32>
    %360 = vector.extract_strided_slice %352 {offsets = [0, 0], sizes = [2, 16], strides = [1, 1]} : vector<4x16xf32> to vector<2x16xf32>
    %361 = vector.extract_strided_slice %354 {offsets = [0, 0], sizes = [2, 16], strides = [1, 1]} : vector<4x16xf32> to vector<2x16xf32>
    %362 = vector.extract_strided_slice %359 {offsets = [0, 0], sizes = [8, 8], strides = [1, 1]} : vector<8x16xf32> to vector<8x8xf32>
    %363 = vector.extract_strided_slice %360 {offsets = [0, 0], sizes = [2, 8], strides = [1, 1]} : vector<2x16xf32> to vector<2x8xf32>
    %364 = vector.extract_strided_slice %361 {offsets = [0, 0], sizes = [2, 8], strides = [1, 1]} : vector<2x16xf32> to vector<2x8xf32>
    %cst_110 = arith.constant dense<0.000000e+00> : vector<8x2xf32>
    %365 = tpu.matmul %362, %363, %cst_110 {dimension_numbers = #tpu.dot_dimension_numbers<[1], [1], [0], [0], [0, 0, 1, 0], [], []>} : vector<8x8xf32>, vector<2x8xf32>, vector<8x2xf32> -> vector<8x2xf32>
    %cst_111 = arith.constant 0.353553385 : f32
    %366 = vector.broadcast %cst_111 : f32 to vector<8x2xf32>
    %367 = arith.mulf %365, %366 : vector<8x2xf32>
    %cst_112 = arith.constant dense<0xFF800000> : vector<8xf32>
    %368 = vector.multi_reduction <maximumf>, %367, %cst_112 [1] : vector<8x2xf32> to vector<8xf32>
    %369 = vector.shape_cast %368 : vector<8xf32> to vector<8x1xf32>
    %370 = vector.broadcast %369 : vector<8x1xf32> to vector<8x2xf32>
    %371 = arith.subf %367, %370 : vector<8x2xf32>
    %372 = math.exp %371 : vector<8x2xf32>
    %cst_113 = arith.constant dense<0.000000e+00> : vector<8xf32>
    %373 = vector.multi_reduction <add>, %372, %cst_113 [1] : vector<8x2xf32> to vector<8xf32>
    %374 = vector.shape_cast %373 : vector<8xf32> to vector<8x1xf32>
    %375 = tpu.reciprocal %374 {approx = true} : vector<8x1xf32> -> vector<8x1xf32>
    %376 = vector.broadcast %375 : vector<8x1xf32> to vector<8x2xf32>
    %377 = arith.mulf %372, %376 : vector<8x2xf32>
    %c0_114 = arith.constant 0 : index
    %c0_115 = arith.constant 0 : index
    %c0_116 = arith.constant 0 : index
    %c0_117 = arith.constant 0 : index
    %378 = vector.load %arg18[%c0_114, %c0_115, %c0_116, %c0_117] : memref<2x2x8x2xf32, #tpu.memory_space<vmem>>, vector<1x1x8x2xf32>
    %379 = vector.shape_cast %378 : vector<1x1x8x2xf32> to vector<8x2xf32>
    %380 = vector.shape_cast %377 : vector<8x2xf32> to vector<1x1x8x2xf32>
    tpu.vector_store %arg18[%c0_114, %c0_115, %c0_116, %c0_117], %380 {strides = array<i32>} : memref<2x2x8x2xf32, #tpu.memory_space<vmem>>, vector<1x1x8x2xf32>,
    %cst_118 = arith.constant dense<0.000000e+00> : vector<8x8xf32>
    %381 = tpu.matmul %377, %364, %cst_118 {dimension_numbers = #tpu.dot_dimension_numbers<[1], [0], [0], [1], [0, 0, 1, 1], [], []>} : vector<8x2xf32>, vector<2x8xf32>, vector<8x8xf32> -> vector<8x8xf32>
    %382 = vector.extract_strided_slice %359 {offsets = [0, 8], sizes = [8, 8], strides = [1, 1]} : vector<8x16xf32> to vector<8x8xf32>
    %383 = vector.extract_strided_slice %360 {offsets = [0, 8], sizes = [2, 8], strides = [1, 1]} : vector<2x16xf32> to vector<2x8xf32>
    %384 = vector.extract_strided_slice %361 {offsets = [0, 8], sizes = [2, 8], strides = [1, 1]} : vector<2x16xf32> to vector<2x8xf32>
    %cst_119 = arith.constant dense<0.000000e+00> : vector<8x2xf32>
    %385 = tpu.matmul %382, %383, %cst_119 {dimension_numbers = #tpu.dot_dimension_numbers<[1], [1], [0], [0], [0, 0, 1, 0], [], []>} : vector<8x8xf32>, vector<2x8xf32>, vector<8x2xf32> -> vector<8x2xf32>
    %cst_120 = arith.constant 0.353553385 : f32
    %386 = vector.broadcast %cst_120 : f32 to vector<8x2xf32>
    %387 = arith.mulf %385, %386 : vector<8x2xf32>
    %cst_121 = arith.constant dense<0xFF800000> : vector<8xf32>
    %388 = vector.multi_reduction <maximumf>, %387, %cst_121 [1] : vector<8x2xf32> to vector<8xf32>
    %389 = vector.shape_cast %388 : vector<8xf32> to vector<8x1xf32>
    %390 = vector.broadcast %389 : vector<8x1xf32> to vector<8x2xf32>
    %391 = arith.subf %387, %390 : vector<8x2xf32>
    %392 = math.exp %391 : vector<8x2xf32>
    %cst_122 = arith.constant dense<0.000000e+00> : vector<8xf32>
    %393 = vector.multi_reduction <add>, %392, %cst_122 [1] : vector<8x2xf32> to vector<8xf32>
    %394 = vector.shape_cast %393 : vector<8xf32> to vector<8x1xf32>
    %395 = tpu.reciprocal %394 {approx = true} : vector<8x1xf32> -> vector<8x1xf32>
    %396 = vector.broadcast %395 : vector<8x1xf32> to vector<8x2xf32>
    %397 = arith.mulf %392, %396 : vector<8x2xf32>
    %c0_123 = arith.constant 0 : index
    %c1_124 = arith.constant 1 : index
    %c0_125 = arith.constant 0 : index
    %c0_126 = arith.constant 0 : index
    %398 = vector.load %arg18[%c0_123, %c1_124, %c0_125, %c0_126] : memref<2x2x8x2xf32, #tpu.memory_space<vmem>>, vector<1x1x8x2xf32>
    %399 = vector.shape_cast %398 : vector<1x1x8x2xf32> to vector<8x2xf32>
    %400 = vector.shape_cast %397 : vector<8x2xf32> to vector<1x1x8x2xf32>
    tpu.vector_store %arg18[%c0_123, %c1_124, %c0_125, %c0_126], %400 {strides = array<i32>} : memref<2x2x8x2xf32, #tpu.memory_space<vmem>>, vector<1x1x8x2xf32>,
    %cst_127 = arith.constant dense<0.000000e+00> : vector<8x8xf32>
    %401 = tpu.matmul %397, %384, %cst_127 {dimension_numbers = #tpu.dot_dimension_numbers<[1], [0], [0], [1], [0, 0, 1, 1], [], []>} : vector<8x2xf32>, vector<2x8xf32>, vector<8x8xf32> -> vector<8x8xf32>
    %402 = tpu.concatenate %381, %401 in 1 : vector<8x8xf32>, vector<8x8xf32> -> vector<8x16xf32>
    %cst_128 = arith.constant dense<0.000000e+00> : vector<8x16xf32>
    %403 = tpu.matmul %402, %356, %cst_128 {dimension_numbers = #tpu.dot_dimension_numbers<[1], [0], [0], [1], [0, 0, 1, 1], [], []>} : vector<8x16xf32>, vector<16x16xf32>, vector<8x16xf32> -> vector<8x16xf32>
    %404 = tpu.concatenate %403, %358 in 1 : vector<8x16xf32>, vector<8x32xf32> -> vector<8x48xf32>
    %cst_129 = arith.constant 0.000000e+00 : f32
    %405 = vector.broadcast %cst_129 : f32 to vector<8x48xf32>
    %406 = arith.maximumf %404, %405 : vector<8x48xf32>
    %407 = vector.extract_strided_slice %406 {offsets = [0, 0], sizes = [1, 48], strides = [1, 1]} : vector<8x48xf32> to vector<1x48xf32>
    %c0_130 = arith.constant 0 : index
    %c0_131 = arith.constant 0 : index
    %c0_132 = arith.constant 0 : index
    %408 = vector.load %arg15[%c0_130, %c0_131, %c0_132] : memref<8x48x4xf32, #tpu.memory_space<vmem>>, vector<1x48x4xf32>
    %409 = vector.shape_cast %408 : vector<1x48x4xf32> to vector<48x4xf32>
    %cst_133 = arith.constant dense<0.000000e+00> : vector<1x4xf32>
    %410 = tpu.matmul %407, %409, %cst_133 {dimension_numbers = #tpu.dot_dimension_numbers<[1], [0], [0], [1], [0, 0, 1, 1], [], []>} : vector<1x48xf32>, vector<48x4xf32>, vector<1x4xf32> -> vector<1x4xf32>
    %411 = arith.addf %357, %410 : vector<1x4xf32>
    %412 = vector.extract_strided_slice %406 {offsets = [1, 0], sizes = [1, 48], strides = [1, 1]} : vector<8x48xf32> to vector<1x48xf32>
    %c1_134 = arith.constant 1 : index
    %c0_135 = arith.constant 0 : index
    %c0_136 = arith.constant 0 : index
    %413 = vector.load %arg15[%c1_134, %c0_135, %c0_136] : memref<8x48x4xf32, #tpu.memory_space<vmem>>, vector<1x48x4xf32>
    %414 = vector.shape_cast %413 : vector<1x48x4xf32> to vector<48x4xf32>
    %cst_137 = arith.constant dense<0.000000e+00> : vector<1x4xf32>
    %415 = tpu.matmul %412, %414, %cst_137 {dimension_numbers = #tpu.dot_dimension_numbers<[1], [0], [0], [1], [0, 0, 1, 1], [], []>} : vector<1x48xf32>, vector<48x4xf32>, vector<1x4xf32> -> vector<1x4xf32>
    %416 = arith.addf %411, %415 : vector<1x4xf32>
    %417 = vector.extract_strided_slice %406 {offsets = [2, 0], sizes = [1, 48], strides = [1, 1]} : vector<8x48xf32> to vector<1x48xf32>
    %c2_138 = arith.constant 2 : index
    %c0_139 = arith.constant 0 : index
    %c0_140 = arith.constant 0 : index
    %418 = vector.load %arg15[%c2_138, %c0_139, %c0_140] : memref<8x48x4xf32, #tpu.memory_space<vmem>>, vector<1x48x4xf32>
    %419 = vector.shape_cast %418 : vector<1x48x4xf32> to vector<48x4xf32>
    %cst_141 = arith.constant dense<0.000000e+00> : vector<1x4xf32>
    %420 = tpu.matmul %417, %419, %cst_141 {dimension_numbers = #tpu.dot_dimension_numbers<[1], [0], [0], [1], [0, 0, 1, 1], [], []>} : vector<1x48xf32>, vector<48x4xf32>, vector<1x4xf32> -> vector<1x4xf32>
    %421 = arith.addf %416, %420 : vector<1x4xf32>
    %422 = vector.extract_strided_slice %406 {offsets = [3, 0], sizes = [1, 48], strides = [1, 1]} : vector<8x48xf32> to vector<1x48xf32>
    %c3_142 = arith.constant 3 : index
    %c0_143 = arith.constant 0 : index
    %c0_144 = arith.constant 0 : index
    %423 = vector.load %arg15[%c3_142, %c0_143, %c0_144] : memref<8x48x4xf32, #tpu.memory_space<vmem>>, vector<1x48x4xf32>
    %424 = vector.shape_cast %423 : vector<1x48x4xf32> to vector<48x4xf32>
    %cst_145 = arith.constant dense<0.000000e+00> : vector<1x4xf32>
    %425 = tpu.matmul %422, %424, %cst_145 {dimension_numbers = #tpu.dot_dimension_numbers<[1], [0], [0], [1], [0, 0, 1, 1], [], []>} : vector<1x48xf32>, vector<48x4xf32>, vector<1x4xf32> -> vector<1x4xf32>
    %426 = arith.addf %421, %425 : vector<1x4xf32>
    %427 = vector.extract_strided_slice %406 {offsets = [4, 0], sizes = [1, 48], strides = [1, 1]} : vector<8x48xf32> to vector<1x48xf32>
    %c4_146 = arith.constant 4 : index
    %c0_147 = arith.constant 0 : index
    %c0_148 = arith.constant 0 : index
    %428 = vector.load %arg15[%c4_146, %c0_147, %c0_148] : memref<8x48x4xf32, #tpu.memory_space<vmem>>, vector<1x48x4xf32>
    %429 = vector.shape_cast %428 : vector<1x48x4xf32> to vector<48x4xf32>
    %cst_149 = arith.constant dense<0.000000e+00> : vector<1x4xf32>
    %430 = tpu.matmul %427, %429, %cst_149 {dimension_numbers = #tpu.dot_dimension_numbers<[1], [0], [0], [1], [0, 0, 1, 1], [], []>} : vector<1x48xf32>, vector<48x4xf32>, vector<1x4xf32> -> vector<1x4xf32>
    %431 = arith.addf %426, %430 : vector<1x4xf32>
    %432 = vector.extract_strided_slice %406 {offsets = [5, 0], sizes = [1, 48], strides = [1, 1]} : vector<8x48xf32> to vector<1x48xf32>
    %c5_150 = arith.constant 5 : index
    %c0_151 = arith.constant 0 : index
    %c0_152 = arith.constant 0 : index
    %433 = vector.load %arg15[%c5_150, %c0_151, %c0_152] : memref<8x48x4xf32, #tpu.memory_space<vmem>>, vector<1x48x4xf32>
    %434 = vector.shape_cast %433 : vector<1x48x4xf32> to vector<48x4xf32>
    %cst_153 = arith.constant dense<0.000000e+00> : vector<1x4xf32>
    %435 = tpu.matmul %432, %434, %cst_153 {dimension_numbers = #tpu.dot_dimension_numbers<[1], [0], [0], [1], [0, 0, 1, 1], [], []>} : vector<1x48xf32>, vector<48x4xf32>, vector<1x4xf32> -> vector<1x4xf32>
    %436 = arith.addf %431, %435 : vector<1x4xf32>
    %437 = vector.extract_strided_slice %406 {offsets = [6, 0], sizes = [1, 48], strides = [1, 1]} : vector<8x48xf32> to vector<1x48xf32>
    %c6_154 = arith.constant 6 : index
    %c0_155 = arith.constant 0 : index
    %c0_156 = arith.constant 0 : index
    %438 = vector.load %arg15[%c6_154, %c0_155, %c0_156] : memref<8x48x4xf32, #tpu.memory_space<vmem>>, vector<1x48x4xf32>
    %439 = vector.shape_cast %438 : vector<1x48x4xf32> to vector<48x4xf32>
    %cst_157 = arith.constant dense<0.000000e+00> : vector<1x4xf32>
    %440 = tpu.matmul %437, %439, %cst_157 {dimension_numbers = #tpu.dot_dimension_numbers<[1], [0], [0], [1], [0, 0, 1, 1], [], []>} : vector<1x48xf32>, vector<48x4xf32>, vector<1x4xf32> -> vector<1x4xf32>
    %441 = arith.addf %436, %440 : vector<1x4xf32>
    %442 = vector.extract_strided_slice %406 {offsets = [7, 0], sizes = [1, 48], strides = [1, 1]} : vector<8x48xf32> to vector<1x48xf32>
    %c7_158 = arith.constant 7 : index
    %c0_159 = arith.constant 0 : index
    %c0_160 = arith.constant 0 : index
    %443 = vector.load %arg15[%c7_158, %c0_159, %c0_160] : memref<8x48x4xf32, #tpu.memory_space<vmem>>, vector<1x48x4xf32>
    %444 = vector.shape_cast %443 : vector<1x48x4xf32> to vector<48x4xf32>
    %cst_161 = arith.constant dense<0.000000e+00> : vector<1x4xf32>
    %445 = tpu.matmul %442, %444, %cst_161 {dimension_numbers = #tpu.dot_dimension_numbers<[1], [0], [0], [1], [0, 0, 1, 1], [], []>} : vector<1x48xf32>, vector<48x4xf32>, vector<1x4xf32> -> vector<1x4xf32>
    %446 = arith.addf %441, %445 : vector<1x4xf32>
    %c0_162 = arith.constant 0 : index
    %c0_163 = arith.constant 0 : index
    %447 = vector.load %arg17[%c0_162, %c0_163] : memref<2x4xf32, #tpu.memory_space<vmem>>, vector<1x4xf32>
    tpu.vector_store %arg17[%c0_162, %c0_163], %446 {strides = array<i32>} : memref<2x4xf32, #tpu.memory_space<vmem>>, vector<1x4xf32>,
    %c8_164 = arith.constant 8 : index
    %c0_165 = arith.constant 0 : index
    %448 = vector.load %arg20[%c8_164, %c0_165] : memref<16x32xf32, #tpu.memory_space<vmem>>, vector<8x32xf32>
    %cst_166 = arith.constant dense<0.000000e+00> : vector<8x16xf32>
    %449 = tpu.matmul %448, %355, %cst_166 {dimension_numbers = #tpu.dot_dimension_numbers<[1], [0], [0], [1], [0, 0, 1, 1], [], []>} : vector<8x32xf32>, vector<32x16xf32>, vector<8x16xf32> -> vector<8x16xf32>
    %450 = vector.extract_strided_slice %352 {offsets = [2, 0], sizes = [2, 16], strides = [1, 1]} : vector<4x16xf32> to vector<2x16xf32>
    %451 = vector.extract_strided_slice %354 {offsets = [2, 0], sizes = [2, 16], strides = [1, 1]} : vector<4x16xf32> to vector<2x16xf32>
    %452 = vector.extract_strided_slice %449 {offsets = [0, 0], sizes = [8, 8], strides = [1, 1]} : vector<8x16xf32> to vector<8x8xf32>
    %453 = vector.extract_strided_slice %450 {offsets = [0, 0], sizes = [2, 8], strides = [1, 1]} : vector<2x16xf32> to vector<2x8xf32>
    %454 = vector.extract_strided_slice %451 {offsets = [0, 0], sizes = [2, 8], strides = [1, 1]} : vector<2x16xf32> to vector<2x8xf32>
    %cst_167 = arith.constant dense<0.000000e+00> : vector<8x2xf32>
    %455 = tpu.matmul %452, %453, %cst_167 {dimension_numbers = #tpu.dot_dimension_numbers<[1], [1], [0], [0], [0, 0, 1, 0], [], []>} : vector<8x8xf32>, vector<2x8xf32>, vector<8x2xf32> -> vector<8x2xf32>
    %cst_168 = arith.constant 0.353553385 : f32
    %456 = vector.broadcast %cst_168 : f32 to vector<8x2xf32>
    %457 = arith.mulf %455, %456 : vector<8x2xf32>
    %cst_169 = arith.constant dense<0xFF800000> : vector<8xf32>
    %458 = vector.multi_reduction <maximumf>, %457, %cst_169 [1] : vector<8x2xf32> to vector<8xf32>
    %459 = vector.shape_cast %458 : vector<8xf32> to vector<8x1xf32>
    %460 = vector.broadcast %459 : vector<8x1xf32> to vector<8x2xf32>
    %461 = arith.subf %457, %460 : vector<8x2xf32>
    %462 = math.exp %461 : vector<8x2xf32>
    %cst_170 = arith.constant dense<0.000000e+00> : vector<8xf32>
    %463 = vector.multi_reduction <add>, %462, %cst_170 [1] : vector<8x2xf32> to vector<8xf32>
    %464 = vector.shape_cast %463 : vector<8xf32> to vector<8x1xf32>
    %465 = tpu.reciprocal %464 {approx = true} : vector<8x1xf32> -> vector<8x1xf32>
    %466 = vector.broadcast %465 : vector<8x1xf32> to vector<8x2xf32>
    %467 = arith.mulf %462, %466 : vector<8x2xf32>
    %c1_171 = arith.constant 1 : index
    %c0_172 = arith.constant 0 : index
    %c0_173 = arith.constant 0 : index
    %c0_174 = arith.constant 0 : index
    %468 = vector.load %arg18[%c1_171, %c0_172, %c0_173, %c0_174] : memref<2x2x8x2xf32, #tpu.memory_space<vmem>>, vector<1x1x8x2xf32>
    %469 = vector.shape_cast %468 : vector<1x1x8x2xf32> to vector<8x2xf32>
    %470 = vector.shape_cast %467 : vector<8x2xf32> to vector<1x1x8x2xf32>
    tpu.vector_store %arg18[%c1_171, %c0_172, %c0_173, %c0_174], %470 {strides = array<i32>} : memref<2x2x8x2xf32, #tpu.memory_space<vmem>>, vector<1x1x8x2xf32>,
    %cst_175 = arith.constant dense<0.000000e+00> : vector<8x8xf32>
    %471 = tpu.matmul %467, %454, %cst_175 {dimension_numbers = #tpu.dot_dimension_numbers<[1], [0], [0], [1], [0, 0, 1, 1], [], []>} : vector<8x2xf32>, vector<2x8xf32>, vector<8x8xf32> -> vector<8x8xf32>
    %472 = vector.extract_strided_slice %449 {offsets = [0, 8], sizes = [8, 8], strides = [1, 1]} : vector<8x16xf32> to vector<8x8xf32>
    %473 = vector.extract_strided_slice %450 {offsets = [0, 8], sizes = [2, 8], strides = [1, 1]} : vector<2x16xf32> to vector<2x8xf32>
    %474 = vector.extract_strided_slice %451 {offsets = [0, 8], sizes = [2, 8], strides = [1, 1]} : vector<2x16xf32> to vector<2x8xf32>
    %cst_176 = arith.constant dense<0.000000e+00> : vector<8x2xf32>
    %475 = tpu.matmul %472, %473, %cst_176 {dimension_numbers = #tpu.dot_dimension_numbers<[1], [1], [0], [0], [0, 0, 1, 0], [], []>} : vector<8x8xf32>, vector<2x8xf32>, vector<8x2xf32> -> vector<8x2xf32>
    %cst_177 = arith.constant 0.353553385 : f32
    %476 = vector.broadcast %cst_177 : f32 to vector<8x2xf32>
    %477 = arith.mulf %475, %476 : vector<8x2xf32>
    %cst_178 = arith.constant dense<0xFF800000> : vector<8xf32>
    %478 = vector.multi_reduction <maximumf>, %477, %cst_178 [1] : vector<8x2xf32> to vector<8xf32>
    %479 = vector.shape_cast %478 : vector<8xf32> to vector<8x1xf32>
    %480 = vector.broadcast %479 : vector<8x1xf32> to vector<8x2xf32>
    %481 = arith.subf %477, %480 : vector<8x2xf32>
    %482 = math.exp %481 : vector<8x2xf32>
    %cst_179 = arith.constant dense<0.000000e+00> : vector<8xf32>
    %483 = vector.multi_reduction <add>, %482, %cst_179 [1] : vector<8x2xf32> to vector<8xf32>
    %484 = vector.shape_cast %483 : vector<8xf32> to vector<8x1xf32>
    %485 = tpu.reciprocal %484 {approx = true} : vector<8x1xf32> -> vector<8x1xf32>
    %486 = vector.broadcast %485 : vector<8x1xf32> to vector<8x2xf32>
    %487 = arith.mulf %482, %486 : vector<8x2xf32>
    %c1_180 = arith.constant 1 : index
    %c1_181 = arith.constant 1 : index
    %c0_182 = arith.constant 0 : index
    %c0_183 = arith.constant 0 : index
    %488 = vector.load %arg18[%c1_180, %c1_181, %c0_182, %c0_183] : memref<2x2x8x2xf32, #tpu.memory_space<vmem>>, vector<1x1x8x2xf32>
    %489 = vector.shape_cast %488 : vector<1x1x8x2xf32> to vector<8x2xf32>
    %490 = vector.shape_cast %487 : vector<8x2xf32> to vector<1x1x8x2xf32>
    tpu.vector_store %arg18[%c1_180, %c1_181, %c0_182, %c0_183], %490 {strides = array<i32>} : memref<2x2x8x2xf32, #tpu.memory_space<vmem>>, vector<1x1x8x2xf32>,
    %cst_184 = arith.constant dense<0.000000e+00> : vector<8x8xf32>
    %491 = tpu.matmul %487, %474, %cst_184 {dimension_numbers = #tpu.dot_dimension_numbers<[1], [0], [0], [1], [0, 0, 1, 1], [], []>} : vector<8x2xf32>, vector<2x8xf32>, vector<8x8xf32> -> vector<8x8xf32>
    %492 = tpu.concatenate %471, %491 in 1 : vector<8x8xf32>, vector<8x8xf32> -> vector<8x16xf32>
    %cst_185 = arith.constant dense<0.000000e+00> : vector<8x16xf32>
    %493 = tpu.matmul %492, %356, %cst_185 {dimension_numbers = #tpu.dot_dimension_numbers<[1], [0], [0], [1], [0, 0, 1, 1], [], []>} : vector<8x16xf32>, vector<16x16xf32>, vector<8x16xf32> -> vector<8x16xf32>
    %494 = tpu.concatenate %493, %448 in 1 : vector<8x16xf32>, vector<8x32xf32> -> vector<8x48xf32>
    %cst_186 = arith.constant 0.000000e+00 : f32
    %495 = vector.broadcast %cst_186 : f32 to vector<8x48xf32>
    %496 = arith.maximumf %494, %495 : vector<8x48xf32>
    %497 = vector.extract_strided_slice %496 {offsets = [0, 0], sizes = [1, 48], strides = [1, 1]} : vector<8x48xf32> to vector<1x48xf32>
    %c0_187 = arith.constant 0 : index
    %c0_188 = arith.constant 0 : index
    %c0_189 = arith.constant 0 : index
    %498 = vector.load %arg15[%c0_187, %c0_188, %c0_189] : memref<8x48x4xf32, #tpu.memory_space<vmem>>, vector<1x48x4xf32>
    %499 = vector.shape_cast %498 : vector<1x48x4xf32> to vector<48x4xf32>
    %cst_190 = arith.constant dense<0.000000e+00> : vector<1x4xf32>
    %500 = tpu.matmul %497, %499, %cst_190 {dimension_numbers = #tpu.dot_dimension_numbers<[1], [0], [0], [1], [0, 0, 1, 1], [], []>} : vector<1x48xf32>, vector<48x4xf32>, vector<1x4xf32> -> vector<1x4xf32>
    %501 = arith.addf %357, %500 : vector<1x4xf32>
    %502 = vector.extract_strided_slice %496 {offsets = [1, 0], sizes = [1, 48], strides = [1, 1]} : vector<8x48xf32> to vector<1x48xf32>
    %c1_191 = arith.constant 1 : index
    %c0_192 = arith.constant 0 : index
    %c0_193 = arith.constant 0 : index
    %503 = vector.load %arg15[%c1_191, %c0_192, %c0_193] : memref<8x48x4xf32, #tpu.memory_space<vmem>>, vector<1x48x4xf32>
    %504 = vector.shape_cast %503 : vector<1x48x4xf32> to vector<48x4xf32>
    %cst_194 = arith.constant dense<0.000000e+00> : vector<1x4xf32>
    %505 = tpu.matmul %502, %504, %cst_194 {dimension_numbers = #tpu.dot_dimension_numbers<[1], [0], [0], [1], [0, 0, 1, 1], [], []>} : vector<1x48xf32>, vector<48x4xf32>, vector<1x4xf32> -> vector<1x4xf32>
    %506 = arith.addf %501, %505 : vector<1x4xf32>
    %507 = vector.extract_strided_slice %496 {offsets = [2, 0], sizes = [1, 48], strides = [1, 1]} : vector<8x48xf32> to vector<1x48xf32>
    %c2_195 = arith.constant 2 : index
    %c0_196 = arith.constant 0 : index
    %c0_197 = arith.constant 0 : index
    %508 = vector.load %arg15[%c2_195, %c0_196, %c0_197] : memref<8x48x4xf32, #tpu.memory_space<vmem>>, vector<1x48x4xf32>
    %509 = vector.shape_cast %508 : vector<1x48x4xf32> to vector<48x4xf32>
    %cst_198 = arith.constant dense<0.000000e+00> : vector<1x4xf32>
    %510 = tpu.matmul %507, %509, %cst_198 {dimension_numbers = #tpu.dot_dimension_numbers<[1], [0], [0], [1], [0, 0, 1, 1], [], []>} : vector<1x48xf32>, vector<48x4xf32>, vector<1x4xf32> -> vector<1x4xf32>
    %511 = arith.addf %506, %510 : vector<1x4xf32>
    %512 = vector.extract_strided_slice %496 {offsets = [3, 0], sizes = [1, 48], strides = [1, 1]} : vector<8x48xf32> to vector<1x48xf32>
    %c3_199 = arith.constant 3 : index
    %c0_200 = arith.constant 0 : index
    %c0_201 = arith.constant 0 : index
    %513 = vector.load %arg15[%c3_199, %c0_200, %c0_201] : memref<8x48x4xf32, #tpu.memory_space<vmem>>, vector<1x48x4xf32>
    %514 = vector.shape_cast %513 : vector<1x48x4xf32> to vector<48x4xf32>
    %cst_202 = arith.constant dense<0.000000e+00> : vector<1x4xf32>
    %515 = tpu.matmul %512, %514, %cst_202 {dimension_numbers = #tpu.dot_dimension_numbers<[1], [0], [0], [1], [0, 0, 1, 1], [], []>} : vector<1x48xf32>, vector<48x4xf32>, vector<1x4xf32> -> vector<1x4xf32>
    %516 = arith.addf %511, %515 : vector<1x4xf32>
    %517 = vector.extract_strided_slice %496 {offsets = [4, 0], sizes = [1, 48], strides = [1, 1]} : vector<8x48xf32> to vector<1x48xf32>
    %c4_203 = arith.constant 4 : index
    %c0_204 = arith.constant 0 : index
    %c0_205 = arith.constant 0 : index
    %518 = vector.load %arg15[%c4_203, %c0_204, %c0_205] : memref<8x48x4xf32, #tpu.memory_space<vmem>>, vector<1x48x4xf32>
    %519 = vector.shape_cast %518 : vector<1x48x4xf32> to vector<48x4xf32>
    %cst_206 = arith.constant dense<0.000000e+00> : vector<1x4xf32>
    %520 = tpu.matmul %517, %519, %cst_206 {dimension_numbers = #tpu.dot_dimension_numbers<[1], [0], [0], [1], [0, 0, 1, 1], [], []>} : vector<1x48xf32>, vector<48x4xf32>, vector<1x4xf32> -> vector<1x4xf32>
    %521 = arith.addf %516, %520 : vector<1x4xf32>
    %522 = vector.extract_strided_slice %496 {offsets = [5, 0], sizes = [1, 48], strides = [1, 1]} : vector<8x48xf32> to vector<1x48xf32>
    %c5_207 = arith.constant 5 : index
    %c0_208 = arith.constant 0 : index
    %c0_209 = arith.constant 0 : index
    %523 = vector.load %arg15[%c5_207, %c0_208, %c0_209] : memref<8x48x4xf32, #tpu.memory_space<vmem>>, vector<1x48x4xf32>
    %524 = vector.shape_cast %523 : vector<1x48x4xf32> to vector<48x4xf32>
    %cst_210 = arith.constant dense<0.000000e+00> : vector<1x4xf32>
    %525 = tpu.matmul %522, %524, %cst_210 {dimension_numbers = #tpu.dot_dimension_numbers<[1], [0], [0], [1], [0, 0, 1, 1], [], []>} : vector<1x48xf32>, vector<48x4xf32>, vector<1x4xf32> -> vector<1x4xf32>
    %526 = arith.addf %521, %525 : vector<1x4xf32>
    %527 = vector.extract_strided_slice %496 {offsets = [6, 0], sizes = [1, 48], strides = [1, 1]} : vector<8x48xf32> to vector<1x48xf32>
    %c6_211 = arith.constant 6 : index
    %c0_212 = arith.constant 0 : index
    %c0_213 = arith.constant 0 : index
    %528 = vector.load %arg15[%c6_211, %c0_212, %c0_213] : memref<8x48x4xf32, #tpu.memory_space<vmem>>, vector<1x48x4xf32>
    %529 = vector.shape_cast %528 : vector<1x48x4xf32> to vector<48x4xf32>
    %cst_214 = arith.constant dense<0.000000e+00> : vector<1x4xf32>
    %530 = tpu.matmul %527, %529, %cst_214 {dimension_numbers = #tpu.dot_dimension_numbers<[1], [0], [0], [1], [0, 0, 1, 1], [], []>} : vector<1x48xf32>, vector<48x4xf32>, vector<1x4xf32> -> vector<1x4xf32>
    %531 = arith.addf %526, %530 : vector<1x4xf32>
    %532 = vector.extract_strided_slice %496 {offsets = [7, 0], sizes = [1, 48], strides = [1, 1]} : vector<8x48xf32> to vector<1x48xf32>
    %c7_215 = arith.constant 7 : index
    %c0_216 = arith.constant 0 : index
    %c0_217 = arith.constant 0 : index
    %533 = vector.load %arg15[%c7_215, %c0_216, %c0_217] : memref<8x48x4xf32, #tpu.memory_space<vmem>>, vector<1x48x4xf32>
    %534 = vector.shape_cast %533 : vector<1x48x4xf32> to vector<48x4xf32>
    %cst_218 = arith.constant dense<0.000000e+00> : vector<1x4xf32>
    %535 = tpu.matmul %532, %534, %cst_218 {dimension_numbers = #tpu.dot_dimension_numbers<[1], [0], [0], [1], [0, 0, 1, 1], [], []>} : vector<1x48xf32>, vector<48x4xf32>, vector<1x4xf32> -> vector<1x4xf32>
    %536 = arith.addf %531, %535 : vector<1x4xf32>
    %c1_219 = arith.constant 1 : index
    %c0_220 = arith.constant 0 : index
    %537 = vector.load %arg17[%c1_219, %c0_220] : memref<2x4xf32, #tpu.memory_space<vmem>>, vector<1x4xf32>
    tpu.vector_store %arg17[%c1_219, %c0_220], %536 {strides = array<i32>} : memref<2x4xf32, #tpu.memory_space<vmem>>, vector<1x4xf32>,
    return
  }
  func.func @transform_0(%arg0: i32) -> (i32, i32) {
    %c0_i32 = arith.constant 0 : i32
    %c0_i32_0 = arith.constant 0 : i32
    %c0_i32_1 = arith.constant 0 : i32
    return %c0_i32, %c0_i32_0 : i32, i32
  }
  func.func @transform_1(%arg0: i32) -> (i32, i32, i32) {
    %c0_i32 = arith.constant 0 : i32
    %c0_i32_0 = arith.constant 0 : i32
    %c0_i32_1 = arith.constant 0 : i32
    %c0_i32_2 = arith.constant 0 : i32
    return %c0_i32, %c0_i32_0, %c0_i32_1 : i32, i32, i32
  }
  func.func @transform_2(%arg0: i32) -> (i32, i32, i32) {
    %c0_i32 = arith.constant 0 : i32
    %c0_i32_0 = arith.constant 0 : i32
    %c0_i32_1 = arith.constant 0 : i32
    %c0_i32_2 = arith.constant 0 : i32
    return %c0_i32, %c0_i32_0, %c0_i32_1 : i32, i32, i32
  }
  func.func @transform_3(%arg0: i32) -> (i32, i32) {
    %c0_i32 = arith.constant 0 : i32
    %c0_i32_0 = arith.constant 0 : i32
    %c0_i32_1 = arith.constant 0 : i32
    return %c0_i32, %c0_i32_0 : i32, i32
  }
  func.func @transform_4(%arg0: i32) -> (i32, i32) {
    %c0_i32 = arith.constant 0 : i32
    %c0_i32_0 = arith.constant 0 : i32
    %c0_i32_1 = arith.constant 0 : i32
    return %c0_i32, %c0_i32_0 : i32, i32
  }
  func.func @transform_5(%arg0: i32) -> (i32, i32) {
    %c0_i32 = arith.constant 0 : i32
    %c0_i32_0 = arith.constant 0 : i32
    %c0_i32_1 = arith.constant 0 : i32
    return %c0_i32, %c0_i32_0 : i32, i32
  }
  func.func @transform_6(%arg0: i32) -> (i32, i32) {
    %c0_i32 = arith.constant 0 : i32
    %c0_i32_0 = arith.constant 0 : i32
    %c0_i32_1 = arith.constant 0 : i32
    return %c0_i32, %c0_i32_0 : i32, i32
  }
  func.func @transform_7(%arg0: i32) -> (i32, i32) {
    %c0_i32 = arith.constant 0 : i32
    %c0_i32_0 = arith.constant 0 : i32
    %c0_i32_1 = arith.constant 0 : i32
    return %c0_i32, %c0_i32_0 : i32, i32
  }
  func.func @transform_8(%arg0: i32) -> (i32, i32) {
    %c0_i32 = arith.constant 0 : i32
    %c0_i32_0 = arith.constant 0 : i32
    %c0_i32_1 = arith.constant 0 : i32
    return %c0_i32, %c0_i32_0 : i32, i32
  }
  func.func @transform_9(%arg0: i32) -> (i32, i32) {
    %c0_i32 = arith.constant 0 : i32
    %c0_i32_0 = arith.constant 0 : i32
    %c0_i32_1 = arith.constant 0 : i32
    return %c0_i32, %c0_i32_0 : i32, i32
  }
  func.func @transform_10(%arg0: i32) -> (i32, i32) {
    %c0_i32 = arith.constant 0 : i32
    %c0_i32_0 = arith.constant 0 : i32
    %c0_i32_1 = arith.constant 0 : i32
    return %c0_i32, %c0_i32_0 : i32, i32
  }
  func.func @transform_11(%arg0: i32) -> (i32, i32) {
    %c0_i32 = arith.constant 0 : i32
    %c0_i32_0 = arith.constant 0 : i32
    %c0_i32_1 = arith.constant 0 : i32
    return %c0_i32, %c0_i32_0 : i32, i32
  }
  func.func @transform_12(%arg0: i32) -> (i32, i32) {
    %c0_i32 = arith.constant 0 : i32
    %c0_i32_0 = arith.constant 0 : i32
    %c0_i32_1 = arith.constant 0 : i32
    return %c0_i32, %c0_i32_0 : i32, i32
  }
  func.func @transform_13(%arg0: i32) -> (i32, i32) {
    %c0_i32 = arith.constant 0 : i32
    %c0_i32_0 = arith.constant 0 : i32
    %c0_i32_1 = arith.constant 0 : i32
    return %c0_i32, %c0_i32_0 : i32, i32
  }
  func.func @transform_14(%arg0: i32) -> (i32, i32, i32) {
    %c0_i32 = arith.constant 0 : i32
    %c0_i32_0 = arith.constant 0 : i32
    %c0_i32_1 = arith.constant 0 : i32
    %c0_i32_2 = arith.constant 0 : i32
    return %c0_i32, %c0_i32_0, %c0_i32_1 : i32, i32, i32
  }
  func.func @transform_15(%arg0: i32) -> (i32, i32) {
    %c0_i32 = arith.constant 0 : i32
    %c0_i32_0 = arith.constant 0 : i32
    %c0_i32_1 = arith.constant 0 : i32
    return %c0_i32, %c0_i32_0 : i32, i32
  }
  func.func @transform_16(%arg0: i32) -> (i32, i32) {
    %c0_i32 = arith.constant 0 : i32
    %c0_i32_0 = arith.constant 0 : i32
    %c0_i32_1 = arith.constant 0 : i32
    return %c0_i32, %c0_i32_0 : i32, i32
  }
  func.func @transform_17(%arg0: i32) -> (i32, i32, i32, i32) {
    %c0_i32 = arith.constant 0 : i32
    %c0_i32_0 = arith.constant 0 : i32
    %c0_i32_1 = arith.constant 0 : i32
    %c0_i32_2 = arith.constant 0 : i32
    %c0_i32_3 = arith.constant 0 : i32
    return %c0_i32, %c0_i32_0, %c0_i32_1, %c0_i32_2 : i32, i32, i32, i32
  }
}

</mosaic_0001>

<llo_original>
// kernel: lstm_dec_forward.1
$region0: #{lstm_dec_forward.1}
  #allocation0 [shape = 'u32[]', space=smem, size = 0x4, offset = 0x4, fixed_abs, tag = 'smem constant byte address 0x4 - core index']
  #allocation1 [shape = 'u32[144,128]{1,0:T(1,128)}', space=vmem, size = 0x12000, scoped, tag = 'internal scratch']
  #allocation2 [shape = 'f32[16,32]{1,0:T(8,128)}', space=vmem, size = 0x2000, scoped, tag = 'scratch operand']
  #allocation3 [shape = 'f32[16,32]{1,0:T(8,128)}', space=vmem, size = 0x2000, scoped, tag = 'scratch operand']
  %s0 = inlined_call_operand.vmem [shape: f32[16,8], index: 0, kind: input, shape index: {}]
  %s1 = inlined_call_operand.vmem [shape: f32[2,2,32], index: 1, kind: input, shape index: {}]
  %s2 = inlined_call_operand.vmem [shape: f32[2,2,32], index: 2, kind: input, shape index: {}]
  %s3 = inlined_call_operand.vmem [shape: f32[4,32], index: 3, kind: input, shape index: {}]
  %s4 = inlined_call_operand.vmem [shape: f32[8,128], index: 4, kind: input, shape index: {}]
  %s5 = inlined_call_operand.vmem [shape: f32[32,128], index: 5, kind: input, shape index: {}]
  %s6 = inlined_call_operand.vmem [shape: f32[1,128], index: 6, kind: input, shape index: {}]
  %s7 = inlined_call_operand.vmem [shape: f32[32,128], index: 7, kind: input, shape index: {}]
  %s8 = inlined_call_operand.vmem [shape: f32[32,128], index: 8, kind: input, shape index: {}]
  %s9 = inlined_call_operand.vmem [shape: f32[1,128], index: 9, kind: input, shape index: {}]
  %s10 = inlined_call_operand.vmem [shape: f32[32,16], index: 10, kind: input, shape index: {}]
  %s11 = inlined_call_operand.vmem [shape: f32[32,16], index: 11, kind: input, shape index: {}]
  %s12 = inlined_call_operand.vmem [shape: f32[32,16], index: 12, kind: input, shape index: {}]
  %s13 = inlined_call_operand.vmem [shape: f32[16,16], index: 13, kind: input, shape index: {}]
  %s14 = inlined_call_operand.vmem [shape: f32[8,48,4], index: 14, kind: input, shape index: {}]
  %s15 = inlined_call_operand.vmem [shape: f32[1,4], index: 15, kind: input, shape index: {}]
  %s16 = inlined_call_operand.hbm [shape: f32[2,4], index: 16, kind: output, shape index: {0}]
  %s17 = inlined_call_operand.vmem [shape: f32[2,2,8,2], index: 17, kind: output, shape index: {1}]
  %18 = xla_tuple %s16, %s17
  %s19 = sld [smem:[#allocation0]]
  $region82: #{lstm_dec_forward.1} parent=0
    _
  %s21 = ssub.s32 1, %s19
  %s22 = scalar_select 0, %s21, %s19
  $region1: #{lstm_dec_forward.1} parent=0
    #allocation4 [shape = 'u8[1024]{0}', space=vmem, size = 0x400, scoped, tag = 'output window, operand 0, single buffered']
    #allocation5 [shape = 's32[1]{0}', space=sflag, size = 0x4, scoped, tag = 'scoped memory for lstm_dec_forward.1']
    %23 = vsyncpa [#allocation5], 0
    // Predicated region
    $region2: #{lstm_dec_forward.1} parent=1 // pred_check
      _
    $region3: #{lstm_dec_forward.1} parent=1 // pred_check_branch
      %25 = sbr.rel (0) target = $region5
    $region4: #{lstm_dec_forward.1} parent=1 // pred_region
      _
    $region5: #{lstm_dec_forward.1} parent=1 // pred_fallthru
      _
    // Predicated region
    $region6: #{lstm_dec_forward.1} parent=1 // pred_check
      _
    $region7: #{lstm_dec_forward.1} parent=1 // pred_check_branch
      %27 = sbr.rel (0) target = $region9
    $region8: #{lstm_dec_forward.1} parent=1 // pred_region
      _
    $region9: #{lstm_dec_forward.1} parent=1 // pred_fallthru
      _
    // Predicated region
    $region10: #{lstm_dec_forward.1} parent=1 // pred_check
      _
    $region11: #{lstm_dec_forward.1} parent=1 // pred_check_branch
      %29 = sbr.rel (0) target = $region13
    $region12: #{lstm_dec_forward.1} parent=1 // pred_region
      _
    $region13: #{lstm_dec_forward.1} parent=1 // pred_fallthru
      _
    // Predicated region
    $region14: #{lstm_dec_forward.1} parent=1 // pred_check
      _
    $region15: #{lstm_dec_forward.1} parent=1 // pred_check_branch
      %31 = sbr.rel (0) target = $region17
    $region16: #{lstm_dec_forward.1} parent=1 // pred_region
      _
    $region17: #{lstm_dec_forward.1} parent=1 // pred_fallthru
      _
    // Predicated region
    $region18: #{lstm_dec_forward.1} parent=1 // pred_check
      _
    $region19: #{lstm_dec_forward.1} parent=1 // pred_check_branch
      %33 = sbr.rel (0) target = $region21
    $region20: #{lstm_dec_forward.1} parent=1 // pred_region
      _
    $region21: #{lstm_dec_forward.1} parent=1 // pred_fallthru
      _
    // Predicated region
    $region22: #{lstm_dec_forward.1} parent=1 // pred_check
      _
    $region23: #{lstm_dec_forward.1} parent=1 // pred_check_branch
      %35 = sbr.rel (0) target = $region25
    $region24: #{lstm_dec_forward.1} parent=1 // pred_region
      _
    $region25: #{lstm_dec_forward.1} parent=1 // pred_fallthru
      _
    // Predicated region
    $region26: #{lstm_dec_forward.1} parent=1 // pred_check
      _
    $region27: #{lstm_dec_forward.1} parent=1 // pred_check_branch
      %37 = sbr.rel (0) target = $region29
    $region28: #{lstm_dec_forward.1} parent=1 // pred_region
      _
    $region29: #{lstm_dec_forward.1} parent=1 // pred_fallthru
      _
    // Predicated region
    $region30: #{lstm_dec_forward.1} parent=1 // pred_check
      _
    $region31: #{lstm_dec_forward.1} parent=1 // pred_check_branch
      %39 = sbr.rel (0) target = $region33
    $region32: #{lstm_dec_forward.1} parent=1 // pred_region
      _
    $region33: #{lstm_dec_forward.1} parent=1 // pred_fallthru
      _
    // Predicated region
    $region34: #{lstm_dec_forward.1} parent=1 // pred_check
      _
    $region35: #{lstm_dec_forward.1} parent=1 // pred_check_branch
      %41 = sbr.rel (0) target = $region37
    $region36: #{lstm_dec_forward.1} parent=1 // pred_region
      _
    $region37: #{lstm_dec_forward.1} parent=1 // pred_fallthru
      _
    // Predicated region
    $region38: #{lstm_dec_forward.1} parent=1 // pred_check
      _
    $region39: #{lstm_dec_forward.1} parent=1 // pred_check_branch
      %43 = sbr.rel (0) target = $region41
    $region40: #{lstm_dec_forward.1} parent=1 // pred_region
      _
    $region41: #{lstm_dec_forward.1} parent=1 // pred_fallthru
      _
    // Predicated region
    $region42: #{lstm_dec_forward.1} parent=1 // pred_check
      _
    $region43: #{lstm_dec_forward.1} parent=1 // pred_check_branch
      %45 = sbr.rel (0) target = $region45
    $region44: #{lstm_dec_forward.1} parent=1 // pred_region
      _
    $region45: #{lstm_dec_forward.1} parent=1 // pred_fallthru
      _
    // Predicated region
    $region46: #{lstm_dec_forward.1} parent=1 // pred_check
      _
    $region47: #{lstm_dec_forward.1} parent=1 // pred_check_branch
      %47 = sbr.rel (0) target = $region49
    $region48: #{lstm_dec_forward.1} parent=1 // pred_region
      _
    $region49: #{lstm_dec_forward.1} parent=1 // pred_fallthru
      _
    // Predicated region
    $region50: #{lstm_dec_forward.1} parent=1 // pred_check
      _
    $region51: #{lstm_dec_forward.1} parent=1 // pred_check_branch
      %49 = sbr.rel (0) target = $region53
    $region52: #{lstm_dec_forward.1} parent=1 // pred_region
      _
    $region53: #{lstm_dec_forward.1} parent=1 // pred_fallthru
      _
    // Predicated region
    $region54: #{lstm_dec_forward.1} parent=1 // pred_check
      _
    $region55: #{lstm_dec_forward.1} parent=1 // pred_check_branch
      %51 = sbr.rel (0) target = $region57
    $region56: #{lstm_dec_forward.1} parent=1 // pred_region
      _
    $region57: #{lstm_dec_forward.1} parent=1 // pred_fallthru
      _
    // Predicated region
    $region58: #{lstm_dec_forward.1} parent=1 // pred_check
      _
    $region59: #{lstm_dec_forward.1} parent=1 // pred_check_branch
      %53 = sbr.rel (0) target = $region61
    $region60: #{lstm_dec_forward.1} parent=1 // pred_region
      _
    $region61: #{lstm_dec_forward.1} parent=1 // pred_fallthru
      _
    // Predicated region
    $region62: #{lstm_dec_forward.1} parent=1 // pred_check
      _
    $region63: #{lstm_dec_forward.1} parent=1 // pred_check_branch
      %55 = sbr.rel (0) target = $region65
    $region64: #{lstm_dec_forward.1} parent=1 // pred_region
      _
    $region65: #{lstm_dec_forward.1} parent=1 // pred_fallthru
      _
    %v56 = vld [vmem:[%s0] sm:$0xff]
    %v57 = vld [vmem:[%s0 + $0x8] sm:$0xff]
    %v58 = vld [vmem:[%s4] sm:$0xff]
    %v59 = vld [vmem:[%s5] sm:$0xff]
    %v60 = vld [vmem:[%s5 + $0x8] sm:$0xff]
    %v61 = vld [vmem:[%s5 + $0x10] sm:$0xff]
    %v62 = vld [vmem:[%s5 + $0x18] sm:$0xff]
    %v63 = vld [vmem:[%s6] sm:$0x1]
    %v64 = vld [vmem:[%s1] sm:$0x3]
    %v65 = vld [vmem:[%s2] sm:$0x3]
    %v67 = vlaneseq
    %v68 = vshrl.u32 %v67, 7
    %v69 = vsub.s32 0, %v68
    %v70 = vrot.slane %v63, %v69
    %vm72 = vcmask 64512
    %v74 = vsel %vm72, %v56, 0
    %v77 = vsel %vm72, %v57, 0
    %79 = vmatprep.subr.mxu0 0.0
    %80 = vmatpush1.msra.mxu0 %v58
    %81 = vmatprep.subr.mxu0 0.0
    %82 = vmatpush1.msra.mxu0 0.0
    %83 = vmatprep.subr.mxu0 0.0
    %84 = vmatpush1.msra.mxu0 0.0
    %85 = vmatprep.subr.mxu0 0.0
    %86 = vmatpush1.msra.mxu0 0.0
    %87 = vmatprep.subr.mxu0 0.0
    %88 = vmatpush1.msra.mxu0 0.0
    %89 = vmatprep.subr.mxu0 0.0
    %90 = vmatpush1.msra.mxu0 0.0
    %91 = vmatprep.subr.mxu0 0.0
    %92 = vmatpush1.msra.mxu0 0.0
    %93 = vmatprep.subr.mxu0 0.0
    %94 = vmatpush1.msra.mxu0 0.0
    %95 = vmatprep.subr.mxu0 0.0
    %96 = vmatpush1.msra.mxu0 0.0
    %97 = vmatprep.subr.mxu0 0.0
    %98 = vmatpush1.msra.mxu0 0.0
    %99 = vmatprep.subr.mxu0 0.0
    %100 = vmatpush1.msra.mxu0 0.0
    %101 = vmatprep.subr.mxu0 0.0
    %102 = vmatpush1.msra.mxu0 0.0
    %103 = vmatprep.subr.mxu0 0.0
    %104 = vmatpush1.msra.mxu0 0.0
    %105 = vmatprep.subr.mxu0 0.0
    %106 = vmatpush1.msra.mxu0 0.0
    %107 = vmatprep.subr.mxu0 0.0
    %108 = vmatpush1.msra.mxu0 0.0
    %109 = vmatprep.subr.mxu0 0.0
    %110 = vmatpush1.msra.mxu0 0.0
    %111 = vmatprep.subr.mxu0 0.0
    %112 = vmatpush1.msra.mxu0 0.0
    %113 = vmatprep.subr.mxu0 0.0
    %114 = vmatpush1.msra.mxu0 0.0
    %115 = vmatprep.subr.mxu0 0.0
    %116 = vmatpush1.msra.mxu0 0.0
    %117 = vmatprep.subr.mxu0 0.0
    %118 = vmatpush1.msra.mxu0 0.0
    %119 = vmatprep.subr.mxu0 0.0
    %120 = vmatpush1.msra.mxu0 0.0
    %121 = vmatprep.subr.mxu0 0.0
    %122 = vmatpush1.msra.mxu0 0.0
    %123 = vmatprep.subr.mxu0 0.0
    %124 = vmatpush1.msra.mxu0 0.0
    %125 = vmatprep.subr.mxu0 0.0
    %126 = vmatpush1.msra.mxu0 0.0
    %127 = vmatprep.subr.mxu0 0.0
    %128 = vmatpush1.msra.mxu0 0.0
    %129 = vmatprep.subr.mxu0 0.0
    %130 = vmatpush1.msra.mxu0 0.0
    %131 = vmatprep.subr.mxu0 0.0
    %132 = vmatpush1.msra.mxu0 0.0
    %133 = vmatprep.subr.mxu0 0.0
    %134 = vmatpush1.msra.mxu0 0.0
    %135 = vmatprep.subr.mxu0 0.0
    %136 = vmatpush1.msra.mxu0 0.0
    %137 = vmatprep.subr.mxu0 0.0
    %138 = vmatpush1.msra.mxu0 0.0
    %139 = vmatprep.subr.mxu0 0.0
    %140 = vmatpush1.msra.mxu0 0.0
    %141 = vmatprep.subr.mxu0 0.0
    %142 = vmatpush1.msra.mxu0 0.0
    %143 = vmatprep.mubr.f32.mxu0 0.0
    %144 = vmatmul.mubr.f32.gmra.mrb[0].mxu0 %v74
    %v145 = vpop.f32.mrb[0].mxu0
    %v146 = vadd.f32 %v70, %v145
    %v147 = vpop.f32.mrb[0].mxu0
    %148 = vmatprep.mubr.f32.mxu0 0.0
    %149 = vmatmul.mubr.f32.gmra.mrb[0].mxu0 %v77
    %v150 = vpop.f32.mrb[0].mxu0
    %v151 = vadd.f32 %v70, %v150
    %v152 = vpop.f32.mrb[0].mxu0
    %153 = vdwg.mxu0
    %vm154 = vcmask 261120
    %v156 = vsel %vm154, %v64, 0
    %158 = vmatprep.subr.mxu0 0.0
    %159 = vmatpush1.msra.mxu0 %v59
    %160 = vmatprep.subr.mxu0 0.0
    %161 = vmatpush1.msra.mxu0 %v60
    %162 = vmatprep.subr.mxu0 0.0
    %163 = vmatpush1.msra.mxu0 %v61
    %164 = vmatprep.subr.mxu0 0.0
    %165 = vmatpush1.msra.mxu0 %v62
    %166 = vmatprep.subr.mxu0 0.0
    %167 = vmatpush1.msra.mxu0 0.0
    %168 = vmatprep.subr.mxu0 0.0
    %169 = vmatpush1.msra.mxu0 0.0
    %170 = vmatprep.subr.mxu0 0.0
    %171 = vmatpush1.msra.mxu0 0.0
    %172 = vmatprep.subr.mxu0 0.0
    %173 = vmatpush1.msra.mxu0 0.0
    %174 = vmatprep.subr.mxu0 0.0
    %175 = vmatpush1.msra.mxu0 0.0
    %176 = vmatprep.subr.mxu0 0.0
    %177 = vmatpush1.msra.mxu0 0.0
    %178 = vmatprep.subr.mxu0 0.0
    %179 = vmatpush1.msra.mxu0 0.0
    %180 = vmatprep.subr.mxu0 0.0
    %181 = vmatpush1.msra.mxu0 0.0
    %182 = vmatprep.subr.mxu0 0.0
    %183 = vmatpush1.msra.mxu0 0.0
    %184 = vmatprep.subr.mxu0 0.0
    %185 = vmatpush1.msra.mxu0 0.0
    %186 = vmatprep.subr.mxu0 0.0
    %187 = vmatpush1.msra.mxu0 0.0
    %188 = vmatprep.subr.mxu0 0.0
    %189 = vmatpush1.msra.mxu0 0.0
    %190 = vmatprep.subr.mxu0 0.0
    %191 = vmatpush1.msra.mxu0 0.0
    %192 = vmatprep.subr.mxu0 0.0
    %193 = vmatpush1.msra.mxu0 0.0
    %194 = vmatprep.subr.mxu0 0.0
    %195 = vmatpush1.msra.mxu0 0.0
    %196 = vmatprep.subr.mxu0 0.0
    %197 = vmatpush1.msra.mxu0 0.0
    %198 = vmatprep.subr.mxu0 0.0
    %199 = vmatpush1.msra.mxu0 0.0
    %200 = vmatprep.subr.mxu0 0.0
    %201 = vmatpush1.msra.mxu0 0.0
    %202 = vmatprep.subr.mxu0 0.0
    %203 = vmatpush1.msra.mxu0 0.0
    %204 = vmatprep.subr.mxu0 0.0
    %205 = vmatpush1.msra.mxu0 0.0
    %206 = vmatprep.subr.mxu0 0.0
    %207 = vmatpush1.msra.mxu0 0.0
    %208 = vmatprep.subr.mxu0 0.0
    %209 = vmatpush1.msra.mxu0 0.0
    %210 = vmatprep.subr.mxu0 0.0
    %211 = vmatpush1.msra.mxu0 0.0
    %212 = vmatprep.subr.mxu0 0.0
    %213 = vmatpush1.msra.mxu0 0.0
    %214 = vmatprep.subr.mxu0 0.0
    %215 = vmatpush1.msra.mxu0 0.0
    %216 = vmatprep.subr.mxu0 0.0
    %217 = vmatpush1.msra.mxu0 0.0
    %218 = vmatprep.subr.mxu0 0.0
    %219 = vmatpush1.msra.mxu0 0.0
    %220 = vmatprep.subr.mxu0 0.0
    %221 = vmatpush1.msra.mxu0 0.0
    %222 = vmatprep.mubr.f32.mxu0 0.0
    %223 = vmatmul.mubr.f32.gmra.mrb[0].mxu0 %v156
    %v224 = vpop.f32.mrb[0].mxu0
    %v225 = vadd.f32 0.0, %v224
    %v226 = vpop.f32.mrb[0].mxu0
    %227 = vdwg.mxu0
    %v228 = vadd.f32 %v146, %v225
    %v229 = vxor.u32 %v228, 2147483648
    %v230 = vmul.f32 %v229, 1.442695
    %v231 = vpow.pop %v230
    %v232 = vadd.f32 %v231, 1.0
    %v233 = vrcp.pop %v232
    %v234 = vmul.f32 1.0, %v233
    %v235 = vtanh.pop %v228
    %237 = vrot.lane.b32.xlu0 %v65, 32
    %v238 = vpop.permute.xlu0 %237
    %v240 = vmul.f32 %v234, %v238
    %242 = vrot.lane.b32.xlu0 %v235, 64
    %v243 = vpop.permute.xlu0 %242
    %v245 = vmul.f32 %v234, %v243
    %247 = vrot.lane.b32.xlu0 %v245, 32
    %v248 = vpop.permute.xlu0 %247
    %v250 = vadd.f32 %v240, %v248
    %v251 = vtanh.pop %v250
    %253 = vrot.lane.b32.xlu0 %v251, 64
    %v254 = vpop.permute.xlu0 %253
    %v256 = vmul.f32 %v234, %v254
    %258 = vrot.lane.b32.xlu0 %v256, 32
    %v259 = vpop.permute.xlu0 %258
    %vm261 = vcmask 254976
    %262 = vst.msk [vmem:[#allocation2] sm:$0x3] %vm261, %v259
    %v263 = vsel %vm154, %v259, 0
    %265 = vmatprep.subr.mxu0 0.0
    %266 = vmatpush1.msra.mxu0 %v59
    %267 = vmatprep.subr.mxu0 0.0
    %268 = vmatpush1.msra.mxu0 %v60
    %269 = vmatprep.subr.mxu0 0.0
    %270 = vmatpush1.msra.mxu0 %v61
    %271 = vmatprep.subr.mxu0 0.0
    %272 = vmatpush1.msra.mxu0 %v62
    %273 = vmatprep.subr.mxu0 0.0
    %274 = vmatpush1.msra.mxu0 0.0
    %275 = vmatprep.subr.mxu0 0.0
    %276 = vmatpush1.msra.mxu0 0.0
    %277 = vmatprep.subr.mxu0 0.0
    %278 = vmatpush1.msra.mxu0 0.0
    %279 = vmatprep.subr.mxu0 0.0
    %280 = vmatpush1.msra.mxu0 0.0
    %281 = vmatprep.subr.mxu0 0.0
    %282 = vmatpush1.msra.mxu0 0.0
    %283 = vmatprep.subr.mxu0 0.0
    %284 = vmatpush1.msra.mxu0 0.0
    %285 = vmatprep.subr.mxu0 0.0
    %286 = vmatpush1.msra.mxu0 0.0
    %287 = vmatprep.subr.mxu0 0.0
    %288 = vmatpush1.msra.mxu0 0.0
    %289 = vmatprep.subr.mxu0 0.0
    %290 = vmatpush1.msra.mxu0 0.0
    %291 = vmatprep.subr.mxu0 0.0
    %292 = vmatpush1.msra.mxu0 0.0
    %293 = vmatprep.subr.mxu0 0.0
    %294 = vmatpush1.msra.mxu0 0.0
    %295 = vmatprep.subr.mxu0 0.0
    %296 = vmatpush1.msra.mxu0 0.0
    %297 = vmatprep.subr.mxu0 0.0
    %298 = vmatpush1.msra.mxu0 0.0
    %299 = vmatprep.subr.mxu0 0.0
    %300 = vmatpush1.msra.mxu0 0.0
    %301 = vmatprep.subr.mxu0 0.0
    %302 = vmatpush1.msra.mxu0 0.0
    %303 = vmatprep.subr.mxu0 0.0
    %304 = vmatpush1.msra.mxu0 0.0
    %305 = vmatprep.subr.mxu0 0.0
    %306 = vmatpush1.msra.mxu0 0.0
    %307 = vmatprep.subr.mxu0 0.0
    %308 = vmatpush1.msra.mxu0 0.0
    %309 = vmatprep.subr.mxu0 0.0
    %310 = vmatpush1.msra.mxu0 0.0
    %311 = vmatprep.subr.mxu0 0.0
    %312 = vmatpush1.msra.mxu0 0.0
    %313 = vmatprep.subr.mxu0 0.0
    %314 = vmatpush1.msra.mxu0 0.0
    %315 = vmatprep.subr.mxu0 0.0
    %316 = vmatpush1.msra.mxu0 0.0
    %317 = vmatprep.subr.mxu0 0.0
    %318 = vmatpush1.msra.mxu0 0.0
    %319 = vmatprep.subr.mxu0 0.0
    %320 = vmatpush1.msra.mxu0 0.0
    %321 = vmatprep.subr.mxu0 0.0
    %322 = vmatpush1.msra.mxu0 0.0
    %323 = vmatprep.subr.mxu0 0.0
    %324 = vmatpush1.msra.mxu0 0.0
    %325 = vmatprep.subr.mxu0 0.0
    %326 = vmatpush1.msra.mxu0 0.0
    %327 = vmatprep.subr.mxu0 0.0
    %328 = vmatpush1.msra.mxu0 0.0
    %329 = vmatprep.mubr.f32.mxu0 0.0
    %330 = vmatmul.mubr.f32.gmra.mrb[0].mxu0 %v263
    %v331 = vpop.f32.mrb[0].mxu0
    %v332 = vadd.f32 0.0, %v331
    %v333 = vpop.f32.mrb[0].mxu0
    %334 = vdwg.mxu0
    %v336 = vrot.slane %v332, 6
    %v338 = vadd.f32 %v146, %v336
    %v339 = vxor.u32 %v338, 2147483648
    %v340 = vmul.f32 %v339, 1.442695
    %v341 = vpow.pop %v340
    %v342 = vadd.f32 %v341, 1.0
    %v343 = vrcp.pop %v342
    %v344 = vmul.f32 1.0, %v343
    %v345 = vtanh.pop %v338
    %v347 = vrot.slane %v250, 6
    %v349 = vmul.f32 %v344, %v347
    %351 = vrot.lane.b32.xlu0 %v345, 64
    %v352 = vpop.permute.xlu0 %351
    %v354 = vmul.f32 %v344, %v352
    %356 = vrot.lane.b32.xlu0 %v354, 32
    %v357 = vpop.permute.xlu0 %356
    %v359 = vadd.f32 %v349, %v357
    %v360 = vtanh.pop %v359
    %362 = vrot.lane.b32.xlu0 %v360, 64
    %v363 = vpop.permute.xlu0 %362
    %v365 = vmul.f32 %v344, %v363
    %367 = vrot.lane.b32.xlu0 %v365, 32
    %v368 = vpop.permute.xlu0 %367
    %vm370 = vcmask 257026
    %371 = vst.msk [vmem:[#allocation2] sm:$0xc] %vm370, %v368
    %v372 = vrot.slane %v365, 2
    %373 = vrot.lane.b32.xlu0 %v372, 32
    %v374 = vpop.permute.xlu0 %373
    %v375 = vsel %vm154, %v374, 0
    %377 = vmatprep.subr.mxu0 0.0
    %378 = vmatpush1.msra.mxu0 %v59
    %379 = vmatprep.subr.mxu0 0.0
    %380 = vmatpush1.msra.mxu0 %v60
    %381 = vmatprep.subr.mxu0 0.0
    %382 = vmatpush1.msra.mxu0 %v61
    %383 = vmatprep.subr.mxu0 0.0
    %384 = vmatpush1.msra.mxu0 %v62
    %385 = vmatprep.subr.mxu0 0.0
    %386 = vmatpush1.msra.mxu0 0.0
    %387 = vmatprep.subr.mxu0 0.0
    %388 = vmatpush1.msra.mxu0 0.0
    %389 = vmatprep.subr.mxu0 0.0
    %390 = vmatpush1.msra.mxu0 0.0
    %391 = vmatprep.subr.mxu0 0.0
    %392 = vmatpush1.msra.mxu0 0.0
    %393 = vmatprep.subr.mxu0 0.0
    %394 = vmatpush1.msra.mxu0 0.0
    %395 = vmatprep.subr.mxu0 0.0
    %396 = vmatpush1.msra.mxu0 0.0
    %397 = vmatprep.subr.mxu0 0.0
    %398 = vmatpush1.msra.mxu0 0.0
    %399 = vmatprep.subr.mxu0 0.0
    %400 = vmatpush1.msra.mxu0 0.0
    %401 = vmatprep.subr.mxu0 0.0
    %402 = vmatpush1.msra.mxu0 0.0
    %403 = vmatprep.subr.mxu0 0.0
    %404 = vmatpush1.msra.mxu0 0.0
    %405 = vmatprep.subr.mxu0 0.0
    %406 = vmatpush1.msra.mxu0 0.0
    %407 = vmatprep.subr.mxu0 0.0
    %408 = vmatpush1.msra.mxu0 0.0
    %409 = vmatprep.subr.mxu0 0.0
    %410 = vmatpush1.msra.mxu0 0.0
    %411 = vmatprep.subr.mxu0 0.0
    %412 = vmatpush1.msra.mxu0 0.0
    %413 = vmatprep.subr.mxu0 0.0
    %414 = vmatpush1.msra.mxu0 0.0
    %415 = vmatprep.subr.mxu0 0.0
    %416 = vmatpush1.msra.mxu0 0.0
    %417 = vmatprep.subr.mxu0 0.0
    %418 = vmatpush1.msra.mxu0 0.0
    %419 = vmatprep.subr.mxu0 0.0
    %420 = vmatpush1.msra.mxu0 0.0
    %421 = vmatprep.subr.mxu0 0.0
    %422 = vmatpush1.msra.mxu0 0.0
    %423 = vmatprep.subr.mxu0 0.0
    %424 = vmatpush1.msra.mxu0 0.0
    %425 = vmatprep.subr.mxu0 0.0
    %426 = vmatpush1.msra.mxu0 0.0
    %427 = vmatprep.subr.mxu0 0.0
    %428 = vmatpush1.msra.mxu0 0.0
    %429 = vmatprep.subr.mxu0 0.0
    %430 = vmatpush1.msra.mxu0 0.0
    %431 = vmatprep.subr.mxu0 0.0
    %432 = vmatpush1.msra.mxu0 0.0
    %433 = vmatprep.subr.mxu0 0.0
    %434 = vmatpush1.msra.mxu0 0.0
    %435 = vmatprep.subr.mxu0 0.0
    %436 = vmatpush1.msra.mxu0 0.0
    %437 = vmatprep.subr.mxu0 0.0
    %438 = vmatpush1.msra.mxu0 0.0
    %439 = vmatprep.subr.mxu0 0.0
    %440 = vmatpush1.msra.mxu0 0.0
    %441 = vmatprep.mubr.f32.mxu0 0.0
    %442 = vmatmul.mubr.f32.gmra.mrb[0].mxu0 %v375
    %v443 = vpop.f32.mrb[0].mxu0
    %v444 = vadd.f32 0.0, %v443
    %v445 = vpop.f32.mrb[0].mxu0
    %446 = vdwg.mxu0
    %v448 = vrot.slane %v444, 4
    %v450 = vadd.f32 %v146, %v448
    %v451 = vxor.u32 %v450, 2147483648
    %v452 = vmul.f32 %v451, 1.442695
    %v453 = vpow.pop %v452
    %v454 = vadd.f32 %v453, 1.0
    %v455 = vrcp.pop %v454
    %v456 = vmul.f32 1.0, %v455
    %v457 = vtanh.pop %v450
    %v459 = vrot.slane %v359, 6
    %v461 = vmul.f32 %v456, %v459
    %463 = vrot.lane.b32.xlu0 %v457, 64
    %v464 = vpop.permute.xlu0 %463
    %v466 = vmul.f32 %v456, %v464
    %468 = vrot.lane.b32.xlu0 %v466, 32
    %v469 = vpop.permute.xlu0 %468
    %v471 = vadd.f32 %v461, %v469
    %v472 = vtanh.pop %v471
    %474 = vrot.lane.b32.xlu0 %v472, 64
    %v475 = vpop.permute.xlu0 %474
    %v477 = vmul.f32 %v456, %v475
    %479 = vrot.lane.b32.xlu0 %v477, 32
    %v480 = vpop.permute.xlu0 %479
    %vm482 = vcmask 259076
    %483 = vst.msk [vmem:[#allocation2] sm:$0x30] %vm482, %v480
    %v484 = vrot.slane %v477, 4
    %485 = vrot.lane.b32.xlu0 %v484, 32
    %v486 = vpop.permute.xlu0 %485
    %v487 = vsel %vm154, %v486, 0
    %489 = vmatprep.subr.mxu0 0.0
    %490 = vmatpush1.msra.mxu0 %v59
    %491 = vmatprep.subr.mxu0 0.0
    %492 = vmatpush1.msra.mxu0 %v60
    %493 = vmatprep.subr.mxu0 0.0
    %494 = vmatpush1.msra.mxu0 %v61
    %495 = vmatprep.subr.mxu0 0.0
    %496 = vmatpush1.msra.mxu0 %v62
    %497 = vmatprep.subr.mxu0 0.0
    %498 = vmatpush1.msra.mxu0 0.0
    %499 = vmatprep.subr.mxu0 0.0
    %500 = vmatpush1.msra.mxu0 0.0
    %501 = vmatprep.subr.mxu0 0.0
    %502 = vmatpush1.msra.mxu0 0.0
    %503 = vmatprep.subr.mxu0 0.0
    %504 = vmatpush1.msra.mxu0 0.0
    %505 = vmatprep.subr.mxu0 0.0
    %506 = vmatpush1.msra.mxu0 0.0
    %507 = vmatprep.subr.mxu0 0.0
    %508 = vmatpush1.msra.mxu0 0.0
    %509 = vmatprep.subr.mxu0 0.0
    %510 = vmatpush1.msra.mxu0 0.0
    %511 = vmatprep.subr.mxu0 0.0
    %512 = vmatpush1.msra.mxu0 0.0
    %513 = vmatprep.subr.mxu0 0.0
    %514 = vmatpush1.msra.mxu0 0.0
    %515 = vmatprep.subr.mxu0 0.0
    %516 = vmatpush1.msra.mxu0 0.0
    %517 = vmatprep.subr.mxu0 0.0
    %518 = vmatpush1.msra.mxu0 0.0
    %519 = vmatprep.subr.mxu0 0.0
    %520 = vmatpush1.msra.mxu0 0.0
    %521 = vmatprep.subr.mxu0 0.0
    %522 = vmatpush1.msra.mxu0 0.0
    %523 = vmatprep.subr.mxu0 0.0
    %524 = vmatpush1.msra.mxu0 0.0
    %525 = vmatprep.subr.mxu0 0.0
    %526 = vmatpush1.msra.mxu0 0.0
    %527 = vmatprep.subr.mxu0 0.0
    %528 = vmatpush1.msra.mxu0 0.0
    %529 = vmatprep.subr.mxu0 0.0
    %530 = vmatpush1.msra.mxu0 0.0
    %531 = vmatprep.subr.mxu0 0.0
    %532 = vmatpush1.msra.mxu0 0.0
    %533 = vmatprep.subr.mxu0 0.0
    %534 = vmatpush1.msra.mxu0 0.0
    %535 = vmatprep.subr.mxu0 0.0
    %536 = vmatpush1.msra.mxu0 0.0
    %537 = vmatprep.subr.mxu0 0.0
    %538 = vmatpush1.msra.mxu0 0.0
    %539 = vmatprep.subr.mxu0 0.0
    %540 = vmatpush1.msra.mxu0 0.0
    %541 = vmatprep.subr.mxu0 0.0
    %542 = vmatpush1.msra.mxu0 0.0
    %543 = vmatprep.subr.mxu0 0.0
    %544 = vmatpush1.msra.mxu0 0.0
    %545 = vmatprep.subr.mxu0 0.0
    %546 = vmatpush1.msra.mxu0 0.0
    %547 = vmatprep.subr.mxu0 0.0
    %548 = vmatpush1.msra.mxu0 0.0
    %549 = vmatprep.subr.mxu0 0.0
    %550 = vmatpush1.msra.mxu0 0.0
    %551 = vmatprep.subr.mxu0 0.0
    %552 = vmatpush1.msra.mxu0 0.0
    %553 = vmatprep.mubr.f32.mxu0 0.0
    %554 = vmatmul.mubr.f32.gmra.mrb[0].mxu0 %v487
    %v555 = vpop.f32.mrb[0].mxu0
    %v556 = vadd.f32 0.0, %v555
    %v557 = vpop.f32.mrb[0].mxu0
    %558 = vdwg.mxu0
    %v560 = vrot.slane %v556, 2
    %v562 = vadd.f32 %v146, %v560
    %v563 = vxor.u32 %v562, 2147483648
    %v564 = vmul.f32 %v563, 1.442695
    %v565 = vpow.pop %v564
    %v566 = vadd.f32 %v565, 1.0
    %v567 = vrcp.pop %v566
    %v568 = vmul.f32 1.0, %v567
    %v569 = vtanh.pop %v562
    %v571 = vrot.slane %v471, 6
    %v573 = vmul.f32 %v568, %v571
    %575 = vrot.lane.b32.xlu0 %v569, 64
    %v576 = vpop.permute.xlu0 %575
    %v578 = vmul.f32 %v568, %v576
    %580 = vrot.lane.b32.xlu0 %v578, 32
    %v581 = vpop.permute.xlu0 %580
    %v583 = vadd.f32 %v573, %v581
    %v584 = vtanh.pop %v583
    %586 = vrot.lane.b32.xlu0 %v584, 64
    %v587 = vpop.permute.xlu0 %586
    %v589 = vmul.f32 %v568, %v587
    %591 = vrot.lane.b32.xlu0 %v589, 32
    %v592 = vpop.permute.xlu0 %591
    %vm594 = vcmask 261126
    %595 = vst.msk [vmem:[#allocation2] sm:$0xc0] %vm594, %v592
    %v596 = vrot.slane %v589, 6
    %597 = vrot.lane.b32.xlu0 %v596, 32
    %v598 = vpop.permute.xlu0 %597
    %v599 = vsel %vm154, %v598, 0
    %601 = vmatprep.subr.mxu0 0.0
    %602 = vmatpush1.msra.mxu0 %v59
    %603 = vmatprep.subr.mxu0 0.0
    %604 = vmatpush1.msra.mxu0 %v60
    %605 = vmatprep.subr.mxu0 0.0
    %606 = vmatpush1.msra.mxu0 %v61
    %607 = vmatprep.subr.mxu0 0.0
    %608 = vmatpush1.msra.mxu0 %v62
    %609 = vmatprep.subr.mxu0 0.0
    %610 = vmatpush1.msra.mxu0 0.0
    %611 = vmatprep.subr.mxu0 0.0
    %612 = vmatpush1.msra.mxu0 0.0
    %613 = vmatprep.subr.mxu0 0.0
    %614 = vmatpush1.msra.mxu0 0.0
    %615 = vmatprep.subr.mxu0 0.0
    %616 = vmatpush1.msra.mxu0 0.0
    %617 = vmatprep.subr.mxu0 0.0
    %618 = vmatpush1.msra.mxu0 0.0
    %619 = vmatprep.subr.mxu0 0.0
    %620 = vmatpush1.msra.mxu0 0.0
    %621 = vmatprep.subr.mxu0 0.0
    %622 = vmatpush1.msra.mxu0 0.0
    %623 = vmatprep.subr.mxu0 0.0
    %624 = vmatpush1.msra.mxu0 0.0
    %625 = vmatprep.subr.mxu0 0.0
    %626 = vmatpush1.msra.mxu0 0.0
    %627 = vmatprep.subr.mxu0 0.0
    %628 = vmatpush1.msra.mxu0 0.0
    %629 = vmatprep.subr.mxu0 0.0
    %630 = vmatpush1.msra.mxu0 0.0
    %631 = vmatprep.subr.mxu0 0.0
    %632 = vmatpush1.msra.mxu0 0.0
    %633 = vmatprep.subr.mxu0 0.0
    %634 = vmatpush1.msra.mxu0 0.0
    %635 = vmatprep.subr.mxu0 0.0
    %636 = vmatpush1.msra.mxu0 0.0
    %637 = vmatprep.subr.mxu0 0.0
    %638 = vmatpush1.msra.mxu0 0.0
    %639 = vmatprep.subr.mxu0 0.0
    %640 = vmatpush1.msra.mxu0 0.0
    %641 = vmatprep.subr.mxu0 0.0
    %642 = vmatpush1.msra.mxu0 0.0
    %643 = vmatprep.subr.mxu0 0.0
    %644 = vmatpush1.msra.mxu0 0.0
    %645 = vmatprep.subr.mxu0 0.0
    %646 = vmatpush1.msra.mxu0 0.0
    %647 = vmatprep.subr.mxu0 0.0
    %648 = vmatpush1.msra.mxu0 0.0
    %649 = vmatprep.subr.mxu0 0.0
    %650 = vmatpush1.msra.mxu0 0.0
    %651 = vmatprep.subr.mxu0 0.0
    %652 = vmatpush1.msra.mxu0 0.0
    %653 = vmatprep.subr.mxu0 0.0
    %654 = vmatpush1.msra.mxu0 0.0
    %655 = vmatprep.subr.mxu0 0.0
    %656 = vmatpush1.msra.mxu0 0.0
    %657 = vmatprep.subr.mxu0 0.0
    %658 = vmatpush1.msra.mxu0 0.0
    %659 = vmatprep.subr.mxu0 0.0
    %660 = vmatpush1.msra.mxu0 0.0
    %661 = vmatprep.subr.mxu0 0.0
    %662 = vmatpush1.msra.mxu0 0.0
    %663 = vmatprep.subr.mxu0 0.0
    %664 = vmatpush1.msra.mxu0 0.0
    %665 = vmatprep.mubr.f32.mxu0 0.0
    %666 = vmatmul.mubr.f32.gmra.mrb[0].mxu0 %v599
    %v667 = vpop.f32.mrb[0].mxu0
    %v668 = vadd.f32 0.0, %v667
    %v669 = vpop.f32.mrb[0].mxu0
    %670 = vdwg.mxu0
    %v671 = vadd.f32 %v151, %v668
    %v672 = vxor.u32 %v671, 2147483648
    %v673 = vmul.f32 %v672, 1.442695
    %v674 = vpow.pop %v673
    %v675 = vadd.f32 %v674, 1.0
    %v676 = vrcp.pop %v675
    %v677 = vmul.f32 1.0, %v676
    %v678 = vtanh.pop %v671
    %v680 = vrot.slane %v583, 6
    %v682 = vmul.f32 %v677, %v680
    %684 = vrot.lane.b32.xlu0 %v678, 64
    %v685 = vpop.permute.xlu0 %684
    %v687 = vmul.f32 %v677, %v685
    %689 = vrot.lane.b32.xlu0 %v687, 32
    %v690 = vpop.permute.xlu0 %689
    %v692 = vadd.f32 %v682, %v690
    %v693 = vtanh.pop %v692
    %695 = vrot.lane.b32.xlu0 %v693, 64
    %v696 = vpop.permute.xlu0 %695
    %v698 = vmul.f32 %v677, %v696
    %700 = vrot.lane.b32.xlu0 %v698, 32
    %v701 = vpop.permute.xlu0 %700
    %703 = vst.msk [vmem:[#allocation2 + $0x8] sm:$0x3] %vm261, %v701
    %v704 = vsel %vm154, %v701, 0
    %706 = vmatprep.subr.mxu0 0.0
    %707 = vmatpush1.msra.mxu0 %v59
    %708 = vmatprep.subr.mxu0 0.0
    %709 = vmatpush1.msra.mxu0 %v60
    %710 = vmatprep.subr.mxu0 0.0
    %711 = vmatpush1.msra.mxu0 %v61
    %712 = vmatprep.subr.mxu0 0.0
    %713 = vmatpush1.msra.mxu0 %v62
    %714 = vmatprep.subr.mxu0 0.0
    %715 = vmatpush1.msra.mxu0 0.0
    %716 = vmatprep.subr.mxu0 0.0
    %717 = vmatpush1.msra.mxu0 0.0
    %718 = vmatprep.subr.mxu0 0.0
    %719 = vmatpush1.msra.mxu0 0.0
    %720 = vmatprep.subr.mxu0 0.0
    %721 = vmatpush1.msra.mxu0 0.0
    %722 = vmatprep.subr.mxu0 0.0
    %723 = vmatpush1.msra.mxu0 0.0
    %724 = vmatprep.subr.mxu0 0.0
    %725 = vmatpush1.msra.mxu0 0.0
    %726 = vmatprep.subr.mxu0 0.0
    %727 = vmatpush1.msra.mxu0 0.0
    %728 = vmatprep.subr.mxu0 0.0
    %729 = vmatpush1.msra.mxu0 0.0
    %730 = vmatprep.subr.mxu0 0.0
    %731 = vmatpush1.msra.mxu0 0.0
    %732 = vmatprep.subr.mxu0 0.0
    %733 = vmatpush1.msra.mxu0 0.0
    %734 = vmatprep.subr.mxu0 0.0
    %735 = vmatpush1.msra.mxu0 0.0
    %736 = vmatprep.subr.mxu0 0.0
    %737 = vmatpush1.msra.mxu0 0.0
    %738 = vmatprep.subr.mxu0 0.0
    %739 = vmatpush1.msra.mxu0 0.0
    %740 = vmatprep.subr.mxu0 0.0
    %741 = vmatpush1.msra.mxu0 0.0
    %742 = vmatprep.subr.mxu0 0.0
    %743 = vmatpush1.msra.mxu0 0.0
    %744 = vmatprep.subr.mxu0 0.0
    %745 = vmatpush1.msra.mxu0 0.0
    %746 = vmatprep.subr.mxu0 0.0
    %747 = vmatpush1.msra.mxu0 0.0
    %748 = vmatprep.subr.mxu0 0.0
    %749 = vmatpush1.msra.mxu0 0.0
    %750 = vmatprep.subr.mxu0 0.0
    %751 = vmatpush1.msra.mxu0 0.0
    %752 = vmatprep.subr.mxu0 0.0
    %753 = vmatpush1.msra.mxu0 0.0
    %754 = vmatprep.subr.mxu0 0.0
    %755 = vmatpush1.msra.mxu0 0.0
    %756 = vmatprep.subr.mxu0 0.0
    %757 = vmatpush1.msra.mxu0 0.0
    %758 = vmatprep.subr.mxu0 0.0
    %759 = vmatpush1.msra.mxu0 0.0
    %760 = vmatprep.subr.mxu0 0.0
    %761 = vmatpush1.msra.mxu0 0.0
    %762 = vmatprep.subr.mxu0 0.0
    %763 = vmatpush1.msra.mxu0 0.0
    %764 = vmatprep.subr.mxu0 0.0
    %765 = vmatpush1.msra.mxu0 0.0
    %766 = vmatprep.subr.mxu0 0.0
    %767 = vmatpush1.msra.mxu0 0.0
    %768 = vmatprep.subr.mxu0 0.0
    %769 = vmatpush1.msra.mxu0 0.0
    %770 = vmatprep.mubr.f32.mxu0 0.0
    %771 = vmatmul.mubr.f32.gmra.mrb[0].mxu0 %v704
    %v772 = vpop.f32.mrb[0].mxu0
    %v773 = vadd.f32 0.0, %v772
    %v774 = vpop.f32.mrb[0].mxu0
    %775 = vdwg.mxu0
    %v777 = vrot.slane %v773, 6
    %v779 = vadd.f32 %v151, %v777
    %v780 = vxor.u32 %v779, 2147483648
    %v781 = vmul.f32 %v780, 1.442695
    %v782 = vpow.pop %v781
    %v783 = vadd.f32 %v782, 1.0
    %v784 = vrcp.pop %v783
    %v785 = vmul.f32 1.0, %v784
    %v786 = vtanh.pop %v779
    %v788 = vrot.slane %v692, 6
    %v790 = vmul.f32 %v785, %v788
    %792 = vrot.lane.b32.xlu0 %v786, 64
    %v793 = vpop.permute.xlu0 %792
    %v795 = vmul.f32 %v785, %v793
    %797 = vrot.lane.b32.xlu0 %v795, 32
    %v798 = vpop.permute.xlu0 %797
    %v800 = vadd.f32 %v790, %v798
    %v801 = vtanh.pop %v800
    %803 = vrot.lane.b32.xlu0 %v801, 64
    %v804 = vpop.permute.xlu0 %803
    %v806 = vmul.f32 %v785, %v804
    %808 = vrot.lane.b32.xlu0 %v806, 32
    %v809 = vpop.permute.xlu0 %808
    %811 = vst.msk [vmem:[#allocation2 + $0x8] sm:$0xc] %vm370, %v809
    %v812 = vrot.slane %v806, 2
    %813 = vrot.lane.b32.xlu0 %v812, 32
    %v814 = vpop.permute.xlu0 %813
    %v815 = vsel %vm154, %v814, 0
    %817 = vmatprep.subr.mxu0 0.0
    %818 = vmatpush1.msra.mxu0 %v59
    %819 = vmatprep.subr.mxu0 0.0
    %820 = vmatpush1.msra.mxu0 %v60
    %821 = vmatprep.subr.mxu0 0.0
    %822 = vmatpush1.msra.mxu0 %v61
    %823 = vmatprep.subr.mxu0 0.0
    %824 = vmatpush1.msra.mxu0 %v62
    %825 = vmatprep.subr.mxu0 0.0
    %826 = vmatpush1.msra.mxu0 0.0
    %827 = vmatprep.subr.mxu0 0.0
    %828 = vmatpush1.msra.mxu0 0.0
    %829 = vmatprep.subr.mxu0 0.0
    %830 = vmatpush1.msra.mxu0 0.0
    %831 = vmatprep.subr.mxu0 0.0
    %832 = vmatpush1.msra.mxu0 0.0
    %833 = vmatprep.subr.mxu0 0.0
    %834 = vmatpush1.msra.mxu0 0.0
    %835 = vmatprep.subr.mxu0 0.0
    %836 = vmatpush1.msra.mxu0 0.0
    %837 = vmatprep.subr.mxu0 0.0
    %838 = vmatpush1.msra.mxu0 0.0
    %839 = vmatprep.subr.mxu0 0.0
    %840 = vmatpush1.msra.mxu0 0.0
    %841 = vmatprep.subr.mxu0 0.0
    %842 = vmatpush1.msra.mxu0 0.0
    %843 = vmatprep.subr.mxu0 0.0
    %844 = vmatpush1.msra.mxu0 0.0
    %845 = vmatprep.subr.mxu0 0.0
    %846 = vmatpush1.msra.mxu0 0.0
    %847 = vmatprep.subr.mxu0 0.0
    %848 = vmatpush1.msra.mxu0 0.0
    %849 = vmatprep.subr.mxu0 0.0
    %850 = vmatpush1.msra.mxu0 0.0
    %851 = vmatprep.subr.mxu0 0.0
    %852 = vmatpush1.msra.mxu0 0.0
    %853 = vmatprep.subr.mxu0 0.0
    %854 = vmatpush1.msra.mxu0 0.0
    %855 = vmatprep.subr.mxu0 0.0
    %856 = vmatpush1.msra.mxu0 0.0
    %857 = vmatprep.subr.mxu0 0.0
    %858 = vmatpush1.msra.mxu0 0.0
    %859 = vmatprep.subr.mxu0 0.0
    %860 = vmatpush1.msra.mxu0 0.0
    %861 = vmatprep.subr.mxu0 0.0
    %862 = vmatpush1.msra.mxu0 0.0
    %863 = vmatprep.subr.mxu0 0.0
    %864 = vmatpush1.msra.mxu0 0.0
    %865 = vmatprep.subr.mxu0 0.0
    %866 = vmatpush1.msra.mxu0 0.0
    %867 = vmatprep.subr.mxu0 0.0
    %868 = vmatpush1.msra.mxu0 0.0
    %869 = vmatprep.subr.mxu0 0.0
    %870 = vmatpush1.msra.mxu0 0.0
    %871 = vmatprep.subr.mxu0 0.0
    %872 = vmatpush1.msra.mxu0 0.0
    %873 = vmatprep.subr.mxu0 0.0
    %874 = vmatpush1.msra.mxu0 0.0
    %875 = vmatprep.subr.mxu0 0.0
    %876 = vmatpush1.msra.mxu0 0.0
    %877 = vmatprep.subr.mxu0 0.0
    %878 = vmatpush1.msra.mxu0 0.0
    %879 = vmatprep.subr.mxu0 0.0
    %880 = vmatpush1.msra.mxu0 0.0
    %881 = vmatprep.mubr.f32.mxu0 0.0
    %882 = vmatmul.mubr.f32.gmra.mrb[0].mxu0 %v815
    %v883 = vpop.f32.mrb[0].mxu0
    %v884 = vadd.f32 0.0, %v883
    %v885 = vpop.f32.mrb[0].mxu0
    %886 = vdwg.mxu0
    %v888 = vrot.slane %v884, 4
    %v890 = vadd.f32 %v151, %v888
    %v891 = vxor.u32 %v890, 2147483648
    %v892 = vmul.f32 %v891, 1.442695
    %v893 = vpow.pop %v892
    %v894 = vadd.f32 %v893, 1.0
    %v895 = vrcp.pop %v894
    %v896 = vmul.f32 1.0, %v895
    %v897 = vtanh.pop %v890
    %v899 = vrot.slane %v800, 6
    %v901 = vmul.f32 %v896, %v899
    %903 = vrot.lane.b32.xlu0 %v897, 64
    %v904 = vpop.permute.xlu0 %903
    %v906 = vmul.f32 %v896, %v904
    %908 = vrot.lane.b32.xlu0 %v906, 32
    %v909 = vpop.permute.xlu0 %908
    %v911 = vadd.f32 %v901, %v909
    %v912 = vtanh.pop %v911
    %914 = vrot.lane.b32.xlu0 %v912, 64
    %v915 = vpop.permute.xlu0 %914
    %v917 = vmul.f32 %v896, %v915
    %919 = vrot.lane.b32.xlu0 %v917, 32
    %v920 = vpop.permute.xlu0 %919
    %922 = vst.msk [vmem:[#allocation2 + $0x8] sm:$0x30] %vm482, %v920
    %v923 = vrot.slane %v917, 4
    %924 = vrot.lane.b32.xlu0 %v923, 32
    %v925 = vpop.permute.xlu0 %924
    %v926 = vsel %vm154, %v925, 0
    %928 = vmatprep.subr.mxu0 0.0
    %929 = vmatpush1.msra.mxu0 %v59
    %930 = vmatprep.subr.mxu0 0.0
    %931 = vmatpush1.msra.mxu0 %v60
    %932 = vmatprep.subr.mxu0 0.0
    %933 = vmatpush1.msra.mxu0 %v61
    %934 = vmatprep.subr.mxu0 0.0
    %935 = vmatpush1.msra.mxu0 %v62
    %936 = vmatprep.subr.mxu0 0.0
    %937 = vmatpush1.msra.mxu0 0.0
    %938 = vmatprep.subr.mxu0 0.0
    %939 = vmatpush1.msra.mxu0 0.0
    %940 = vmatprep.subr.mxu0 0.0
    %941 = vmatpush1.msra.mxu0 0.0
    %942 = vmatprep.subr.mxu0 0.0
    %943 = vmatpush1.msra.mxu0 0.0
    %944 = vmatprep.subr.mxu0 0.0
    %945 = vmatpush1.msra.mxu0 0.0
    %946 = vmatprep.subr.mxu0 0.0
    %947 = vmatpush1.msra.mxu0 0.0
    %948 = vmatprep.subr.mxu0 0.0
    %949 = vmatpush1.msra.mxu0 0.0
    %950 = vmatprep.subr.mxu0 0.0
    %951 = vmatpush1.msra.mxu0 0.0
    %952 = vmatprep.subr.mxu0 0.0
    %953 = vmatpush1.msra.mxu0 0.0
    %954 = vmatprep.subr.mxu0 0.0
    %955 = vmatpush1.msra.mxu0 0.0
    %956 = vmatprep.subr.mxu0 0.0
    %957 = vmatpush1.msra.mxu0 0.0
    %958 = vmatprep.subr.mxu0 0.0
    %959 = vmatpush1.msra.mxu0 0.0
    %960 = vmatprep.subr.mxu0 0.0
    %961 = vmatpush1.msra.mxu0 0.0
    %962 = vmatprep.subr.mxu0 0.0
    %963 = vmatpush1.msra.mxu0 0.0
    %964 = vmatprep.subr.mxu0 0.0
    %965 = vmatpush1.msra.mxu0 0.0
    %966 = vmatprep.subr.mxu0 0.0
    %967 = vmatpush1.msra.mxu0 0.0
    %968 = vmatprep.subr.mxu0 0.0
    %969 = vmatpush1.msra.mxu0 0.0
    %970 = vmatprep.subr.mxu0 0.0
    %971 = vmatpush1.msra.mxu0 0.0
    %972 = vmatprep.subr.mxu0 0.0
    %973 = vmatpush1.msra.mxu0 0.0
    %974 = vmatprep.subr.mxu0 0.0
    %975 = vmatpush1.msra.mxu0 0.0
    %976 = vmatprep.subr.mxu0 0.0
    %977 = vmatpush1.msra.mxu0 0.0
    %978 = vmatprep.subr.mxu0 0.0
    %979 = vmatpush1.msra.mxu0 0.0
    %980 = vmatprep.subr.mxu0 0.0
    %981 = vmatpush1.msra.mxu0 0.0
    %982 = vmatprep.subr.mxu0 0.0
    %983 = vmatpush1.msra.mxu0 0.0
    %984 = vmatprep.subr.mxu0 0.0
    %985 = vmatpush1.msra.mxu0 0.0
    %986 = vmatprep.subr.mxu0 0.0
    %987 = vmatpush1.msra.mxu0 0.0
    %988 = vmatprep.subr.mxu0 0.0
    %989 = vmatpush1.msra.mxu0 0.0
    %990 = vmatprep.subr.mxu0 0.0
    %991 = vmatpush1.msra.mxu0 0.0
    %992 = vmatprep.mubr.f32.mxu0 0.0
    %993 = vmatmul.mubr.f32.gmra.mrb[0].mxu0 %v926
    %v994 = vpop.f32.mrb[0].mxu0
    %v995 = vadd.f32 0.0, %v994
    %v996 = vpop.f32.mrb[0].mxu0
    %997 = vdwg.mxu0
    %v999 = vrot.slane %v995, 2
    %v1001 = vadd.f32 %v151, %v999
    %v1002 = vxor.u32 %v1001, 2147483648
    %v1003 = vmul.f32 %v1002, 1.442695
    %v1004 = vpow.pop %v1003
    %v1005 = vadd.f32 %v1004, 1.0
    %v1006 = vrcp.pop %v1005
    %v1007 = vmul.f32 1.0, %v1006
    %v1008 = vtanh.pop %v1001
    %v1010 = vrot.slane %v911, 6
    %v1012 = vmul.f32 %v1007, %v1010
    %1014 = vrot.lane.b32.xlu0 %v1008, 64
    %v1015 = vpop.permute.xlu0 %1014
    %v1017 = vmul.f32 %v1007, %v1015
    %1019 = vrot.lane.b32.xlu0 %v1017, 32
    %v1020 = vpop.permute.xlu0 %1019
    %v1022 = vadd.f32 %v1012, %v1020
    %v1023 = vtanh.pop %v1022
    %1025 = vrot.lane.b32.xlu0 %v1023, 64
    %v1026 = vpop.permute.xlu0 %1025
    %v1028 = vmul.f32 %v1007, %v1026
    %1030 = vrot.lane.b32.xlu0 %v1028, 32
    %v1031 = vpop.permute.xlu0 %1030
    %1033 = vst.msk [vmem:[#allocation2 + $0x8] sm:$0xc0] %vm594, %v1031
    %v1034 = vld [vmem:[#allocation2] sm:$0xff]
    %v1035 = vld [vmem:[#allocation2 + $0x8] sm:$0xff]
    %v1036 = vld [vmem:[%s7] sm:$0xff]
    %v1037 = vld [vmem:[%s7 + $0x8] sm:$0xff]
    %v1038 = vld [vmem:[%s7 + $0x10] sm:$0xff]
    %v1039 = vld [vmem:[%s7 + $0x18] sm:$0xff]
    %v1040 = vld [vmem:[%s8] sm:$0xff]
    %v1041 = vld [vmem:[%s8 + $0x8] sm:$0xff]
    %v1042 = vld [vmem:[%s8 + $0x10] sm:$0xff]
    %v1043 = vld [vmem:[%s8 + $0x18] sm:$0xff]
    %v1044 = vld [vmem:[%s9] sm:$0x1]
    %s1045 = scalar_lea.vmem %s1, 2
    %v1046 = vld [vmem:[%s1045] sm:$0x3]
    %s1047 = scalar_lea.vmem %s2, 2
    %v1048 = vld [vmem:[%s1047] sm:$0x3]
    %v1050 = vlaneseq
    %v1051 = vshrl.u32 %v1050, 7
    %v1052 = vsub.s32 0, %v1051
    %v1053 = vrot.slane %v1044, %v1052
    %v1056 = vsel %vm154, %v1034, 0
    %v1059 = vsel %vm154, %v1035, 0
    %1061 = vmatprep.subr.mxu0 0.0
    %1062 = vmatpush1.msra.mxu0 %v1036
    %1063 = vmatprep.subr.mxu0 0.0
    %1064 = vmatpush1.msra.mxu0 %v1037
    %1065 = vmatprep.subr.mxu0 0.0
    %1066 = vmatpush1.msra.mxu0 %v1038
    %1067 = vmatprep.subr.mxu0 0.0
    %1068 = vmatpush1.msra.mxu0 %v1039
    %1069 = vmatprep.subr.mxu0 0.0
    %1070 = vmatpush1.msra.mxu0 0.0
    %1071 = vmatprep.subr.mxu0 0.0
    %1072 = vmatpush1.msra.mxu0 0.0
    %1073 = vmatprep.subr.mxu0 0.0
    %1074 = vmatpush1.msra.mxu0 0.0
    %1075 = vmatprep.subr.mxu0 0.0
    %1076 = vmatpush1.msra.mxu0 0.0
    %1077 = vmatprep.subr.mxu0 0.0
    %1078 = vmatpush1.msra.mxu0 0.0
    %1079 = vmatprep.subr.mxu0 0.0
    %1080 = vmatpush1.msra.mxu0 0.0
    %1081 = vmatprep.subr.mxu0 0.0
    %1082 = vmatpush1.msra.mxu0 0.0
    %1083 = vmatprep.subr.mxu0 0.0
    %1084 = vmatpush1.msra.mxu0 0.0
    %1085 = vmatprep.subr.mxu0 0.0
    %1086 = vmatpush1.msra.mxu0 0.0
    %1087 = vmatprep.subr.mxu0 0.0
    %1088 = vmatpush1.msra.mxu0 0.0
    %1089 = vmatprep.subr.mxu0 0.0
    %1090 = vmatpush1.msra.mxu0 0.0
    %1091 = vmatprep.subr.mxu0 0.0
    %1092 = vmatpush1.msra.mxu0 0.0
    %1093 = vmatprep.subr.mxu0 0.0
    %1094 = vmatpush1.msra.mxu0 0.0
    %1095 = vmatprep.subr.mxu0 0.0
    %1096 = vmatpush1.msra.mxu0 0.0
    %1097 = vmatprep.subr.mxu0 0.0
    %1098 = vmatpush1.msra.mxu0 0.0
    %1099 = vmatprep.subr.mxu0 0.0
    %1100 = vmatpush1.msra.mxu0 0.0
    %1101 = vmatprep.subr.mxu0 0.0
    %1102 = vmatpush1.msra.mxu0 0.0
    %1103 = vmatprep.subr.mxu0 0.0
    %1104 = vmatpush1.msra.mxu0 0.0
    %1105 = vmatprep.subr.mxu0 0.0
    %1106 = vmatpush1.msra.mxu0 0.0
    %1107 = vmatprep.subr.mxu0 0.0
    %1108 = vmatpush1.msra.mxu0 0.0
    %1109 = vmatprep.subr.mxu0 0.0
    %1110 = vmatpush1.msra.mxu0 0.0
    %1111 = vmatprep.subr.mxu0 0.0
    %1112 = vmatpush1.msra.mxu0 0.0
    %1113 = vmatprep.subr.mxu0 0.0
    %1114 = vmatpush1.msra.mxu0 0.0
    %1115 = vmatprep.subr.mxu0 0.0
    %1116 = vmatpush1.msra.mxu0 0.0
    %1117 = vmatprep.subr.mxu0 0.0
    %1118 = vmatpush1.msra.mxu0 0.0
    %1119 = vmatprep.subr.mxu0 0.0
    %1120 = vmatpush1.msra.mxu0 0.0
    %1121 = vmatprep.subr.mxu0 0.0
    %1122 = vmatpush1.msra.mxu0 0.0
    %1123 = vmatprep.subr.mxu0 0.0
    %1124 = vmatpush1.msra.mxu0 0.0
    %1125 = vmatprep.mubr.f32.mxu0 0.0
    %1126 = vmatmul.mubr.f32.gmra.mrb[0].mxu0 %v1056
    %v1127 = vpop.f32.mrb[0].mxu0
    %v1128 = vadd.f32 %v1053, %v1127
    %v1129 = vpop.f32.mrb[0].mxu0
    %1130 = vmatprep.mubr.f32.mxu0 0.0
    %1131 = vmatmul.mubr.f32.gmra.mrb[0].mxu0 %v1059
    %v1132 = vpop.f32.mrb[0].mxu0
    %v1133 = vadd.f32 %v1053, %v1132
    %v1134 = vpop.f32.mrb[0].mxu0
    %1135 = vdwg.mxu0
    %v1137 = vsel %vm154, %v1046, 0
    %1139 = vmatprep.subr.mxu0 0.0
    %1140 = vmatpush1.msra.mxu0 %v1040
    %1141 = vmatprep.subr.mxu0 0.0
    %1142 = vmatpush1.msra.mxu0 %v1041
    %1143 = vmatprep.subr.mxu0 0.0
    %1144 = vmatpush1.msra.mxu0 %v1042
    %1145 = vmatprep.subr.mxu0 0.0
    %1146 = vmatpush1.msra.mxu0 %v1043
    %1147 = vmatprep.subr.mxu0 0.0
    %1148 = vmatpush1.msra.mxu0 0.0
    %1149 = vmatprep.subr.mxu0 0.0
    %1150 = vmatpush1.msra.mxu0 0.0
    %1151 = vmatprep.subr.mxu0 0.0
    %1152 = vmatpush1.msra.mxu0 0.0
    %1153 = vmatprep.subr.mxu0 0.0
    %1154 = vmatpush1.msra.mxu0 0.0
    %1155 = vmatprep.subr.mxu0 0.0
    %1156 = vmatpush1.msra.mxu0 0.0
    %1157 = vmatprep.subr.mxu0 0.0
    %1158 = vmatpush1.msra.mxu0 0.0
    %1159 = vmatprep.subr.mxu0 0.0
    %1160 = vmatpush1.msra.mxu0 0.0
    %1161 = vmatprep.subr.mxu0 0.0
    %1162 = vmatpush1.msra.mxu0 0.0
    %1163 = vmatprep.subr.mxu0 0.0
    %1164 = vmatpush1.msra.mxu0 0.0
    %1165 = vmatprep.subr.mxu0 0.0
    %1166 = vmatpush1.msra.mxu0 0.0
    %1167 = vmatprep.subr.mxu0 0.0
    %1168 = vmatpush1.msra.mxu0 0.0
    %1169 = vmatprep.subr.mxu0 0.0
    %1170 = vmatpush1.msra.mxu0 0.0
    %1171 = vmatprep.subr.mxu0 0.0
    %1172 = vmatpush1.msra.mxu0 0.0
    %1173 = vmatprep.subr.mxu0 0.0
    %1174 = vmatpush1.msra.mxu0 0.0
    %1175 = vmatprep.subr.mxu0 0.0
    %1176 = vmatpush1.msra.mxu0 0.0
    %1177 = vmatprep.subr.mxu0 0.0
    %1178 = vmatpush1.msra.mxu0 0.0
    %1179 = vmatprep.subr.mxu0 0.0
    %1180 = vmatpush1.msra.mxu0 0.0
    %1181 = vmatprep.subr.mxu0 0.0
    %1182 = vmatpush1.msra.mxu0 0.0
    %1183 = vmatprep.subr.mxu0 0.0
    %1184 = vmatpush1.msra.mxu0 0.0
    %1185 = vmatprep.subr.mxu0 0.0
    %1186 = vmatpush1.msra.mxu0 0.0
    %1187 = vmatprep.subr.mxu0 0.0
    %1188 = vmatpush1.msra.mxu0 0.0
    %1189 = vmatprep.subr.mxu0 0.0
    %1190 = vmatpush1.msra.mxu0 0.0
    %1191 = vmatprep.subr.mxu0 0.0
    %1192 = vmatpush1.msra.mxu0 0.0
    %1193 = vmatprep.subr.mxu0 0.0
    %1194 = vmatpush1.msra.mxu0 0.0
    %1195 = vmatprep.subr.mxu0 0.0
    %1196 = vmatpush1.msra.mxu0 0.0
    %1197 = vmatprep.subr.mxu0 0.0
    %1198 = vmatpush1.msra.mxu0 0.0
    %1199 = vmatprep.subr.mxu0 0.0
    %1200 = vmatpush1.msra.mxu0 0.0
    %1201 = vmatprep.subr.mxu0 0.0
    %1202 = vmatpush1.msra.mxu0 0.0
    %1203 = vmatprep.mubr.f32.mxu0 0.0
    %1204 = vmatmul.mubr.f32.gmra.mrb[0].mxu0 %v1137
    %v1205 = vpop.f32.mrb[0].mxu0
    %v1206 = vadd.f32 0.0, %v1205
    %v1207 = vpop.f32.mrb[0].mxu0
    %1208 = vdwg.mxu0
    %v1209 = vadd.f32 %v1128, %v1206
    %v1210 = vxor.u32 %v1209, 2147483648
    %v1211 = vmul.f32 %v1210, 1.442695
    %v1212 = vpow.pop %v1211
    %v1213 = vadd.f32 %v1212, 1.0
    %v1214 = vrcp.pop %v1213
    %v1215 = vmul.f32 1.0, %v1214
    %v1216 = vtanh.pop %v1209
    %1218 = vrot.lane.b32.xlu0 %v1048, 32
    %v1219 = vpop.permute.xlu0 %1218
    %v1221 = vmul.f32 %v1215, %v1219
    %1223 = vrot.lane.b32.xlu0 %v1216, 64
    %v1224 = vpop.permute.xlu0 %1223
    %v1226 = vmul.f32 %v1215, %v1224
    %1228 = vrot.lane.b32.xlu0 %v1226, 32
    %v1229 = vpop.permute.xlu0 %1228
    %v1231 = vadd.f32 %v1221, %v1229
    %v1232 = vtanh.pop %v1231
    %1234 = vrot.lane.b32.xlu0 %v1232, 64
    %v1235 = vpop.permute.xlu0 %1234
    %v1237 = vmul.f32 %v1215, %v1235
    %1239 = vrot.lane.b32.xlu0 %v1237, 32
    %v1240 = vpop.permute.xlu0 %1239
    %vm1242 = vcmask 253952
    %1243 = vst.msk [vmem:[#allocation3] sm:$0x1] %vm1242, %v1240
    %vm1244 = vcmask 254977
    %1245 = vst.msk [vmem:[#allocation3 + $0x7] sm:$0x2] %vm1244, %v1240
    %v1246 = vsel %vm154, %v1240, 0
    %1248 = vmatprep.subr.mxu0 0.0
    %1249 = vmatpush1.msra.mxu0 %v1040
    %1250 = vmatprep.subr.mxu0 0.0
    %1251 = vmatpush1.msra.mxu0 %v1041
    %1252 = vmatprep.subr.mxu0 0.0
    %1253 = vmatpush1.msra.mxu0 %v1042
    %1254 = vmatprep.subr.mxu0 0.0
    %1255 = vmatpush1.msra.mxu0 %v1043
    %1256 = vmatprep.subr.mxu0 0.0
    %1257 = vmatpush1.msra.mxu0 0.0
    %1258 = vmatprep.subr.mxu0 0.0
    %1259 = vmatpush1.msra.mxu0 0.0
    %1260 = vmatprep.subr.mxu0 0.0
    %1261 = vmatpush1.msra.mxu0 0.0
    %1262 = vmatprep.subr.mxu0 0.0
    %1263 = vmatpush1.msra.mxu0 0.0
    %1264 = vmatprep.subr.mxu0 0.0
    %1265 = vmatpush1.msra.mxu0 0.0
    %1266 = vmatprep.subr.mxu0 0.0
    %1267 = vmatpush1.msra.mxu0 0.0
    %1268 = vmatprep.subr.mxu0 0.0
    %1269 = vmatpush1.msra.mxu0 0.0
    %1270 = vmatprep.subr.mxu0 0.0
    %1271 = vmatpush1.msra.mxu0 0.0
    %1272 = vmatprep.subr.mxu0 0.0
    %1273 = vmatpush1.msra.mxu0 0.0
    %1274 = vmatprep.subr.mxu0 0.0
    %1275 = vmatpush1.msra.mxu0 0.0
    %1276 = vmatprep.subr.mxu0 0.0
    %1277 = vmatpush1.msra.mxu0 0.0
    %1278 = vmatprep.subr.mxu0 0.0
    %1279 = vmatpush1.msra.mxu0 0.0
    %1280 = vmatprep.subr.mxu0 0.0
    %1281 = vmatpush1.msra.mxu0 0.0
    %1282 = vmatprep.subr.mxu0 0.0
    %1283 = vmatpush1.msra.mxu0 0.0
    %1284 = vmatprep.subr.mxu0 0.0
    %1285 = vmatpush1.msra.mxu0 0.0
    %1286 = vmatprep.subr.mxu0 0.0
    %1287 = vmatpush1.msra.mxu0 0.0
    %1288 = vmatprep.subr.mxu0 0.0
    %1289 = vmatpush1.msra.mxu0 0.0
    %1290 = vmatprep.subr.mxu0 0.0
    %1291 = vmatpush1.msra.mxu0 0.0
    %1292 = vmatprep.subr.mxu0 0.0
    %1293 = vmatpush1.msra.mxu0 0.0
    %1294 = vmatprep.subr.mxu0 0.0
    %1295 = vmatpush1.msra.mxu0 0.0
    %1296 = vmatprep.subr.mxu0 0.0
    %1297 = vmatpush1.msra.mxu0 0.0
    %1298 = vmatprep.subr.mxu0 0.0
    %1299 = vmatpush1.msra.mxu0 0.0
    %1300 = vmatprep.subr.mxu0 0.0
    %1301 = vmatpush1.msra.mxu0 0.0
    %1302 = vmatprep.subr.mxu0 0.0
    %1303 = vmatpush1.msra.mxu0 0.0
    %1304 = vmatprep.subr.mxu0 0.0
    %1305 = vmatpush1.msra.mxu0 0.0
    %1306 = vmatprep.subr.mxu0 0.0
    %1307 = vmatpush1.msra.mxu0 0.0
    %1308 = vmatprep.subr.mxu0 0.0
    %1309 = vmatpush1.msra.mxu0 0.0
    %1310 = vmatprep.subr.mxu0 0.0
    %1311 = vmatpush1.msra.mxu0 0.0
    %1312 = vmatprep.mubr.f32.mxu0 0.0
    %1313 = vmatmul.mubr.f32.gmra.mrb[0].mxu0 %v1246
    %v1314 = vpop.f32.mrb[0].mxu0
    %v1315 = vadd.f32 0.0, %v1314
    %v1316 = vpop.f32.mrb[0].mxu0
    %1317 = vdwg.mxu0
    %v1319 = vrot.slane %v1315, 6
    %v1321 = vadd.f32 %v1128, %v1319
    %v1322 = vxor.u32 %v1321, 2147483648
    %v1323 = vmul.f32 %v1322, 1.442695
    %v1324 = vpow.pop %v1323
    %v1325 = vadd.f32 %v1324, 1.0
    %v1326 = vrcp.pop %v1325
    %v1327 = vmul.f32 1.0, %v1326
    %v1328 = vtanh.pop %v1321
    %v1330 = vrot.slane %v1231, 6
    %v1332 = vmul.f32 %v1327, %v1330
    %1334 = vrot.lane.b32.xlu0 %v1328, 64
    %v1335 = vpop.permute.xlu0 %1334
    %v1337 = vmul.f32 %v1327, %v1335
    %1339 = vrot.lane.b32.xlu0 %v1337, 32
    %v1340 = vpop.permute.xlu0 %1339
    %v1342 = vadd.f32 %v1332, %v1340
    %v1343 = vtanh.pop %v1342
    %1345 = vrot.lane.b32.xlu0 %v1343, 64
    %v1346 = vpop.permute.xlu0 %1345
    %v1348 = vmul.f32 %v1327, %v1346
    %1350 = vrot.lane.b32.xlu0 %v1348, 32
    %v1351 = vpop.permute.xlu0 %1350
    %vm1353 = vcmask 256002
    %1354 = vst.msk [vmem:[#allocation3 - $0x1] sm:$0x4] %vm1353, %v1351
    %vm1355 = vcmask 257027
    %1356 = vst.msk [vmem:[#allocation3 + $0x6] sm:$0x8] %vm1355, %v1351
    %v1357 = vrot.slane %v1348, 2
    %1358 = vrot.lane.b32.xlu0 %v1357, 32
    %v1359 = vpop.permute.xlu0 %1358
    %v1360 = vsel %vm154, %v1359, 0
    %1362 = vmatprep.subr.mxu0 0.0
    %1363 = vmatpush1.msra.mxu0 %v1040
    %1364 = vmatprep.subr.mxu0 0.0
    %1365 = vmatpush1.msra.mxu0 %v1041
    %1366 = vmatprep.subr.mxu0 0.0
    %1367 = vmatpush1.msra.mxu0 %v1042
    %1368 = vmatprep.subr.mxu0 0.0
    %1369 = vmatpush1.msra.mxu0 %v1043
    %1370 = vmatprep.subr.mxu0 0.0
    %1371 = vmatpush1.msra.mxu0 0.0
    %1372 = vmatprep.subr.mxu0 0.0
    %1373 = vmatpush1.msra.mxu0 0.0
    %1374 = vmatprep.subr.mxu0 0.0
    %1375 = vmatpush1.msra.mxu0 0.0
    %1376 = vmatprep.subr.mxu0 0.0
    %1377 = vmatpush1.msra.mxu0 0.0
    %1378 = vmatprep.subr.mxu0 0.0
    %1379 = vmatpush1.msra.mxu0 0.0
    %1380 = vmatprep.subr.mxu0 0.0
    %1381 = vmatpush1.msra.mxu0 0.0
    %1382 = vmatprep.subr.mxu0 0.0
    %1383 = vmatpush1.msra.mxu0 0.0
    %1384 = vmatprep.subr.mxu0 0.0
    %1385 = vmatpush1.msra.mxu0 0.0
    %1386 = vmatprep.subr.mxu0 0.0
    %1387 = vmatpush1.msra.mxu0 0.0
    %1388 = vmatprep.subr.mxu0 0.0
    %1389 = vmatpush1.msra.mxu0 0.0
    %1390 = vmatprep.subr.mxu0 0.0
    %1391 = vmatpush1.msra.mxu0 0.0
    %1392 = vmatprep.subr.mxu0 0.0
    %1393 = vmatpush1.msra.mxu0 0.0
    %1394 = vmatprep.subr.mxu0 0.0
    %1395 = vmatpush1.msra.mxu0 0.0
    %1396 = vmatprep.subr.mxu0 0.0
    %1397 = vmatpush1.msra.mxu0 0.0
    %1398 = vmatprep.subr.mxu0 0.0
    %1399 = vmatpush1.msra.mxu0 0.0
    %1400 = vmatprep.subr.mxu0 0.0
    %1401 = vmatpush1.msra.mxu0 0.0
    %1402 = vmatprep.subr.mxu0 0.0
    %1403 = vmatpush1.msra.mxu0 0.0
    %1404 = vmatprep.subr.mxu0 0.0
    %1405 = vmatpush1.msra.mxu0 0.0
    %1406 = vmatprep.subr.mxu0 0.0
    %1407 = vmatpush1.msra.mxu0 0.0
    %1408 = vmatprep.subr.mxu0 0.0
    %1409 = vmatpush1.msra.mxu0 0.0
    %1410 = vmatprep.subr.mxu0 0.0
    %1411 = vmatpush1.msra.mxu0 0.0
    %1412 = vmatprep.subr.mxu0 0.0
    %1413 = vmatpush1.msra.mxu0 0.0
    %1414 = vmatprep.subr.mxu0 0.0
    %1415 = vmatpush1.msra.mxu0 0.0
    %1416 = vmatprep.subr.mxu0 0.0
    %1417 = vmatpush1.msra.mxu0 0.0
    %1418 = vmatprep.subr.mxu0 0.0
    %1419 = vmatpush1.msra.mxu0 0.0
    %1420 = vmatprep.subr.mxu0 0.0
    %1421 = vmatpush1.msra.mxu0 0.0
    %1422 = vmatprep.subr.mxu0 0.0
    %1423 = vmatpush1.msra.mxu0 0.0
    %1424 = vmatprep.subr.mxu0 0.0
    %1425 = vmatpush1.msra.mxu0 0.0
    %1426 = vmatprep.mubr.f32.mxu0 0.0
    %1427 = vmatmul.mubr.f32.gmra.mrb[0].mxu0 %v1360
    %v1428 = vpop.f32.mrb[0].mxu0
    %v1429 = vadd.f32 0.0, %v1428
    %v1430 = vpop.f32.mrb[0].mxu0
    %1431 = vdwg.mxu0
    %v1433 = vrot.slane %v1429, 4
    %v1435 = vadd.f32 %v1128, %v1433
    %v1436 = vxor.u32 %v1435, 2147483648
    %v1437 = vmul.f32 %v1436, 1.442695
    %v1438 = vpow.pop %v1437
    %v1439 = vadd.f32 %v1438, 1.0
    %v1440 = vrcp.pop %v1439
    %v1441 = vmul.f32 1.0, %v1440
    %v1442 = vtanh.pop %v1435
    %v1444 = vrot.slane %v1342, 6
    %v1446 = vmul.f32 %v1441, %v1444
    %1448 = vrot.lane.b32.xlu0 %v1442, 64
    %v1449 = vpop.permute.xlu0 %1448
    %v1451 = vmul.f32 %v1441, %v1449
    %1453 = vrot.lane.b32.xlu0 %v1451, 32
    %v1454 = vpop.permute.xlu0 %1453
    %v1456 = vadd.f32 %v1446, %v1454
    %v1457 = vtanh.pop %v1456
    %1459 = vrot.lane.b32.xlu0 %v1457, 64
    %v1460 = vpop.permute.xlu0 %1459
    %v1462 = vmul.f32 %v1441, %v1460
    %1464 = vrot.lane.b32.xlu0 %v1462, 32
    %v1465 = vpop.permute.xlu0 %1464
    %vm1467 = vcmask 258052
    %1468 = vst.msk [vmem:[#allocation3 - $0x2] sm:$0x10] %vm1467, %v1465
    %vm1469 = vcmask 259077
    %1470 = vst.msk [vmem:[#allocation3 + $0x5] sm:$0x20] %vm1469, %v1465
    %v1471 = vrot.slane %v1462, 4
    %1472 = vrot.lane.b32.xlu0 %v1471, 32
    %v1473 = vpop.permute.xlu0 %1472
    %v1474 = vsel %vm154, %v1473, 0
    %1476 = vmatprep.subr.mxu0 0.0
    %1477 = vmatpush1.msra.mxu0 %v1040
    %1478 = vmatprep.subr.mxu0 0.0
    %1479 = vmatpush1.msra.mxu0 %v1041
    %1480 = vmatprep.subr.mxu0 0.0
    %1481 = vmatpush1.msra.mxu0 %v1042
    %1482 = vmatprep.subr.mxu0 0.0
    %1483 = vmatpush1.msra.mxu0 %v1043
    %1484 = vmatprep.subr.mxu0 0.0
    %1485 = vmatpush1.msra.mxu0 0.0
    %1486 = vmatprep.subr.mxu0 0.0
    %1487 = vmatpush1.msra.mxu0 0.0
    %1488 = vmatprep.subr.mxu0 0.0
    %1489 = vmatpush1.msra.mxu0 0.0
    %1490 = vmatprep.subr.mxu0 0.0
    %1491 = vmatpush1.msra.mxu0 0.0
    %1492 = vmatprep.subr.mxu0 0.0
    %1493 = vmatpush1.msra.mxu0 0.0
    %1494 = vmatprep.subr.mxu0 0.0
    %1495 = vmatpush1.msra.mxu0 0.0
    %1496 = vmatprep.subr.mxu0 0.0
    %1497 = vmatpush1.msra.mxu0 0.0
    %1498 = vmatprep.subr.mxu0 0.0
    %1499 = vmatpush1.msra.mxu0 0.0
    %1500 = vmatprep.subr.mxu0 0.0
    %1501 = vmatpush1.msra.mxu0 0.0
    %1502 = vmatprep.subr.mxu0 0.0
    %1503 = vmatpush1.msra.mxu0 0.0
    %1504 = vmatprep.subr.mxu0 0.0
    %1505 = vmatpush1.msra.mxu0 0.0
    %1506 = vmatprep.subr.mxu0 0.0
    %1507 = vmatpush1.msra.mxu0 0.0
    %1508 = vmatprep.subr.mxu0 0.0
    %1509 = vmatpush1.msra.mxu0 0.0
    %1510 = vmatprep.subr.mxu0 0.0
    %1511 = vmatpush1.msra.mxu0 0.0
    %1512 = vmatprep.subr.mxu0 0.0
    %1513 = vmatpush1.msra.mxu0 0.0
    %1514 = vmatprep.subr.mxu0 0.0
    %1515 = vmatpush1.msra.mxu0 0.0
    %1516 = vmatprep.subr.mxu0 0.0
    %1517 = vmatpush1.msra.mxu0 0.0
    %1518 = vmatprep.subr.mxu0 0.0
    %1519 = vmatpush1.msra.mxu0 0.0
    %1520 = vmatprep.subr.mxu0 0.0
    %1521 = vmatpush1.msra.mxu0 0.0
    %1522 = vmatprep.subr.mxu0 0.0
    %1523 = vmatpush1.msra.mxu0 0.0
    %1524 = vmatprep.subr.mxu0 0.0
    %1525 = vmatpush1.msra.mxu0 0.0
    %1526 = vmatprep.subr.mxu0 0.0
    %1527 = vmatpush1.msra.mxu0 0.0
    %1528 = vmatprep.subr.mxu0 0.0
    %1529 = vmatpush1.msra.mxu0 0.0
    %1530 = vmatprep.subr.mxu0 0.0
    %1531 = vmatpush1.msra.mxu0 0.0
    %1532 = vmatprep.subr.mxu0 0.0
    %1533 = vmatpush1.msra.mxu0 0.0
    %1534 = vmatprep.subr.mxu0 0.0
    %1535 = vmatpush1.msra.mxu0 0.0
    %1536 = vmatprep.subr.mxu0 0.0
    %1537 = vmatpush1.msra.mxu0 0.0
    %1538 = vmatprep.subr.mxu0 0.0
    %1539 = vmatpush1.msra.mxu0 0.0
    %1540 = vmatprep.mubr.f32.mxu0 0.0
    %1541 = vmatmul.mubr.f32.gmra.mrb[0].mxu0 %v1474
    %v1542 = vpop.f32.mrb[0].mxu0
    %v1543 = vadd.f32 0.0, %v1542
    %v1544 = vpop.f32.mrb[0].mxu0
    %1545 = vdwg.mxu0
    %v1547 = vrot.slane %v1543, 2
    %v1549 = vadd.f32 %v1128, %v1547
    %v1550 = vxor.u32 %v1549, 2147483648
    %v1551 = vmul.f32 %v1550, 1.442695
    %v1552 = vpow.pop %v1551
    %v1553 = vadd.f32 %v1552, 1.0
    %v1554 = vrcp.pop %v1553
    %v1555 = vmul.f32 1.0, %v1554
    %v1556 = vtanh.pop %v1549
    %v1558 = vrot.slane %v1456, 6
    %v1560 = vmul.f32 %v1555, %v1558
    %1562 = vrot.lane.b32.xlu0 %v1556, 64
    %v1563 = vpop.permute.xlu0 %1562
    %v1565 = vmul.f32 %v1555, %v1563
    %1567 = vrot.lane.b32.xlu0 %v1565, 32
    %v1568 = vpop.permute.xlu0 %1567
    %v1570 = vadd.f32 %v1560, %v1568
    %v1571 = vtanh.pop %v1570
    %1573 = vrot.lane.b32.xlu0 %v1571, 64
    %v1574 = vpop.permute.xlu0 %1573
    %v1576 = vmul.f32 %v1555, %v1574
    %1578 = vrot.lane.b32.xlu0 %v1576, 32
    %v1579 = vpop.permute.xlu0 %1578
    %vm1581 = vcmask 260102
    %1582 = vst.msk [vmem:[#allocation3 - $0x3] sm:$0x40] %vm1581, %v1579
    %vm1583 = vcmask 261127
    %1584 = vst.msk [vmem:[#allocation3 + $0x4] sm:$0x80] %vm1583, %v1579
    %v1585 = vrot.slane %v1576, 6
    %1586 = vrot.lane.b32.xlu0 %v1585, 32
    %v1587 = vpop.permute.xlu0 %1586
    %v1588 = vsel %vm154, %v1587, 0
    %1590 = vmatprep.subr.mxu0 0.0
    %1591 = vmatpush1.msra.mxu0 %v1040
    %1592 = vmatprep.subr.mxu0 0.0
    %1593 = vmatpush1.msra.mxu0 %v1041
    %1594 = vmatprep.subr.mxu0 0.0
    %1595 = vmatpush1.msra.mxu0 %v1042
    %1596 = vmatprep.subr.mxu0 0.0
    %1597 = vmatpush1.msra.mxu0 %v1043
    %1598 = vmatprep.subr.mxu0 0.0
    %1599 = vmatpush1.msra.mxu0 0.0
    %1600 = vmatprep.subr.mxu0 0.0
    %1601 = vmatpush1.msra.mxu0 0.0
    %1602 = vmatprep.subr.mxu0 0.0
    %1603 = vmatpush1.msra.mxu0 0.0
    %1604 = vmatprep.subr.mxu0 0.0
    %1605 = vmatpush1.msra.mxu0 0.0
    %1606 = vmatprep.subr.mxu0 0.0
    %1607 = vmatpush1.msra.mxu0 0.0
    %1608 = vmatprep.subr.mxu0 0.0
    %1609 = vmatpush1.msra.mxu0 0.0
    %1610 = vmatprep.subr.mxu0 0.0
    %1611 = vmatpush1.msra.mxu0 0.0
    %1612 = vmatprep.subr.mxu0 0.0
    %1613 = vmatpush1.msra.mxu0 0.0
    %1614 = vmatprep.subr.mxu0 0.0
    %1615 = vmatpush1.msra.mxu0 0.0
    %1616 = vmatprep.subr.mxu0 0.0
    %1617 = vmatpush1.msra.mxu0 0.0
    %1618 = vmatprep.subr.mxu0 0.0
    %1619 = vmatpush1.msra.mxu0 0.0
    %1620 = vmatprep.subr.mxu0 0.0
    %1621 = vmatpush1.msra.mxu0 0.0
    %1622 = vmatprep.subr.mxu0 0.0
    %1623 = vmatpush1.msra.mxu0 0.0
    %1624 = vmatprep.subr.mxu0 0.0
    %1625 = vmatpush1.msra.mxu0 0.0
    %1626 = vmatprep.subr.mxu0 0.0
    %1627 = vmatpush1.msra.mxu0 0.0
    %1628 = vmatprep.subr.mxu0 0.0
    %1629 = vmatpush1.msra.mxu0 0.0
    %1630 = vmatprep.subr.mxu0 0.0
    %1631 = vmatpush1.msra.mxu0 0.0
    %1632 = vmatprep.subr.mxu0 0.0
    %1633 = vmatpush1.msra.mxu0 0.0
    %1634 = vmatprep.subr.mxu0 0.0
    %1635 = vmatpush1.msra.mxu0 0.0
    %1636 = vmatprep.subr.mxu0 0.0
    %1637 = vmatpush1.msra.mxu0 0.0
    %1638 = vmatprep.subr.mxu0 0.0
    %1639 = vmatpush1.msra.mxu0 0.0
    %1640 = vmatprep.subr.mxu0 0.0
    %1641 = vmatpush1.msra.mxu0 0.0
    %1642 = vmatprep.subr.mxu0 0.0
    %1643 = vmatpush1.msra.mxu0 0.0
    %1644 = vmatprep.subr.mxu0 0.0
    %1645 = vmatpush1.msra.mxu0 0.0
    %1646 = vmatprep.subr.mxu0 0.0
    %1647 = vmatpush1.msra.mxu0 0.0
    %1648 = vmatprep.subr.mxu0 0.0
    %1649 = vmatpush1.msra.mxu0 0.0
    %1650 = vmatprep.subr.mxu0 0.0
    %1651 = vmatpush1.msra.mxu0 0.0
    %1652 = vmatprep.subr.mxu0 0.0
    %1653 = vmatpush1.msra.mxu0 0.0
    %1654 = vmatprep.mubr.f32.mxu0 0.0
    %1655 = vmatmul.mubr.f32.gmra.mrb[0].mxu0 %v1588
    %v1656 = vpop.f32.mrb[0].mxu0
    %v1657 = vadd.f32 0.0, %v1656
    %v1658 = vpop.f32.mrb[0].mxu0
    %1659 = vdwg.mxu0
    %v1660 = vadd.f32 %v1133, %v1657
    %v1661 = vxor.u32 %v1660, 2147483648
    %v1662 = vmul.f32 %v1661, 1.442695
    %v1663 = vpow.pop %v1662
    %v1664 = vadd.f32 %v1663, 1.0
    %v1665 = vrcp.pop %v1664
    %v1666 = vmul.f32 1.0, %v1665
    %v1667 = vtanh.pop %v1660
    %v1669 = vrot.slane %v1570, 6
    %v1671 = vmul.f32 %v1666, %v1669
    %1673 = vrot.lane.b32.xlu0 %v1667, 64
    %v1674 = vpop.permute.xlu0 %1673
    %v1676 = vmul.f32 %v1666, %v1674
    %1678 = vrot.lane.b32.xlu0 %v1676, 32
    %v1679 = vpop.permute.xlu0 %1678
    %v1681 = vadd.f32 %v1671, %v1679
    %v1682 = vtanh.pop %v1681
    %1684 = vrot.lane.b32.xlu0 %v1682, 64
    %v1685 = vpop.permute.xlu0 %1684
    %v1687 = vmul.f32 %v1666, %v1685
    %1689 = vrot.lane.b32.xlu0 %v1687, 32
    %v1690 = vpop.permute.xlu0 %1689
    %1692 = vst.msk [vmem:[#allocation3 + $0x4] sm:$0x1] %vm1242, %v1690
    %1693 = vst.msk [vmem:[#allocation3 + $0xb] sm:$0x2] %vm1244, %v1690
    %v1694 = vsel %vm154, %v1690, 0
    %1696 = vmatprep.subr.mxu0 0.0
    %1697 = vmatpush1.msra.mxu0 %v1040
    %1698 = vmatprep.subr.mxu0 0.0
    %1699 = vmatpush1.msra.mxu0 %v1041
    %1700 = vmatprep.subr.mxu0 0.0
    %1701 = vmatpush1.msra.mxu0 %v1042
    %1702 = vmatprep.subr.mxu0 0.0
    %1703 = vmatpush1.msra.mxu0 %v1043
    %1704 = vmatprep.subr.mxu0 0.0
    %1705 = vmatpush1.msra.mxu0 0.0
    %1706 = vmatprep.subr.mxu0 0.0
    %1707 = vmatpush1.msra.mxu0 0.0
    %1708 = vmatprep.subr.mxu0 0.0
    %1709 = vmatpush1.msra.mxu0 0.0
    %1710 = vmatprep.subr.mxu0 0.0
    %1711 = vmatpush1.msra.mxu0 0.0
    %1712 = vmatprep.subr.mxu0 0.0
    %1713 = vmatpush1.msra.mxu0 0.0
    %1714 = vmatprep.subr.mxu0 0.0
    %1715 = vmatpush1.msra.mxu0 0.0
    %1716 = vmatprep.subr.mxu0 0.0
    %1717 = vmatpush1.msra.mxu0 0.0
    %1718 = vmatprep.subr.mxu0 0.0
    %1719 = vmatpush1.msra.mxu0 0.0
    %1720 = vmatprep.subr.mxu0 0.0
    %1721 = vmatpush1.msra.mxu0 0.0
    %1722 = vmatprep.subr.mxu0 0.0
    %1723 = vmatpush1.msra.mxu0 0.0
    %1724 = vmatprep.subr.mxu0 0.0
    %1725 = vmatpush1.msra.mxu0 0.0
    %1726 = vmatprep.subr.mxu0 0.0
    %1727 = vmatpush1.msra.mxu0 0.0
    %1728 = vmatprep.subr.mxu0 0.0
    %1729 = vmatpush1.msra.mxu0 0.0
    %1730 = vmatprep.subr.mxu0 0.0
    %1731 = vmatpush1.msra.mxu0 0.0
    %1732 = vmatprep.subr.mxu0 0.0
    %1733 = vmatpush1.msra.mxu0 0.0
    %1734 = vmatprep.subr.mxu0 0.0
    %1735 = vmatpush1.msra.mxu0 0.0
    %1736 = vmatprep.subr.mxu0 0.0
    %1737 = vmatpush1.msra.mxu0 0.0
    %1738 = vmatprep.subr.mxu0 0.0
    %1739 = vmatpush1.msra.mxu0 0.0
    %1740 = vmatprep.subr.mxu0 0.0
    %1741 = vmatpush1.msra.mxu0 0.0
    %1742 = vmatprep.subr.mxu0 0.0
    %1743 = vmatpush1.msra.mxu0 0.0
    %1744 = vmatprep.subr.mxu0 0.0
    %1745 = vmatpush1.msra.mxu0 0.0
    %1746 = vmatprep.subr.mxu0 0.0
    %1747 = vmatpush1.msra.mxu0 0.0
    %1748 = vmatprep.subr.mxu0 0.0
    %1749 = vmatpush1.msra.mxu0 0.0
    %1750 = vmatprep.subr.mxu0 0.0
    %1751 = vmatpush1.msra.mxu0 0.0
    %1752 = vmatprep.subr.mxu0 0.0
    %1753 = vmatpush1.msra.mxu0 0.0
    %1754 = vmatprep.subr.mxu0 0.0
    %1755 = vmatpush1.msra.mxu0 0.0
    %1756 = vmatprep.subr.mxu0 0.0
    %1757 = vmatpush1.msra.mxu0 0.0
    %1758 = vmatprep.subr.mxu0 0.0
    %1759 = vmatpush1.msra.mxu0 0.0
    %1760 = vmatprep.mubr.f32.mxu0 0.0
    %1761 = vmatmul.mubr.f32.gmra.mrb[0].mxu0 %v1694
    %v1762 = vpop.f32.mrb[0].mxu0
    %v1763 = vadd.f32 0.0, %v1762
    %v1764 = vpop.f32.mrb[0].mxu0
    %1765 = vdwg.mxu0
    %v1767 = vrot.slane %v1763, 6
    %v1769 = vadd.f32 %v1133, %v1767
    %v1770 = vxor.u32 %v1769, 2147483648
    %v1771 = vmul.f32 %v1770, 1.442695
    %v1772 = vpow.pop %v1771
    %v1773 = vadd.f32 %v1772, 1.0
    %v1774 = vrcp.pop %v1773
    %v1775 = vmul.f32 1.0, %v1774
    %v1776 = vtanh.pop %v1769
    %v1778 = vrot.slane %v1681, 6
    %v1780 = vmul.f32 %v1775, %v1778
    %1782 = vrot.lane.b32.xlu0 %v1776, 64
    %v1783 = vpop.permute.xlu0 %1782
    %v1785 = vmul.f32 %v1775, %v1783
    %1787 = vrot.lane.b32.xlu0 %v1785, 32
    %v1788 = vpop.permute.xlu0 %1787
    %v1790 = vadd.f32 %v1780, %v1788
    %v1791 = vtanh.pop %v1790
    %1793 = vrot.lane.b32.xlu0 %v1791, 64
    %v1794 = vpop.permute.xlu0 %1793
    %v1796 = vmul.f32 %v1775, %v1794
    %1798 = vrot.lane.b32.xlu0 %v1796, 32
    %v1799 = vpop.permute.xlu0 %1798
    %1801 = vst.msk [vmem:[#allocation3 + $0x3] sm:$0x4] %vm1353, %v1799
    %1802 = vst.msk [vmem:[#allocation3 + $0xa] sm:$0x8] %vm1355, %v1799
    %v1803 = vrot.slane %v1796, 2
    %1804 = vrot.lane.b32.xlu0 %v1803, 32
    %v1805 = vpop.permute.xlu0 %1804
    %v1806 = vsel %vm154, %v1805, 0
    %1808 = vmatprep.subr.mxu0 0.0
    %1809 = vmatpush1.msra.mxu0 %v1040
    %1810 = vmatprep.subr.mxu0 0.0
    %1811 = vmatpush1.msra.mxu0 %v1041
    %1812 = vmatprep.subr.mxu0 0.0
    %1813 = vmatpush1.msra.mxu0 %v1042
    %1814 = vmatprep.subr.mxu0 0.0
    %1815 = vmatpush1.msra.mxu0 %v1043
    %1816 = vmatprep.subr.mxu0 0.0
    %1817 = vmatpush1.msra.mxu0 0.0
    %1818 = vmatprep.subr.mxu0 0.0
    %1819 = vmatpush1.msra.mxu0 0.0
    %1820 = vmatprep.subr.mxu0 0.0
    %1821 = vmatpush1.msra.mxu0 0.0
    %1822 = vmatprep.subr.mxu0 0.0
    %1823 = vmatpush1.msra.mxu0 0.0
    %1824 = vmatprep.subr.mxu0 0.0
    %1825 = vmatpush1.msra.mxu0 0.0
    %1826 = vmatprep.subr.mxu0 0.0
    %1827 = vmatpush1.msra.mxu0 0.0
    %1828 = vmatprep.subr.mxu0 0.0
    %1829 = vmatpush1.msra.mxu0 0.0
    %1830 = vmatprep.subr.mxu0 0.0
    %1831 = vmatpush1.msra.mxu0 0.0
    %1832 = vmatprep.subr.mxu0 0.0
    %1833 = vmatpush1.msra.mxu0 0.0
    %1834 = vmatprep.subr.mxu0 0.0
    %1835 = vmatpush1.msra.mxu0 0.0
    %1836 = vmatprep.subr.mxu0 0.0
    %1837 = vmatpush1.msra.mxu0 0.0
    %1838 = vmatprep.subr.mxu0 0.0
    %1839 = vmatpush1.msra.mxu0 0.0
    %1840 = vmatprep.subr.mxu0 0.0
    %1841 = vmatpush1.msra.mxu0 0.0
    %1842 = vmatprep.subr.mxu0 0.0
    %1843 = vmatpush1.msra.mxu0 0.0
    %1844 = vmatprep.subr.mxu0 0.0
    %1845 = vmatpush1.msra.mxu0 0.0
    %1846 = vmatprep.subr.mxu0 0.0
    %1847 = vmatpush1.msra.mxu0 0.0
    %1848 = vmatprep.subr.mxu0 0.0
    %1849 = vmatpush1.msra.mxu0 0.0
    %1850 = vmatprep.subr.mxu0 0.0
    %1851 = vmatpush1.msra.mxu0 0.0
    %1852 = vmatprep.subr.mxu0 0.0
    %1853 = vmatpush1.msra.mxu0 0.0
    %1854 = vmatprep.subr.mxu0 0.0
    %1855 = vmatpush1.msra.mxu0 0.0
    %1856 = vmatprep.subr.mxu0 0.0
    %1857 = vmatpush1.msra.mxu0 0.0
    %1858 = vmatprep.subr.mxu0 0.0
    %1859 = vmatpush1.msra.mxu0 0.0
    %1860 = vmatprep.subr.mxu0 0.0
    %1861 = vmatpush1.msra.mxu0 0.0
    %1862 = vmatprep.subr.mxu0 0.0
    %1863 = vmatpush1.msra.mxu0 0.0
    %1864 = vmatprep.subr.mxu0 0.0
    %1865 = vmatpush1.msra.mxu0 0.0
    %1866 = vmatprep.subr.mxu0 0.0
    %1867 = vmatpush1.msra.mxu0 0.0
    %1868 = vmatprep.subr.mxu0 0.0
    %1869 = vmatpush1.msra.mxu0 0.0
    %1870 = vmatprep.subr.mxu0 0.0
    %1871 = vmatpush1.msra.mxu0 0.0
    %1872 = vmatprep.mubr.f32.mxu0 0.0
    %1873 = vmatmul.mubr.f32.gmra.mrb[0].mxu0 %v1806
    %v1874 = vpop.f32.mrb[0].mxu0
    %v1875 = vadd.f32 0.0, %v1874
    %v1876 = vpop.f32.mrb[0].mxu0
    %1877 = vdwg.mxu0
    %v1879 = vrot.slane %v1875, 4
    %v1881 = vadd.f32 %v1133, %v1879
    %v1882 = vxor.u32 %v1881, 2147483648
    %v1883 = vmul.f32 %v1882, 1.442695
    %v1884 = vpow.pop %v1883
    %v1885 = vadd.f32 %v1884, 1.0
    %v1886 = vrcp.pop %v1885
    %v1887 = vmul.f32 1.0, %v1886
    %v1888 = vtanh.pop %v1881
    %v1890 = vrot.slane %v1790, 6
    %v1892 = vmul.f32 %v1887, %v1890
    %1894 = vrot.lane.b32.xlu0 %v1888, 64
    %v1895 = vpop.permute.xlu0 %1894
    %v1897 = vmul.f32 %v1887, %v1895
    %1899 = vrot.lane.b32.xlu0 %v1897, 32
    %v1900 = vpop.permute.xlu0 %1899
    %v1902 = vadd.f32 %v1892, %v1900
    %v1903 = vtanh.pop %v1902
    %1905 = vrot.lane.b32.xlu0 %v1903, 64
    %v1906 = vpop.permute.xlu0 %1905
    %v1908 = vmul.f32 %v1887, %v1906
    %1910 = vrot.lane.b32.xlu0 %v1908, 32
    %v1911 = vpop.permute.xlu0 %1910
    %1913 = vst.msk [vmem:[#allocation3 + $0x2] sm:$0x10] %vm1467, %v1911
    %1914 = vst.msk [vmem:[#allocation3 + $0x9] sm:$0x20] %vm1469, %v1911
    %v1915 = vrot.slane %v1908, 4
    %1916 = vrot.lane.b32.xlu0 %v1915, 32
    %v1917 = vpop.permute.xlu0 %1916
    %v1918 = vsel %vm154, %v1917, 0
    %1920 = vmatprep.subr.mxu0 0.0
    %1921 = vmatpush1.msra.mxu0 %v1040
    %1922 = vmatprep.subr.mxu0 0.0
    %1923 = vmatpush1.msra.mxu0 %v1041
    %1924 = vmatprep.subr.mxu0 0.0
    %1925 = vmatpush1.msra.mxu0 %v1042
    %1926 = vmatprep.subr.mxu0 0.0
    %1927 = vmatpush1.msra.mxu0 %v1043
    %1928 = vmatprep.subr.mxu0 0.0
    %1929 = vmatpush1.msra.mxu0 0.0
    %1930 = vmatprep.subr.mxu0 0.0
    %1931 = vmatpush1.msra.mxu0 0.0
    %1932 = vmatprep.subr.mxu0 0.0
    %1933 = vmatpush1.msra.mxu0 0.0
    %1934 = vmatprep.subr.mxu0 0.0
    %1935 = vmatpush1.msra.mxu0 0.0
    %1936 = vmatprep.subr.mxu0 0.0
    %1937 = vmatpush1.msra.mxu0 0.0
    %1938 = vmatprep.subr.mxu0 0.0
    %1939 = vmatpush1.msra.mxu0 0.0
    %1940 = vmatprep.subr.mxu0 0.0
    %1941 = vmatpush1.msra.mxu0 0.0
    %1942 = vmatprep.subr.mxu0 0.0
    %1943 = vmatpush1.msra.mxu0 0.0
    %1944 = vmatprep.subr.mxu0 0.0
    %1945 = vmatpush1.msra.mxu0 0.0
    %1946 = vmatprep.subr.mxu0 0.0
    %1947 = vmatpush1.msra.mxu0 0.0
    %1948 = vmatprep.subr.mxu0 0.0
    %1949 = vmatpush1.msra.mxu0 0.0
    %1950 = vmatprep.subr.mxu0 0.0
    %1951 = vmatpush1.msra.mxu0 0.0
    %1952 = vmatprep.subr.mxu0 0.0
    %1953 = vmatpush1.msra.mxu0 0.0
    %1954 = vmatprep.subr.mxu0 0.0
    %1955 = vmatpush1.msra.mxu0 0.0
    %1956 = vmatprep.subr.mxu0 0.0
    %1957 = vmatpush1.msra.mxu0 0.0
    %1958 = vmatprep.subr.mxu0 0.0
    %1959 = vmatpush1.msra.mxu0 0.0
    %1960 = vmatprep.subr.mxu0 0.0
    %1961 = vmatpush1.msra.mxu0 0.0
    %1962 = vmatprep.subr.mxu0 0.0
    %1963 = vmatpush1.msra.mxu0 0.0
    %1964 = vmatprep.subr.mxu0 0.0
    %1965 = vmatpush1.msra.mxu0 0.0
    %1966 = vmatprep.subr.mxu0 0.0
    %1967 = vmatpush1.msra.mxu0 0.0
    %1968 = vmatprep.subr.mxu0 0.0
    %1969 = vmatpush1.msra.mxu0 0.0
    %1970 = vmatprep.subr.mxu0 0.0
    %1971 = vmatpush1.msra.mxu0 0.0
    %1972 = vmatprep.subr.mxu0 0.0
    %1973 = vmatpush1.msra.mxu0 0.0
    %1974 = vmatprep.subr.mxu0 0.0
    %1975 = vmatpush1.msra.mxu0 0.0
    %1976 = vmatprep.subr.mxu0 0.0
    %1977 = vmatpush1.msra.mxu0 0.0
    %1978 = vmatprep.subr.mxu0 0.0
    %1979 = vmatpush1.msra.mxu0 0.0
    %1980 = vmatprep.subr.mxu0 0.0
    %1981 = vmatpush1.msra.mxu0 0.0
    %1982 = vmatprep.subr.mxu0 0.0
    %1983 = vmatpush1.msra.mxu0 0.0
    %1984 = vmatprep.mubr.f32.mxu0 0.0
    %1985 = vmatmul.mubr.f32.gmra.mrb[0].mxu0 %v1918
    %v1986 = vpop.f32.mrb[0].mxu0
    %v1987 = vadd.f32 0.0, %v1986
    %v1988 = vpop.f32.mrb[0].mxu0
    %1989 = vdwg.mxu0
    %v1991 = vrot.slane %v1987, 2
    %v1993 = vadd.f32 %v1133, %v1991
    %v1994 = vxor.u32 %v1993, 2147483648
    %v1995 = vmul.f32 %v1994, 1.442695
    %v1996 = vpow.pop %v1995
    %v1997 = vadd.f32 %v1996, 1.0
    %v1998 = vrcp.pop %v1997
    %v1999 = vmul.f32 1.0, %v1998
    %v2000 = vtanh.pop %v1993
    %v2002 = vrot.slane %v1902, 6
    %v2004 = vmul.f32 %v1999, %v2002
    %2006 = vrot.lane.b32.xlu0 %v2000, 64
    %v2007 = vpop.permute.xlu0 %2006
    %v2009 = vmul.f32 %v1999, %v2007
    %2011 = vrot.lane.b32.xlu0 %v2009, 32
    %v2012 = vpop.permute.xlu0 %2011
    %v2014 = vadd.f32 %v2004, %v2012
    %v2015 = vtanh.pop %v2014
    %2017 = vrot.lane.b32.xlu0 %v2015, 64
    %v2018 = vpop.permute.xlu0 %2017
    %v2020 = vmul.f32 %v1999, %v2018
    %2022 = vrot.lane.b32.xlu0 %v2020, 32
    %v2023 = vpop.permute.xlu0 %2022
    %2025 = vst.msk [vmem:[#allocation3 + $0x1] sm:$0x40] %vm1581, %v2023
    %2026 = vst.msk [vmem:[#allocation3 + $0x8] sm:$0x80] %vm1583, %v2023
    %v2027 = vld [vmem:[%s3] sm:$0xf]
    %v2028 = vld [vmem:[%s11] sm:$0xff]
    %v2029 = vld [vmem:[%s11 + $0x8] sm:$0xff]
    %v2030 = vld [vmem:[%s11 + $0x10] sm:$0xff]
    %v2031 = vld [vmem:[%s11 + $0x18] sm:$0xff]
    %v2033 = vsel %vm154, %v2027, 0
    %2035 = vmatprep.subr.mxu0 0.0
    %2036 = vmatpush1.msra.mxu0 %v2028
    %2037 = vmatprep.subr.mxu0 0.0
    %2038 = vmatpush1.msra.mxu0 %v2029
    %2039 = vmatprep.subr.mxu0 0.0
    %2040 = vmatpush1.msra.mxu0 %v2030
    %2041 = vmatprep.subr.mxu0 0.0
    %2042 = vmatpush1.msra.mxu0 %v2031
    %2043 = vmatprep.subr.mxu0 0.0
    %2044 = vmatpush1.msra.mxu0 0.0
    %2045 = vmatprep.subr.mxu0 0.0
    %2046 = vmatpush1.msra.mxu0 0.0
    %2047 = vmatprep.subr.mxu0 0.0
    %2048 = vmatpush1.msra.mxu0 0.0
    %2049 = vmatprep.subr.mxu0 0.0
    %2050 = vmatpush1.msra.mxu0 0.0
    %2051 = vmatprep.subr.mxu0 0.0
    %2052 = vmatpush1.msra.mxu0 0.0
    %2053 = vmatprep.subr.mxu0 0.0
    %2054 = vmatpush1.msra.mxu0 0.0
    %2055 = vmatprep.subr.mxu0 0.0
    %2056 = vmatpush1.msra.mxu0 0.0
    %2057 = vmatprep.subr.mxu0 0.0
    %2058 = vmatpush1.msra.mxu0 0.0
    %2059 = vmatprep.subr.mxu0 0.0
    %2060 = vmatpush1.msra.mxu0 0.0
    %2061 = vmatprep.subr.mxu0 0.0
    %2062 = vmatpush1.msra.mxu0 0.0
    %2063 = vmatprep.subr.mxu0 0.0
    %2064 = vmatpush1.msra.mxu0 0.0
    %2065 = vmatprep.subr.mxu0 0.0
    %2066 = vmatpush1.msra.mxu0 0.0
    %2067 = vmatprep.subr.mxu0 0.0
    %2068 = vmatpush1.msra.mxu0 0.0
    %2069 = vmatprep.subr.mxu0 0.0
    %2070 = vmatpush1.msra.mxu0 0.0
    %2071 = vmatprep.subr.mxu0 0.0
    %2072 = vmatpush1.msra.mxu0 0.0
    %2073 = vmatprep.subr.mxu0 0.0
    %2074 = vmatpush1.msra.mxu0 0.0
    %2075 = vmatprep.subr.mxu0 0.0
    %2076 = vmatpush1.msra.mxu0 0.0
    %2077 = vmatprep.subr.mxu0 0.0
    %2078 = vmatpush1.msra.mxu0 0.0
    %2079 = vmatprep.subr.mxu0 0.0
    %2080 = vmatpush1.msra.mxu0 0.0
    %2081 = vmatprep.subr.mxu0 0.0
    %2082 = vmatpush1.msra.mxu0 0.0
    %2083 = vmatprep.subr.mxu0 0.0
    %2084 = vmatpush1.msra.mxu0 0.0
    %2085 = vmatprep.subr.mxu0 0.0
    %2086 = vmatpush1.msra.mxu0 0.0
    %2087 = vmatprep.subr.mxu0 0.0
    %2088 = vmatpush1.msra.mxu0 0.0
    %2089 = vmatprep.subr.mxu0 0.0
    %2090 = vmatpush1.msra.mxu0 0.0
    %2091 = vmatprep.subr.mxu0 0.0
    %2092 = vmatpush1.msra.mxu0 0.0
    %2093 = vmatprep.subr.mxu0 0.0
    %2094 = vmatpush1.msra.mxu0 0.0
    %2095 = vmatprep.subr.mxu0 0.0
    %2096 = vmatpush1.msra.mxu0 0.0
    %2097 = vmatprep.subr.mxu0 0.0
    %2098 = vmatpush1.msra.mxu0 0.0
    %2099 = vmatprep.mubr.f32.mxu0 0.0
    %2100 = vmatmul.mubr.f32.gmra.mrb[0].mxu0 %v2033
    %v2101 = vpop.f32.mrb[0].mxu0
    %v2102 = vadd.f32 0.0, %v2101
    %v2103 = vpop.f32.mrb[0].mxu0
    %2104 = vdwg.mxu0
    %v2105 = vld [vmem:[%s12] sm:$0xff]
    %v2106 = vld [vmem:[%s12 + $0x8] sm:$0xff]
    %v2107 = vld [vmem:[%s12 + $0x10] sm:$0xff]
    %v2108 = vld [vmem:[%s12 + $0x18] sm:$0xff]
    %2109 = vmatprep.subr.mxu0 0.0
    %2110 = vmatpush1.msra.mxu0 %v2105
    %2111 = vmatprep.subr.mxu0 0.0
    %2112 = vmatpush1.msra.mxu0 %v2106
    %2113 = vmatprep.subr.mxu0 0.0
    %2114 = vmatpush1.msra.mxu0 %v2107
    %2115 = vmatprep.subr.mxu0 0.0
    %2116 = vmatpush1.msra.mxu0 %v2108
    %2117 = vmatprep.subr.mxu0 0.0
    %2118 = vmatpush1.msra.mxu0 0.0
    %2119 = vmatprep.subr.mxu0 0.0
    %2120 = vmatpush1.msra.mxu0 0.0
    %2121 = vmatprep.subr.mxu0 0.0
    %2122 = vmatpush1.msra.mxu0 0.0
    %2123 = vmatprep.subr.mxu0 0.0
    %2124 = vmatpush1.msra.mxu0 0.0
    %2125 = vmatprep.subr.mxu0 0.0
    %2126 = vmatpush1.msra.mxu0 0.0
    %2127 = vmatprep.subr.mxu0 0.0
    %2128 = vmatpush1.msra.mxu0 0.0
    %2129 = vmatprep.subr.mxu0 0.0
    %2130 = vmatpush1.msra.mxu0 0.0
    %2131 = vmatprep.subr.mxu0 0.0
    %2132 = vmatpush1.msra.mxu0 0.0
    %2133 = vmatprep.subr.mxu0 0.0
    %2134 = vmatpush1.msra.mxu0 0.0
    %2135 = vmatprep.subr.mxu0 0.0
    %2136 = vmatpush1.msra.mxu0 0.0
    %2137 = vmatprep.subr.mxu0 0.0
    %2138 = vmatpush1.msra.mxu0 0.0
    %2139 = vmatprep.subr.mxu0 0.0
    %2140 = vmatpush1.msra.mxu0 0.0
    %2141 = vmatprep.subr.mxu0 0.0
    %2142 = vmatpush1.msra.mxu0 0.0
    %2143 = vmatprep.subr.mxu0 0.0
    %2144 = vmatpush1.msra.mxu0 0.0
    %2145 = vmatprep.subr.mxu0 0.0
    %2146 = vmatpush1.msra.mxu0 0.0
    %2147 = vmatprep.subr.mxu0 0.0
    %2148 = vmatpush1.msra.mxu0 0.0
    %2149 = vmatprep.subr.mxu0 0.0
    %2150 = vmatpush1.msra.mxu0 0.0
    %2151 = vmatprep.subr.mxu0 0.0
    %2152 = vmatpush1.msra.mxu0 0.0
    %2153 = vmatprep.subr.mxu0 0.0
    %2154 = vmatpush1.msra.mxu0 0.0
    %2155 = vmatprep.subr.mxu0 0.0
    %2156 = vmatpush1.msra.mxu0 0.0
    %2157 = vmatprep.subr.mxu0 0.0
    %2158 = vmatpush1.msra.mxu0 0.0
    %2159 = vmatprep.subr.mxu0 0.0
    %2160 = vmatpush1.msra.mxu0 0.0
    %2161 = vmatprep.subr.mxu0 0.0
    %2162 = vmatpush1.msra.mxu0 0.0
    %2163 = vmatprep.subr.mxu0 0.0
    %2164 = vmatpush1.msra.mxu0 0.0
    %2165 = vmatprep.subr.mxu0 0.0
    %2166 = vmatpush1.msra.mxu0 0.0
    %2167 = vmatprep.subr.mxu0 0.0
    %2168 = vmatpush1.msra.mxu0 0.0
    %2169 = vmatprep.subr.mxu0 0.0
    %2170 = vmatpush1.msra.mxu0 0.0
    %2171 = vmatprep.subr.mxu0 0.0
    %2172 = vmatpush1.msra.mxu0 0.0
    %2173 = vmatprep.mubr.f32.mxu0 0.0
    %2174 = vmatmul.mubr.f32.gmra.mrb[0].mxu0 %v2033
    %v2175 = vpop.f32.mrb[0].mxu0
    %v2176 = vadd.f32 0.0, %v2175
    %v2177 = vpop.f32.mrb[0].mxu0
    %2178 = vdwg.mxu0
    %v2179 = vld [vmem:[%s10] sm:$0xff]
    %v2180 = vld [vmem:[%s10 + $0x8] sm:$0xff]
    %v2181 = vld [vmem:[%s10 + $0x10] sm:$0xff]
    %v2182 = vld [vmem:[%s10 + $0x18] sm:$0xff]
    %v2183 = vld [vmem:[%s13] sm:$0xff]
    %v2184 = vld [vmem:[%s13 + $0x8] sm:$0xff]
    %v2185 = vld [vmem:[%s15] sm:$0x1]
    %v2186 = vld [vmem:[#allocation3] sm:$0xff]
    %v2188 = vsel %vm154, %v2186, 0
    %2190 = vmatprep.subr.mxu0 0.0
    %2191 = vmatpush1.msra.mxu0 %v2179
    %2192 = vmatprep.subr.mxu0 0.0
    %2193 = vmatpush1.msra.mxu0 %v2180
    %2194 = vmatprep.subr.mxu0 0.0
    %2195 = vmatpush1.msra.mxu0 %v2181
    %2196 = vmatprep.subr.mxu0 0.0
    %2197 = vmatpush1.msra.mxu0 %v2182
    %2198 = vmatprep.subr.mxu0 0.0
    %2199 = vmatpush1.msra.mxu0 0.0
    %2200 = vmatprep.subr.mxu0 0.0
    %2201 = vmatpush1.msra.mxu0 0.0
    %2202 = vmatprep.subr.mxu0 0.0
    %2203 = vmatpush1.msra.mxu0 0.0
    %2204 = vmatprep.subr.mxu0 0.0
    %2205 = vmatpush1.msra.mxu0 0.0
    %2206 = vmatprep.subr.mxu0 0.0
    %2207 = vmatpush1.msra.mxu0 0.0
    %2208 = vmatprep.subr.mxu0 0.0
    %2209 = vmatpush1.msra.mxu0 0.0
    %2210 = vmatprep.subr.mxu0 0.0
    %2211 = vmatpush1.msra.mxu0 0.0
    %2212 = vmatprep.subr.mxu0 0.0
    %2213 = vmatpush1.msra.mxu0 0.0
    %2214 = vmatprep.subr.mxu0 0.0
    %2215 = vmatpush1.msra.mxu0 0.0
    %2216 = vmatprep.subr.mxu0 0.0
    %2217 = vmatpush1.msra.mxu0 0.0
    %2218 = vmatprep.subr.mxu0 0.0
    %2219 = vmatpush1.msra.mxu0 0.0
    %2220 = vmatprep.subr.mxu0 0.0
    %2221 = vmatpush1.msra.mxu0 0.0
    %2222 = vmatprep.subr.mxu0 0.0
    %2223 = vmatpush1.msra.mxu0 0.0
    %2224 = vmatprep.subr.mxu0 0.0
    %2225 = vmatpush1.msra.mxu0 0.0
    %2226 = vmatprep.subr.mxu0 0.0
    %2227 = vmatpush1.msra.mxu0 0.0
    %2228 = vmatprep.subr.mxu0 0.0
    %2229 = vmatpush1.msra.mxu0 0.0
    %2230 = vmatprep.subr.mxu0 0.0
    %2231 = vmatpush1.msra.mxu0 0.0
    %2232 = vmatprep.subr.mxu0 0.0
    %2233 = vmatpush1.msra.mxu0 0.0
    %2234 = vmatprep.subr.mxu0 0.0
    %2235 = vmatpush1.msra.mxu0 0.0
    %2236 = vmatprep.subr.mxu0 0.0
    %2237 = vmatpush1.msra.mxu0 0.0
    %2238 = vmatprep.subr.mxu0 0.0
    %2239 = vmatpush1.msra.mxu0 0.0
    %2240 = vmatprep.subr.mxu0 0.0
    %2241 = vmatpush1.msra.mxu0 0.0
    %2242 = vmatprep.subr.mxu0 0.0
    %2243 = vmatpush1.msra.mxu0 0.0
    %2244 = vmatprep.subr.mxu0 0.0
    %2245 = vmatpush1.msra.mxu0 0.0
    %2246 = vmatprep.subr.mxu0 0.0
    %2247 = vmatpush1.msra.mxu0 0.0
    %2248 = vmatprep.subr.mxu0 0.0
    %2249 = vmatpush1.msra.mxu0 0.0
    %2250 = vmatprep.subr.mxu0 0.0
    %2251 = vmatpush1.msra.mxu0 0.0
    %2252 = vmatprep.subr.mxu0 0.0
    %2253 = vmatpush1.msra.mxu0 0.0
    %2254 = vmatprep.mubr.f32.mxu0 0.0
    %2255 = vmatmul.mubr.f32.gmra.mrb[0].mxu0 %v2188
    %v2256 = vpop.f32.mrb[0].mxu0
    %v2257 = vadd.f32 0.0, %v2256
    %v2258 = vpop.f32.mrb[0].mxu0
    %2259 = vdwg.mxu0
    %v2261 = vsel %vm72, %v2257, 0
    %v2264 = vsel %vm72, %v2102, 0
    %2266 = vmatprep.subr.mxu0 0.0
    %2267 = vmatpush1.xpose.msra.mxu0 %v2264
    %2268 = vmatprep.subr.mxu0 0.0
    %2269 = vmatpush1.xpose.msra.mxu0 0.0
    %2270 = vmatprep.subr.mxu0 0.0
    %2271 = vmatpush1.xpose.msra.mxu0 0.0
    %2272 = vmatprep.subr.mxu0 0.0
    %2273 = vmatpush1.xpose.msra.mxu0 0.0
    %2274 = vmatprep.subr.mxu0 0.0
    %2275 = vmatpush1.xpose.msra.mxu0 0.0
    %2276 = vmatprep.subr.mxu0 0.0
    %2277 = vmatpush1.xpose.msra.mxu0 0.0
    %2278 = vmatprep.subr.mxu0 0.0
    %2279 = vmatpush1.xpose.msra.mxu0 0.0
    %2280 = vmatprep.subr.mxu0 0.0
    %2281 = vmatpush1.xpose.msra.mxu0 0.0
    %2282 = vmatprep.subr.mxu0 0.0
    %2283 = vmatpush1.xpose.msra.mxu0 0.0
    %2284 = vmatprep.subr.mxu0 0.0
    %2285 = vmatpush1.xpose.msra.mxu0 0.0
    %2286 = vmatprep.subr.mxu0 0.0
    %2287 = vmatpush1.xpose.msra.mxu0 0.0
    %2288 = vmatprep.subr.mxu0 0.0
    %2289 = vmatpush1.xpose.msra.mxu0 0.0
    %2290 = vmatprep.subr.mxu0 0.0
    %2291 = vmatpush1.xpose.msra.mxu0 0.0
    %2292 = vmatprep.subr.mxu0 0.0
    %2293 = vmatpush1.xpose.msra.mxu0 0.0
    %2294 = vmatprep.subr.mxu0 0.0
    %2295 = vmatpush1.xpose.msra.mxu0 0.0
    %2296 = vmatprep.subr.mxu0 0.0
    %2297 = vmatpush1.xpose.msra.mxu0 0.0
    %2298 = vmatprep.subr.mxu0 0.0
    %2299 = vmatpush1.xpose.msra.mxu0 0.0
    %2300 = vmatprep.subr.mxu0 0.0
    %2301 = vmatpush1.xpose.msra.mxu0 0.0
    %2302 = vmatprep.subr.mxu0 0.0
    %2303 = vmatpush1.xpose.msra.mxu0 0.0
    %2304 = vmatprep.subr.mxu0 0.0
    %2305 = vmatpush1.xpose.msra.mxu0 0.0
    %2306 = vmatprep.subr.mxu0 0.0
    %2307 = vmatpush1.xpose.msra.mxu0 0.0
    %2308 = vmatprep.subr.mxu0 0.0
    %2309 = vmatpush1.xpose.msra.mxu0 0.0
    %2310 = vmatprep.subr.mxu0 0.0
    %2311 = vmatpush1.xpose.msra.mxu0 0.0
    %2312 = vmatprep.subr.mxu0 0.0
    %2313 = vmatpush1.xpose.msra.mxu0 0.0
    %2314 = vmatprep.subr.mxu0 0.0
    %2315 = vmatpush1.xpose.msra.mxu0 0.0
    %2316 = vmatprep.subr.mxu0 0.0
    %2317 = vmatpush1.xpose.msra.mxu0 0.0
    %2318 = vmatprep.subr.mxu0 0.0
    %2319 = vmatpush1.xpose.msra.mxu0 0.0
    %2320 = vmatprep.subr.mxu0 0.0
    %2321 = vmatpush1.xpose.msra.mxu0 0.0
    %2322 = vmatprep.subr.mxu0 0.0
    %2323 = vmatpush1.xpose.msra.mxu0 0.0
    %2324 = vmatprep.subr.mxu0 0.0
    %2325 = vmatpush1.xpose.msra.mxu0 0.0
    %2326 = vmatprep.subr.mxu0 0.0
    %2327 = vmatpush1.xpose.msra.mxu0 0.0
    %2328 = vmatprep.subr.mxu0 0.0
    %2329 = vmatpush1.xpose.msra.mxu0 0.0
    %2330 = vmatprep.mubr.f32.mxu0 0.0
    %2331 = vmatmul.mubr.f32.gmra.mrb[0].mxu0 %v2261
    %v2332 = vpop.f32.mrb[0].mxu0
    %v2333 = vadd.f32 0.0, %v2332
    %v2334 = vpop.f32.mrb[0].mxu0
    %2335 = vdwg.mxu0
    %v2336 = vmul.f32 %v2333, 0.35355338
    %vm2337 = vcmask 15360
    %v2338 = vsel %vm2337, %v2336, -inf
    %2339 = vmax.xlane.f32.xlu0 %v2338
    %v2340 = vpop.xlane.xlu0 %2339
    %v2341 = vsub.f32 %v2336, %v2340
    %v2342 = vmul.f32 %v2341, 1.442695
    %v2343 = vpow.pop %v2342
    %v2344 = vsel %vm2337, %v2343, 0.0
    %2345 = vadd.xlane.f32.xlu0 %v2344
    %v2346 = vpop.xlane.xlu0 %2345
    %v2347 = vrcp.pop %v2346
    %v2348 = vmul.f32 %v2343, %v2347
    %2349 = vst.msk [vmem:[%s17] sm:$0xff] %vm2337, %v2348
    %v2351 = vsel %vm2337, %v2348, 0
    %vm2353 = vcmask 1041408
    %v2355 = vsel %vm2353, %v2176, 0
    %2357 = vmatprep.subr.mxu0 0.0
    %2358 = vmatpush1.msra.mxu0 %v2355
    %2359 = vmatprep.subr.mxu0 0.0
    %2360 = vmatpush1.msra.mxu0 0.0
    %2361 = vmatprep.subr.mxu0 0.0
    %2362 = vmatpush1.msra.mxu0 0.0
    %2363 = vmatprep.subr.mxu0 0.0
    %2364 = vmatpush1.msra.mxu0 0.0
    %2365 = vmatprep.subr.mxu0 0.0
    %2366 = vmatpush1.msra.mxu0 0.0
    %2367 = vmatprep.subr.mxu0 0.0
    %2368 = vmatpush1.msra.mxu0 0.0
    %2369 = vmatprep.subr.mxu0 0.0
    %2370 = vmatpush1.msra.mxu0 0.0
    %2371 = vmatprep.subr.mxu0 0.0
    %2372 = vmatpush1.msra.mxu0 0.0
    %2373 = vmatprep.subr.mxu0 0.0
    %2374 = vmatpush1.msra.mxu0 0.0
    %2375 = vmatprep.subr.mxu0 0.0
    %2376 = vmatpush1.msra.mxu0 0.0
    %2377 = vmatprep.subr.mxu0 0.0
    %2378 = vmatpush1.msra.mxu0 0.0
    %2379 = vmatprep.subr.mxu0 0.0
    %2380 = vmatpush1.msra.mxu0 0.0
    %2381 = vmatprep.subr.mxu0 0.0
    %2382 = vmatpush1.msra.mxu0 0.0
    %2383 = vmatprep.subr.mxu0 0.0
    %2384 = vmatpush1.msra.mxu0 0.0
    %2385 = vmatprep.subr.mxu0 0.0
    %2386 = vmatpush1.msra.mxu0 0.0
    %2387 = vmatprep.subr.mxu0 0.0
    %2388 = vmatpush1.msra.mxu0 0.0
    %2389 = vmatprep.subr.mxu0 0.0
    %2390 = vmatpush1.msra.mxu0 0.0
    %2391 = vmatprep.subr.mxu0 0.0
    %2392 = vmatpush1.msra.mxu0 0.0
    %2393 = vmatprep.subr.mxu0 0.0
    %2394 = vmatpush1.msra.mxu0 0.0
    %2395 = vmatprep.subr.mxu0 0.0
    %2396 = vmatpush1.msra.mxu0 0.0
    %2397 = vmatprep.subr.mxu0 0.0
    %2398 = vmatpush1.msra.mxu0 0.0
    %2399 = vmatprep.subr.mxu0 0.0
    %2400 = vmatpush1.msra.mxu0 0.0
    %2401 = vmatprep.subr.mxu0 0.0
    %2402 = vmatpush1.msra.mxu0 0.0
    %2403 = vmatprep.subr.mxu0 0.0
    %2404 = vmatpush1.msra.mxu0 0.0
    %2405 = vmatprep.subr.mxu0 0.0
    %2406 = vmatpush1.msra.mxu0 0.0
    %2407 = vmatprep.subr.mxu0 0.0
    %2408 = vmatpush1.msra.mxu0 0.0
    %2409 = vmatprep.subr.mxu0 0.0
    %2410 = vmatpush1.msra.mxu0 0.0
    %2411 = vmatprep.subr.mxu0 0.0
    %2412 = vmatpush1.msra.mxu0 0.0
    %2413 = vmatprep.subr.mxu0 0.0
    %2414 = vmatpush1.msra.mxu0 0.0
    %2415 = vmatprep.subr.mxu0 0.0
    %2416 = vmatpush1.msra.mxu0 0.0
    %2417 = vmatprep.subr.mxu0 0.0
    %2418 = vmatpush1.msra.mxu0 0.0
    %2419 = vmatprep.subr.mxu0 0.0
    %2420 = vmatpush1.msra.mxu0 0.0
    %2421 = vmatprep.mubr.f32.mxu0 0.0
    %2422 = vmatmul.mubr.f32.gmra.mrb[0].mxu0 %v2351
    %v2423 = vpop.f32.mrb[0].mxu0
    %v2424 = vadd.f32 0.0, %v2423
    %v2425 = vpop.f32.mrb[0].mxu0
    %2426 = vdwg.mxu0
    %2427 = vrot.lane.b32.xlu0 %v2257, 120
    %v2428 = vpop.permute.xlu0 %2427
    %2429 = vrot.lane.b32.xlu0 %v2102, 120
    %v2430 = vpop.permute.xlu0 %2429
    %v2431 = vsel %vm72, %v2428, 0
    %v2433 = vsel %vm72, %v2430, 0
    %2435 = vmatprep.subr.mxu0 0.0
    %2436 = vmatpush1.xpose.msra.mxu0 %v2433
    %2437 = vmatprep.subr.mxu0 0.0
    %2438 = vmatpush1.xpose.msra.mxu0 0.0
    %2439 = vmatprep.subr.mxu0 0.0
    %2440 = vmatpush1.xpose.msra.mxu0 0.0
    %2441 = vmatprep.subr.mxu0 0.0
    %2442 = vmatpush1.xpose.msra.mxu0 0.0
    %2443 = vmatprep.subr.mxu0 0.0
    %2444 = vmatpush1.xpose.msra.mxu0 0.0
    %2445 = vmatprep.subr.mxu0 0.0
    %2446 = vmatpush1.xpose.msra.mxu0 0.0
    %2447 = vmatprep.subr.mxu0 0.0
    %2448 = vmatpush1.xpose.msra.mxu0 0.0
    %2449 = vmatprep.subr.mxu0 0.0
    %2450 = vmatpush1.xpose.msra.mxu0 0.0
    %2451 = vmatprep.subr.mxu0 0.0
    %2452 = vmatpush1.xpose.msra.mxu0 0.0
    %2453 = vmatprep.subr.mxu0 0.0
    %2454 = vmatpush1.xpose.msra.mxu0 0.0
    %2455 = vmatprep.subr.mxu0 0.0
    %2456 = vmatpush1.xpose.msra.mxu0 0.0
    %2457 = vmatprep.subr.mxu0 0.0
    %2458 = vmatpush1.xpose.msra.mxu0 0.0
    %2459 = vmatprep.subr.mxu0 0.0
    %2460 = vmatpush1.xpose.msra.mxu0 0.0
    %2461 = vmatprep.subr.mxu0 0.0
    %2462 = vmatpush1.xpose.msra.mxu0 0.0
    %2463 = vmatprep.subr.mxu0 0.0
    %2464 = vmatpush1.xpose.msra.mxu0 0.0
    %2465 = vmatprep.subr.mxu0 0.0
    %2466 = vmatpush1.xpose.msra.mxu0 0.0
    %2467 = vmatprep.subr.mxu0 0.0
    %2468 = vmatpush1.xpose.msra.mxu0 0.0
    %2469 = vmatprep.subr.mxu0 0.0
    %2470 = vmatpush1.xpose.msra.mxu0 0.0
    %2471 = vmatprep.subr.mxu0 0.0
    %2472 = vmatpush1.xpose.msra.mxu0 0.0
    %2473 = vmatprep.subr.mxu0 0.0
    %2474 = vmatpush1.xpose.msra.mxu0 0.0
    %2475 = vmatprep.subr.mxu0 0.0
    %2476 = vmatpush1.xpose.msra.mxu0 0.0
    %2477 = vmatprep.subr.mxu0 0.0
    %2478 = vmatpush1.xpose.msra.mxu0 0.0
    %2479 = vmatprep.subr.mxu0 0.0
    %2480 = vmatpush1.xpose.msra.mxu0 0.0
    %2481 = vmatprep.subr.mxu0 0.0
    %2482 = vmatpush1.xpose.msra.mxu0 0.0
    %2483 = vmatprep.subr.mxu0 0.0
    %2484 = vmatpush1.xpose.msra.mxu0 0.0
    %2485 = vmatprep.subr.mxu0 0.0
    %2486 = vmatpush1.xpose.msra.mxu0 0.0
    %2487 = vmatprep.subr.mxu0 0.0
    %2488 = vmatpush1.xpose.msra.mxu0 0.0
    %2489 = vmatprep.subr.mxu0 0.0
    %2490 = vmatpush1.xpose.msra.mxu0 0.0
    %2491 = vmatprep.subr.mxu0 0.0
    %2492 = vmatpush1.xpose.msra.mxu0 0.0
    %2493 = vmatprep.subr.mxu0 0.0
    %2494 = vmatpush1.xpose.msra.mxu0 0.0
    %2495 = vmatprep.subr.mxu0 0.0
    %2496 = vmatpush1.xpose.msra.mxu0 0.0
    %2497 = vmatprep.subr.mxu0 0.0
    %2498 = vmatpush1.xpose.msra.mxu0 0.0
    %2499 = vmatprep.mubr.f32.mxu0 0.0
    %2500 = vmatmul.mubr.f32.gmra.mrb[0].mxu0 %v2431
    %v2501 = vpop.f32.mrb[0].mxu0
    %v2502 = vadd.f32 0.0, %v2501
    %v2503 = vpop.f32.mrb[0].mxu0
    %2504 = vdwg.mxu0
    %v2505 = vmul.f32 %v2502, 0.35355338
    %v2506 = vsel %vm2337, %v2505, -inf
    %2507 = vmax.xlane.f32.xlu0 %v2506
    %v2508 = vpop.xlane.xlu0 %2507
    %v2509 = vsub.f32 %v2505, %v2508
    %v2510 = vmul.f32 %v2509, 1.442695
    %v2511 = vpow.pop %v2510
    %v2512 = vsel %vm2337, %v2511, 0.0
    %2513 = vadd.xlane.f32.xlu0 %v2512
    %v2514 = vpop.xlane.xlu0 %2513
    %v2515 = vrcp.pop %v2514
    %v2516 = vmul.f32 %v2511, %v2515
    %s2517 = scalar_lea.vmem %s17, 8
    %2518 = vst.msk [vmem:[%s2517] sm:$0xff] %vm2337, %v2516
    %2519 = vrot.lane.b32.xlu0 %v2176, 120
    %v2520 = vpop.permute.xlu0 %2519
    %v2522 = vsel %vm2337, %v2516, 0
    %v2524 = vsel %vm2353, %v2520, 0
    %2526 = vmatprep.subr.mxu0 0.0
    %2527 = vmatpush1.msra.mxu0 %v2524
    %2528 = vmatprep.subr.mxu0 0.0
    %2529 = vmatpush1.msra.mxu0 0.0
    %2530 = vmatprep.subr.mxu0 0.0
    %2531 = vmatpush1.msra.mxu0 0.0
    %2532 = vmatprep.subr.mxu0 0.0
    %2533 = vmatpush1.msra.mxu0 0.0
    %2534 = vmatprep.subr.mxu0 0.0
    %2535 = vmatpush1.msra.mxu0 0.0
    %2536 = vmatprep.subr.mxu0 0.0
    %2537 = vmatpush1.msra.mxu0 0.0
    %2538 = vmatprep.subr.mxu0 0.0
    %2539 = vmatpush1.msra.mxu0 0.0
    %2540 = vmatprep.subr.mxu0 0.0
    %2541 = vmatpush1.msra.mxu0 0.0
    %2542 = vmatprep.subr.mxu0 0.0
    %2543 = vmatpush1.msra.mxu0 0.0
    %2544 = vmatprep.subr.mxu0 0.0
    %2545 = vmatpush1.msra.mxu0 0.0
    %2546 = vmatprep.subr.mxu0 0.0
    %2547 = vmatpush1.msra.mxu0 0.0
    %2548 = vmatprep.subr.mxu0 0.0
    %2549 = vmatpush1.msra.mxu0 0.0
    %2550 = vmatprep.subr.mxu0 0.0
    %2551 = vmatpush1.msra.mxu0 0.0
    %2552 = vmatprep.subr.mxu0 0.0
    %2553 = vmatpush1.msra.mxu0 0.0
    %2554 = vmatprep.subr.mxu0 0.0
    %2555 = vmatpush1.msra.mxu0 0.0
    %2556 = vmatprep.subr.mxu0 0.0
    %2557 = vmatpush1.msra.mxu0 0.0
    %2558 = vmatprep.subr.mxu0 0.0
    %2559 = vmatpush1.msra.mxu0 0.0
    %2560 = vmatprep.subr.mxu0 0.0
    %2561 = vmatpush1.msra.mxu0 0.0
    %2562 = vmatprep.subr.mxu0 0.0
    %2563 = vmatpush1.msra.mxu0 0.0
    %2564 = vmatprep.subr.mxu0 0.0
    %2565 = vmatpush1.msra.mxu0 0.0
    %2566 = vmatprep.subr.mxu0 0.0
    %2567 = vmatpush1.msra.mxu0 0.0
    %2568 = vmatprep.subr.mxu0 0.0
    %2569 = vmatpush1.msra.mxu0 0.0
    %2570 = vmatprep.subr.mxu0 0.0
    %2571 = vmatpush1.msra.mxu0 0.0
    %2572 = vmatprep.subr.mxu0 0.0
    %2573 = vmatpush1.msra.mxu0 0.0
    %2574 = vmatprep.subr.mxu0 0.0
    %2575 = vmatpush1.msra.mxu0 0.0
    %2576 = vmatprep.subr.mxu0 0.0
    %2577 = vmatpush1.msra.mxu0 0.0
    %2578 = vmatprep.subr.mxu0 0.0
    %2579 = vmatpush1.msra.mxu0 0.0
    %2580 = vmatprep.subr.mxu0 0.0
    %2581 = vmatpush1.msra.mxu0 0.0
    %2582 = vmatprep.subr.mxu0 0.0
    %2583 = vmatpush1.msra.mxu0 0.0
    %2584 = vmatprep.subr.mxu0 0.0
    %2585 = vmatpush1.msra.mxu0 0.0
    %2586 = vmatprep.subr.mxu0 0.0
    %2587 = vmatpush1.msra.mxu0 0.0
    %2588 = vmatprep.subr.mxu0 0.0
    %2589 = vmatpush1.msra.mxu0 0.0
    %2590 = vmatprep.mubr.f32.mxu0 0.0
    %2591 = vmatmul.mubr.f32.gmra.mrb[0].mxu0 %v2522
    %v2592 = vpop.f32.mrb[0].mxu0
    %v2593 = vadd.f32 0.0, %v2592
    %v2594 = vpop.f32.mrb[0].mxu0
    %2595 = vdwg.mxu0
    %2597 = vrot.lane.b32.xlu0 %v2593, 8
    %v2598 = vpop.permute.xlu0 %2597
    %v2600 = vsel %vm72, %v2424, %v2598
    %vm2601 = vcmask 130048
    %v2603 = vsel %vm2601, %v2600, 0
    %2605 = vmatprep.subr.mxu0 0.0
    %2606 = vmatpush1.msra.mxu0 %v2183
    %2607 = vmatprep.subr.mxu0 0.0
    %2608 = vmatpush1.msra.mxu0 %v2184
    %2609 = vmatprep.subr.mxu0 0.0
    %2610 = vmatpush1.msra.mxu0 0.0
    %2611 = vmatprep.subr.mxu0 0.0
    %2612 = vmatpush1.msra.mxu0 0.0
    %2613 = vmatprep.subr.mxu0 0.0
    %2614 = vmatpush1.msra.mxu0 0.0
    %2615 = vmatprep.subr.mxu0 0.0
    %2616 = vmatpush1.msra.mxu0 0.0
    %2617 = vmatprep.subr.mxu0 0.0
    %2618 = vmatpush1.msra.mxu0 0.0
    %2619 = vmatprep.subr.mxu0 0.0
    %2620 = vmatpush1.msra.mxu0 0.0
    %2621 = vmatprep.subr.mxu0 0.0
    %2622 = vmatpush1.msra.mxu0 0.0
    %2623 = vmatprep.subr.mxu0 0.0
    %2624 = vmatpush1.msra.mxu0 0.0
    %2625 = vmatprep.subr.mxu0 0.0
    %2626 = vmatpush1.msra.mxu0 0.0
    %2627 = vmatprep.subr.mxu0 0.0
    %2628 = vmatpush1.msra.mxu0 0.0
    %2629 = vmatprep.subr.mxu0 0.0
    %2630 = vmatpush1.msra.mxu0 0.0
    %2631 = vmatprep.subr.mxu0 0.0
    %2632 = vmatpush1.msra.mxu0 0.0
    %2633 = vmatprep.subr.mxu0 0.0
    %2634 = vmatpush1.msra.mxu0 0.0
    %2635 = vmatprep.subr.mxu0 0.0
    %2636 = vmatpush1.msra.mxu0 0.0
    %2637 = vmatprep.subr.mxu0 0.0
    %2638 = vmatpush1.msra.mxu0 0.0
    %2639 = vmatprep.subr.mxu0 0.0
    %2640 = vmatpush1.msra.mxu0 0.0
    %2641 = vmatprep.subr.mxu0 0.0
    %2642 = vmatpush1.msra.mxu0 0.0
    %2643 = vmatprep.subr.mxu0 0.0
    %2644 = vmatpush1.msra.mxu0 0.0
    %2645 = vmatprep.subr.mxu0 0.0
    %2646 = vmatpush1.msra.mxu0 0.0
    %2647 = vmatprep.subr.mxu0 0.0
    %2648 = vmatpush1.msra.mxu0 0.0
    %2649 = vmatprep.subr.mxu0 0.0
    %2650 = vmatpush1.msra.mxu0 0.0
    %2651 = vmatprep.subr.mxu0 0.0
    %2652 = vmatpush1.msra.mxu0 0.0
    %2653 = vmatprep.subr.mxu0 0.0
    %2654 = vmatpush1.msra.mxu0 0.0
    %2655 = vmatprep.subr.mxu0 0.0
    %2656 = vmatpush1.msra.mxu0 0.0
    %2657 = vmatprep.subr.mxu0 0.0
    %2658 = vmatpush1.msra.mxu0 0.0
    %2659 = vmatprep.subr.mxu0 0.0
    %2660 = vmatpush1.msra.mxu0 0.0
    %2661 = vmatprep.subr.mxu0 0.0
    %2662 = vmatpush1.msra.mxu0 0.0
    %2663 = vmatprep.subr.mxu0 0.0
    %2664 = vmatpush1.msra.mxu0 0.0
    %2665 = vmatprep.subr.mxu0 0.0
    %2666 = vmatpush1.msra.mxu0 0.0
    %2667 = vmatprep.subr.mxu0 0.0
    %2668 = vmatpush1.msra.mxu0 0.0
    %2669 = vmatprep.mubr.f32.mxu0 0.0
    %2670 = vmatmul.mubr.f32.gmra.mrb[0].mxu0 %v2603
    %v2671 = vpop.f32.mrb[0].mxu0
    %v2672 = vadd.f32 0.0, %v2671
    %v2673 = vpop.f32.mrb[0].mxu0
    %2674 = vdwg.mxu0
    %2675 = vrot.lane.b32.xlu0 %v2186, 16
    %v2676 = vpop.permute.xlu0 %2675
    %v2678 = vsel %vm2601, %v2672, %v2676
    %v2679 = vmax.f32 %v2678, 0.0
    %v2680 = vld [vmem:[%s14] sm:$0xff]
    %v2681 = vld [vmem:[%s14 + $0x8] sm:$0xff]
    %v2682 = vld [vmem:[%s14 + $0x10] sm:$0xff]
    %v2683 = vld [vmem:[%s14 + $0x18] sm:$0xff]
    %v2684 = vld [vmem:[%s14 + $0x20] sm:$0xff]
    %v2685 = vld [vmem:[%s14 + $0x28] sm:$0xff]
    %vm2686 = vcmask 392192
    %v2688 = vsel %vm2686, %v2679, 0
    %2690 = vmatprep.subr.mxu0 0.0
    %2691 = vmatpush1.msra.mxu0 %v2680
    %2692 = vmatprep.subr.mxu0 0.0
    %2693 = vmatpush1.msra.mxu0 %v2681
    %2694 = vmatprep.subr.mxu0 0.0
    %2695 = vmatpush1.msra.mxu0 %v2682
    %2696 = vmatprep.subr.mxu0 0.0
    %2697 = vmatpush1.msra.mxu0 %v2683
    %2698 = vmatprep.subr.mxu0 0.0
    %2699 = vmatpush1.msra.mxu0 %v2684
    %2700 = vmatprep.subr.mxu0 0.0
    %2701 = vmatpush1.msra.mxu0 %v2685
    %2702 = vmatprep.subr.mxu0 0.0
    %2703 = vmatpush1.msra.mxu0 0.0
    %2704 = vmatprep.subr.mxu0 0.0
    %2705 = vmatpush1.msra.mxu0 0.0
    %2706 = vmatprep.subr.mxu0 0.0
    %2707 = vmatpush1.msra.mxu0 0.0
    %2708 = vmatprep.subr.mxu0 0.0
    %2709 = vmatpush1.msra.mxu0 0.0
    %2710 = vmatprep.subr.mxu0 0.0
    %2711 = vmatpush1.msra.mxu0 0.0
    %2712 = vmatprep.subr.mxu0 0.0
    %2713 = vmatpush1.msra.mxu0 0.0
    %2714 = vmatprep.subr.mxu0 0.0
    %2715 = vmatpush1.msra.mxu0 0.0
    %2716 = vmatprep.subr.mxu0 0.0
    %2717 = vmatpush1.msra.mxu0 0.0
    %2718 = vmatprep.subr.mxu0 0.0
    %2719 = vmatpush1.msra.mxu0 0.0
    %2720 = vmatprep.subr.mxu0 0.0
    %2721 = vmatpush1.msra.mxu0 0.0
    %2722 = vmatprep.subr.mxu0 0.0
    %2723 = vmatpush1.msra.mxu0 0.0
    %2724 = vmatprep.subr.mxu0 0.0
    %2725 = vmatpush1.msra.mxu0 0.0
    %2726 = vmatprep.subr.mxu0 0.0
    %2727 = vmatpush1.msra.mxu0 0.0
    %2728 = vmatprep.subr.mxu0 0.0
    %2729 = vmatpush1.msra.mxu0 0.0
    %2730 = vmatprep.subr.mxu0 0.0
    %2731 = vmatpush1.msra.mxu0 0.0
    %2732 = vmatprep.subr.mxu0 0.0
    %2733 = vmatpush1.msra.mxu0 0.0
    %2734 = vmatprep.subr.mxu0 0.0
    %2735 = vmatpush1.msra.mxu0 0.0
    %2736 = vmatprep.subr.mxu0 0.0
    %2737 = vmatpush1.msra.mxu0 0.0
    %2738 = vmatprep.subr.mxu0 0.0
    %2739 = vmatpush1.msra.mxu0 0.0
    %2740 = vmatprep.subr.mxu0 0.0
    %2741 = vmatpush1.msra.mxu0 0.0
    %2742 = vmatprep.subr.mxu0 0.0
    %2743 = vmatpush1.msra.mxu0 0.0
    %2744 = vmatprep.subr.mxu0 0.0
    %2745 = vmatpush1.msra.mxu0 0.0
    %2746 = vmatprep.subr.mxu0 0.0
    %2747 = vmatpush1.msra.mxu0 0.0
    %2748 = vmatprep.subr.mxu0 0.0
    %2749 = vmatpush1.msra.mxu0 0.0
    %2750 = vmatprep.subr.mxu0 0.0
    %2751 = vmatpush1.msra.mxu0 0.0
    %2752 = vmatprep.subr.mxu0 0.0
    %2753 = vmatpush1.msra.mxu0 0.0
    %2754 = vmatprep.mubr.f32.mxu0 0.0
    %2755 = vmatmul.mubr.f32.gmra.mrb[0].mxu0 %v2688
    %v2756 = vpop.f32.mrb[0].mxu0
    %v2757 = vadd.f32 0.0, %v2756
    %v2758 = vpop.f32.mrb[0].mxu0
    %2759 = vdwg.mxu0
    %v2760 = vadd.f32 %v2185, %v2757
    %s2761 = scalar_lea.vmem %s14, 48
    %v2762 = vld [vmem:[%s2761] sm:$0xff]
    %v2763 = vld [vmem:[%s2761 + $0x8] sm:$0xff]
    %v2764 = vld [vmem:[%s2761 + $0x10] sm:$0xff]
    %v2765 = vld [vmem:[%s2761 + $0x18] sm:$0xff]
    %v2766 = vld [vmem:[%s2761 + $0x20] sm:$0xff]
    %v2767 = vld [vmem:[%s2761 + $0x28] sm:$0xff]
    %v2768 = vrot.slane %v2679, 1
    %v2769 = vsel %vm2686, %v2768, 0
    %2771 = vmatprep.subr.mxu0 0.0
    %2772 = vmatpush1.msra.mxu0 %v2762
    %2773 = vmatprep.subr.mxu0 0.0
    %2774 = vmatpush1.msra.mxu0 %v2763
    %2775 = vmatprep.subr.mxu0 0.0
    %2776 = vmatpush1.msra.mxu0 %v2764
    %2777 = vmatprep.subr.mxu0 0.0
    %2778 = vmatpush1.msra.mxu0 %v2765
    %2779 = vmatprep.subr.mxu0 0.0
    %2780 = vmatpush1.msra.mxu0 %v2766
    %2781 = vmatprep.subr.mxu0 0.0
    %2782 = vmatpush1.msra.mxu0 %v2767
    %2783 = vmatprep.subr.mxu0 0.0
    %2784 = vmatpush1.msra.mxu0 0.0
    %2785 = vmatprep.subr.mxu0 0.0
    %2786 = vmatpush1.msra.mxu0 0.0
    %2787 = vmatprep.subr.mxu0 0.0
    %2788 = vmatpush1.msra.mxu0 0.0
    %2789 = vmatprep.subr.mxu0 0.0
    %2790 = vmatpush1.msra.mxu0 0.0
    %2791 = vmatprep.subr.mxu0 0.0
    %2792 = vmatpush1.msra.mxu0 0.0
    %2793 = vmatprep.subr.mxu0 0.0
    %2794 = vmatpush1.msra.mxu0 0.0
    %2795 = vmatprep.subr.mxu0 0.0
    %2796 = vmatpush1.msra.mxu0 0.0
    %2797 = vmatprep.subr.mxu0 0.0
    %2798 = vmatpush1.msra.mxu0 0.0
    %2799 = vmatprep.subr.mxu0 0.0
    %2800 = vmatpush1.msra.mxu0 0.0
    %2801 = vmatprep.subr.mxu0 0.0
    %2802 = vmatpush1.msra.mxu0 0.0
    %2803 = vmatprep.subr.mxu0 0.0
    %2804 = vmatpush1.msra.mxu0 0.0
    %2805 = vmatprep.subr.mxu0 0.0
    %2806 = vmatpush1.msra.mxu0 0.0
    %2807 = vmatprep.subr.mxu0 0.0
    %2808 = vmatpush1.msra.mxu0 0.0
    %2809 = vmatprep.subr.mxu0 0.0
    %2810 = vmatpush1.msra.mxu0 0.0
    %2811 = vmatprep.subr.mxu0 0.0
    %2812 = vmatpush1.msra.mxu0 0.0
    %2813 = vmatprep.subr.mxu0 0.0
    %2814 = vmatpush1.msra.mxu0 0.0
    %2815 = vmatprep.subr.mxu0 0.0
    %2816 = vmatpush1.msra.mxu0 0.0
    %2817 = vmatprep.subr.mxu0 0.0
    %2818 = vmatpush1.msra.mxu0 0.0
    %2819 = vmatprep.subr.mxu0 0.0
    %2820 = vmatpush1.msra.mxu0 0.0
    %2821 = vmatprep.subr.mxu0 0.0
    %2822 = vmatpush1.msra.mxu0 0.0
    %2823 = vmatprep.subr.mxu0 0.0
    %2824 = vmatpush1.msra.mxu0 0.0
    %2825 = vmatprep.subr.mxu0 0.0
    %2826 = vmatpush1.msra.mxu0 0.0
    %2827 = vmatprep.subr.mxu0 0.0
    %2828 = vmatpush1.msra.mxu0 0.0
    %2829 = vmatprep.subr.mxu0 0.0
    %2830 = vmatpush1.msra.mxu0 0.0
    %2831 = vmatprep.subr.mxu0 0.0
    %2832 = vmatpush1.msra.mxu0 0.0
    %2833 = vmatprep.subr.mxu0 0.0
    %2834 = vmatpush1.msra.mxu0 0.0
    %2835 = vmatprep.mubr.f32.mxu0 0.0
    %2836 = vmatmul.mubr.f32.gmra.mrb[0].mxu0 %v2769
    %v2837 = vpop.f32.mrb[0].mxu0
    %v2838 = vadd.f32 0.0, %v2837
    %v2839 = vpop.f32.mrb[0].mxu0
    %2840 = vdwg.mxu0
    %v2841 = vadd.f32 %v2760, %v2838
    %s2842 = scalar_lea.vmem %s14, 96
    %v2843 = vld [vmem:[%s2842] sm:$0xff]
    %v2844 = vld [vmem:[%s2842 + $0x8] sm:$0xff]
    %v2845 = vld [vmem:[%s2842 + $0x10] sm:$0xff]
    %v2846 = vld [vmem:[%s2842 + $0x18] sm:$0xff]
    %v2847 = vld [vmem:[%s2842 + $0x20] sm:$0xff]
    %v2848 = vld [vmem:[%s2842 + $0x28] sm:$0xff]
    %v2849 = vrot.slane %v2679, 2
    %v2850 = vsel %vm2686, %v2849, 0
    %2852 = vmatprep.subr.mxu0 0.0
    %2853 = vmatpush1.msra.mxu0 %v2843
    %2854 = vmatprep.subr.mxu0 0.0
    %2855 = vmatpush1.msra.mxu0 %v2844
    %2856 = vmatprep.subr.mxu0 0.0
    %2857 = vmatpush1.msra.mxu0 %v2845
    %2858 = vmatprep.subr.mxu0 0.0
    %2859 = vmatpush1.msra.mxu0 %v2846
    %2860 = vmatprep.subr.mxu0 0.0
    %2861 = vmatpush1.msra.mxu0 %v2847
    %2862 = vmatprep.subr.mxu0 0.0
    %2863 = vmatpush1.msra.mxu0 %v2848
    %2864 = vmatprep.subr.mxu0 0.0
    %2865 = vmatpush1.msra.mxu0 0.0
    %2866 = vmatprep.subr.mxu0 0.0
    %2867 = vmatpush1.msra.mxu0 0.0
    %2868 = vmatprep.subr.mxu0 0.0
    %2869 = vmatpush1.msra.mxu0 0.0
    %2870 = vmatprep.subr.mxu0 0.0
    %2871 = vmatpush1.msra.mxu0 0.0
    %2872 = vmatprep.subr.mxu0 0.0
    %2873 = vmatpush1.msra.mxu0 0.0
    %2874 = vmatprep.subr.mxu0 0.0
    %2875 = vmatpush1.msra.mxu0 0.0
    %2876 = vmatprep.subr.mxu0 0.0
    %2877 = vmatpush1.msra.mxu0 0.0
    %2878 = vmatprep.subr.mxu0 0.0
    %2879 = vmatpush1.msra.mxu0 0.0
    %2880 = vmatprep.subr.mxu0 0.0
    %2881 = vmatpush1.msra.mxu0 0.0
    %2882 = vmatprep.subr.mxu0 0.0
    %2883 = vmatpush1.msra.mxu0 0.0
    %2884 = vmatprep.subr.mxu0 0.0
    %2885 = vmatpush1.msra.mxu0 0.0
    %2886 = vmatprep.subr.mxu0 0.0
    %2887 = vmatpush1.msra.mxu0 0.0
    %2888 = vmatprep.subr.mxu0 0.0
    %2889 = vmatpush1.msra.mxu0 0.0
    %2890 = vmatprep.subr.mxu0 0.0
    %2891 = vmatpush1.msra.mxu0 0.0
    %2892 = vmatprep.subr.mxu0 0.0
    %2893 = vmatpush1.msra.mxu0 0.0
    %2894 = vmatprep.subr.mxu0 0.0
    %2895 = vmatpush1.msra.mxu0 0.0
    %2896 = vmatprep.subr.mxu0 0.0
    %2897 = vmatpush1.msra.mxu0 0.0
    %2898 = vmatprep.subr.mxu0 0.0
    %2899 = vmatpush1.msra.mxu0 0.0
    %2900 = vmatprep.subr.mxu0 0.0
    %2901 = vmatpush1.msra.mxu0 0.0
    %2902 = vmatprep.subr.mxu0 0.0
    %2903 = vmatpush1.msra.mxu0 0.0
    %2904 = vmatprep.subr.mxu0 0.0
    %2905 = vmatpush1.msra.mxu0 0.0
    %2906 = vmatprep.subr.mxu0 0.0
    %2907 = vmatpush1.msra.mxu0 0.0
    %2908 = vmatprep.subr.mxu0 0.0
    %2909 = vmatpush1.msra.mxu0 0.0
    %2910 = vmatprep.subr.mxu0 0.0
    %2911 = vmatpush1.msra.mxu0 0.0
    %2912 = vmatprep.subr.mxu0 0.0
    %2913 = vmatpush1.msra.mxu0 0.0
    %2914 = vmatprep.subr.mxu0 0.0
    %2915 = vmatpush1.msra.mxu0 0.0
    %2916 = vmatprep.mubr.f32.mxu0 0.0
    %2917 = vmatmul.mubr.f32.gmra.mrb[0].mxu0 %v2850
    %v2918 = vpop.f32.mrb[0].mxu0
    %v2919 = vadd.f32 0.0, %v2918
    %v2920 = vpop.f32.mrb[0].mxu0
    %2921 = vdwg.mxu0
    %v2922 = vadd.f32 %v2841, %v2919
    %s2923 = scalar_lea.vmem %s14, 144
    %v2924 = vld [vmem:[%s2923] sm:$0xff]
    %v2925 = vld [vmem:[%s2923 + $0x8] sm:$0xff]
    %v2926 = vld [vmem:[%s2923 + $0x10] sm:$0xff]
    %v2927 = vld [vmem:[%s2923 + $0x18] sm:$0xff]
    %v2928 = vld [vmem:[%s2923 + $0x20] sm:$0xff]
    %v2929 = vld [vmem:[%s2923 + $0x28] sm:$0xff]
    %v2930 = vrot.slane %v2679, 3
    %v2931 = vsel %vm2686, %v2930, 0
    %2933 = vmatprep.subr.mxu0 0.0
    %2934 = vmatpush1.msra.mxu0 %v2924
    %2935 = vmatprep.subr.mxu0 0.0
    %2936 = vmatpush1.msra.mxu0 %v2925
    %2937 = vmatprep.subr.mxu0 0.0
    %2938 = vmatpush1.msra.mxu0 %v2926
    %2939 = vmatprep.subr.mxu0 0.0
    %2940 = vmatpush1.msra.mxu0 %v2927
    %2941 = vmatprep.subr.mxu0 0.0
    %2942 = vmatpush1.msra.mxu0 %v2928
    %2943 = vmatprep.subr.mxu0 0.0
    %2944 = vmatpush1.msra.mxu0 %v2929
    %2945 = vmatprep.subr.mxu0 0.0
    %2946 = vmatpush1.msra.mxu0 0.0
    %2947 = vmatprep.subr.mxu0 0.0
    %2948 = vmatpush1.msra.mxu0 0.0
    %2949 = vmatprep.subr.mxu0 0.0
    %2950 = vmatpush1.msra.mxu0 0.0
    %2951 = vmatprep.subr.mxu0 0.0
    %2952 = vmatpush1.msra.mxu0 0.0
    %2953 = vmatprep.subr.mxu0 0.0
    %2954 = vmatpush1.msra.mxu0 0.0
    %2955 = vmatprep.subr.mxu0 0.0
    %2956 = vmatpush1.msra.mxu0 0.0
    %2957 = vmatprep.subr.mxu0 0.0
    %2958 = vmatpush1.msra.mxu0 0.0
    %2959 = vmatprep.subr.mxu0 0.0
    %2960 = vmatpush1.msra.mxu0 0.0
    %2961 = vmatprep.subr.mxu0 0.0
    %2962 = vmatpush1.msra.mxu0 0.0
    %2963 = vmatprep.subr.mxu0 0.0
    %2964 = vmatpush1.msra.mxu0 0.0
    %2965 = vmatprep.subr.mxu0 0.0
    %2966 = vmatpush1.msra.mxu0 0.0
    %2967 = vmatprep.subr.mxu0 0.0
    %2968 = vmatpush1.msra.mxu0 0.0
    %2969 = vmatprep.subr.mxu0 0.0
    %2970 = vmatpush1.msra.mxu0 0.0
    %2971 = vmatprep.subr.mxu0 0.0
    %2972 = vmatpush1.msra.mxu0 0.0
    %2973 = vmatprep.subr.mxu0 0.0
    %2974 = vmatpush1.msra.mxu0 0.0
    %2975 = vmatprep.subr.mxu0 0.0
    %2976 = vmatpush1.msra.mxu0 0.0
    %2977 = vmatprep.subr.mxu0 0.0
    %2978 = vmatpush1.msra.mxu0 0.0
    %2979 = vmatprep.subr.mxu0 0.0
    %2980 = vmatpush1.msra.mxu0 0.0
    %2981 = vmatprep.subr.mxu0 0.0
    %2982 = vmatpush1.msra.mxu0 0.0
    %2983 = vmatprep.subr.mxu0 0.0
    %2984 = vmatpush1.msra.mxu0 0.0
    %2985 = vmatprep.subr.mxu0 0.0
    %2986 = vmatpush1.msra.mxu0 0.0
    %2987 = vmatprep.subr.mxu0 0.0
    %2988 = vmatpush1.msra.mxu0 0.0
    %2989 = vmatprep.subr.mxu0 0.0
    %2990 = vmatpush1.msra.mxu0 0.0
    %2991 = vmatprep.subr.mxu0 0.0
    %2992 = vmatpush1.msra.mxu0 0.0
    %2993 = vmatprep.subr.mxu0 0.0
    %2994 = vmatpush1.msra.mxu0 0.0
    %2995 = vmatprep.subr.mxu0 0.0
    %2996 = vmatpush1.msra.mxu0 0.0
    %2997 = vmatprep.mubr.f32.mxu0 0.0
    %2998 = vmatmul.mubr.f32.gmra.mrb[0].mxu0 %v2931
    %v2999 = vpop.f32.mrb[0].mxu0
    %v3000 = vadd.f32 0.0, %v2999
    %v3001 = vpop.f32.mrb[0].mxu0
    %3002 = vdwg.mxu0
    %v3003 = vadd.f32 %v2922, %v3000
    %s3004 = scalar_lea.vmem %s14, 192
    %v3005 = vld [vmem:[%s3004] sm:$0xff]
    %v3006 = vld [vmem:[%s3004 + $0x8] sm:$0xff]
    %v3007 = vld [vmem:[%s3004 + $0x10] sm:$0xff]
    %v3008 = vld [vmem:[%s3004 + $0x18] sm:$0xff]
    %v3009 = vld [vmem:[%s3004 + $0x20] sm:$0xff]
    %v3010 = vld [vmem:[%s3004 + $0x28] sm:$0xff]
    %v3011 = vrot.slane %v2679, 4
    %v3012 = vsel %vm2686, %v3011, 0
    %3014 = vmatprep.subr.mxu0 0.0
    %3015 = vmatpush1.msra.mxu0 %v3005
    %3016 = vmatprep.subr.mxu0 0.0
    %3017 = vmatpush1.msra.mxu0 %v3006
    %3018 = vmatprep.subr.mxu0 0.0
    %3019 = vmatpush1.msra.mxu0 %v3007
    %3020 = vmatprep.subr.mxu0 0.0
    %3021 = vmatpush1.msra.mxu0 %v3008
    %3022 = vmatprep.subr.mxu0 0.0
    %3023 = vmatpush1.msra.mxu0 %v3009
    %3024 = vmatprep.subr.mxu0 0.0
    %3025 = vmatpush1.msra.mxu0 %v3010
    %3026 = vmatprep.subr.mxu0 0.0
    %3027 = vmatpush1.msra.mxu0 0.0
    %3028 = vmatprep.subr.mxu0 0.0
    %3029 = vmatpush1.msra.mxu0 0.0
    %3030 = vmatprep.subr.mxu0 0.0
    %3031 = vmatpush1.msra.mxu0 0.0
    %3032 = vmatprep.subr.mxu0 0.0
    %3033 = vmatpush1.msra.mxu0 0.0
    %3034 = vmatprep.subr.mxu0 0.0
    %3035 = vmatpush1.msra.mxu0 0.0
    %3036 = vmatprep.subr.mxu0 0.0
    %3037 = vmatpush1.msra.mxu0 0.0
    %3038 = vmatprep.subr.mxu0 0.0
    %3039 = vmatpush1.msra.mxu0 0.0
    %3040 = vmatprep.subr.mxu0 0.0
    %3041 = vmatpush1.msra.mxu0 0.0
    %3042 = vmatprep.subr.mxu0 0.0
    %3043 = vmatpush1.msra.mxu0 0.0
    %3044 = vmatprep.subr.mxu0 0.0
    %3045 = vmatpush1.msra.mxu0 0.0
    %3046 = vmatprep.subr.mxu0 0.0
    %3047 = vmatpush1.msra.mxu0 0.0
    %3048 = vmatprep.subr.mxu0 0.0
    %3049 = vmatpush1.msra.mxu0 0.0
    %3050 = vmatprep.subr.mxu0 0.0
    %3051 = vmatpush1.msra.mxu0 0.0
    %3052 = vmatprep.subr.mxu0 0.0
    %3053 = vmatpush1.msra.mxu0 0.0
    %3054 = vmatprep.subr.mxu0 0.0
    %3055 = vmatpush1.msra.mxu0 0.0
    %3056 = vmatprep.subr.mxu0 0.0
    %3057 = vmatpush1.msra.mxu0 0.0
    %3058 = vmatprep.subr.mxu0 0.0
    %3059 = vmatpush1.msra.mxu0 0.0
    %3060 = vmatprep.subr.mxu0 0.0
    %3061 = vmatpush1.msra.mxu0 0.0
    %3062 = vmatprep.subr.mxu0 0.0
    %3063 = vmatpush1.msra.mxu0 0.0
    %3064 = vmatprep.subr.mxu0 0.0
    %3065 = vmatpush1.msra.mxu0 0.0
    %3066 = vmatprep.subr.mxu0 0.0
    %3067 = vmatpush1.msra.mxu0 0.0
    %3068 = vmatprep.subr.mxu0 0.0
    %3069 = vmatpush1.msra.mxu0 0.0
    %3070 = vmatprep.subr.mxu0 0.0
    %3071 = vmatpush1.msra.mxu0 0.0
    %3072 = vmatprep.subr.mxu0 0.0
    %3073 = vmatpush1.msra.mxu0 0.0
    %3074 = vmatprep.subr.mxu0 0.0
    %3075 = vmatpush1.msra.mxu0 0.0
    %3076 = vmatprep.subr.mxu0 0.0
    %3077 = vmatpush1.msra.mxu0 0.0
    %3078 = vmatprep.mubr.f32.mxu0 0.0
    %3079 = vmatmul.mubr.f32.gmra.mrb[0].mxu0 %v3012
    %v3080 = vpop.f32.mrb[0].mxu0
    %v3081 = vadd.f32 0.0, %v3080
    %v3082 = vpop.f32.mrb[0].mxu0
    %3083 = vdwg.mxu0
    %v3084 = vadd.f32 %v3003, %v3081
    %s3085 = scalar_lea.vmem %s14, 240
    %v3086 = vld [vmem:[%s3085] sm:$0xff]
    %v3087 = vld [vmem:[%s3085 + $0x8] sm:$0xff]
    %v3088 = vld [vmem:[%s3085 + $0x10] sm:$0xff]
    %v3089 = vld [vmem:[%s3085 + $0x18] sm:$0xff]
    %v3090 = vld [vmem:[%s3085 + $0x20] sm:$0xff]
    %v3091 = vld [vmem:[%s3085 + $0x28] sm:$0xff]
    %v3092 = vrot.slane %v2679, 5
    %v3093 = vsel %vm2686, %v3092, 0
    %3095 = vmatprep.subr.mxu0 0.0
    %3096 = vmatpush1.msra.mxu0 %v3086
    %3097 = vmatprep.subr.mxu0 0.0
    %3098 = vmatpush1.msra.mxu0 %v3087
    %3099 = vmatprep.subr.mxu0 0.0
    %3100 = vmatpush1.msra.mxu0 %v3088
    %3101 = vmatprep.subr.mxu0 0.0
    %3102 = vmatpush1.msra.mxu0 %v3089
    %3103 = vmatprep.subr.mxu0 0.0
    %3104 = vmatpush1.msra.mxu0 %v3090
    %3105 = vmatprep.subr.mxu0 0.0
    %3106 = vmatpush1.msra.mxu0 %v3091
    %3107 = vmatprep.subr.mxu0 0.0
    %3108 = vmatpush1.msra.mxu0 0.0
    %3109 = vmatprep.subr.mxu0 0.0
    %3110 = vmatpush1.msra.mxu0 0.0
    %3111 = vmatprep.subr.mxu0 0.0
    %3112 = vmatpush1.msra.mxu0 0.0
    %3113 = vmatprep.subr.mxu0 0.0
    %3114 = vmatpush1.msra.mxu0 0.0
    %3115 = vmatprep.subr.mxu0 0.0
    %3116 = vmatpush1.msra.mxu0 0.0
    %3117 = vmatprep.subr.mxu0 0.0
    %3118 = vmatpush1.msra.mxu0 0.0
    %3119 = vmatprep.subr.mxu0 0.0
    %3120 = vmatpush1.msra.mxu0 0.0
    %3121 = vmatprep.subr.mxu0 0.0
    %3122 = vmatpush1.msra.mxu0 0.0
    %3123 = vmatprep.subr.mxu0 0.0
    %3124 = vmatpush1.msra.mxu0 0.0
    %3125 = vmatprep.subr.mxu0 0.0
    %3126 = vmatpush1.msra.mxu0 0.0
    %3127 = vmatprep.subr.mxu0 0.0
    %3128 = vmatpush1.msra.mxu0 0.0
    %3129 = vmatprep.subr.mxu0 0.0
    %3130 = vmatpush1.msra.mxu0 0.0
    %3131 = vmatprep.subr.mxu0 0.0
    %3132 = vmatpush1.msra.mxu0 0.0
    %3133 = vmatprep.subr.mxu0 0.0
    %3134 = vmatpush1.msra.mxu0 0.0
    %3135 = vmatprep.subr.mxu0 0.0
    %3136 = vmatpush1.msra.mxu0 0.0
    %3137 = vmatprep.subr.mxu0 0.0
    %3138 = vmatpush1.msra.mxu0 0.0
    %3139 = vmatprep.subr.mxu0 0.0
    %3140 = vmatpush1.msra.mxu0 0.0
    %3141 = vmatprep.subr.mxu0 0.0
    %3142 = vmatpush1.msra.mxu0 0.0
    %3143 = vmatprep.subr.mxu0 0.0
    %3144 = vmatpush1.msra.mxu0 0.0
    %3145 = vmatprep.subr.mxu0 0.0
    %3146 = vmatpush1.msra.mxu0 0.0
    %3147 = vmatprep.subr.mxu0 0.0
    %3148 = vmatpush1.msra.mxu0 0.0
    %3149 = vmatprep.subr.mxu0 0.0
    %3150 = vmatpush1.msra.mxu0 0.0
    %3151 = vmatprep.subr.mxu0 0.0
    %3152 = vmatpush1.msra.mxu0 0.0
    %3153 = vmatprep.subr.mxu0 0.0
    %3154 = vmatpush1.msra.mxu0 0.0
    %3155 = vmatprep.subr.mxu0 0.0
    %3156 = vmatpush1.msra.mxu0 0.0
    %3157 = vmatprep.subr.mxu0 0.0
    %3158 = vmatpush1.msra.mxu0 0.0
    %3159 = vmatprep.mubr.f32.mxu0 0.0
    %3160 = vmatmul.mubr.f32.gmra.mrb[0].mxu0 %v3093
    %v3161 = vpop.f32.mrb[0].mxu0
    %v3162 = vadd.f32 0.0, %v3161
    %v3163 = vpop.f32.mrb[0].mxu0
    %3164 = vdwg.mxu0
    %v3165 = vadd.f32 %v3084, %v3162
    %s3166 = scalar_lea.vmem %s14, 288
    %v3167 = vld [vmem:[%s3166] sm:$0xff]
    %v3168 = vld [vmem:[%s3166 + $0x8] sm:$0xff]
    %v3169 = vld [vmem:[%s3166 + $0x10] sm:$0xff]
    %v3170 = vld [vmem:[%s3166 + $0x18] sm:$0xff]
    %v3171 = vld [vmem:[%s3166 + $0x20] sm:$0xff]
    %v3172 = vld [vmem:[%s3166 + $0x28] sm:$0xff]
    %v3173 = vrot.slane %v2679, 6
    %v3174 = vsel %vm2686, %v3173, 0
    %3176 = vmatprep.subr.mxu0 0.0
    %3177 = vmatpush1.msra.mxu0 %v3167
    %3178 = vmatprep.subr.mxu0 0.0
    %3179 = vmatpush1.msra.mxu0 %v3168
    %3180 = vmatprep.subr.mxu0 0.0
    %3181 = vmatpush1.msra.mxu0 %v3169
    %3182 = vmatprep.subr.mxu0 0.0
    %3183 = vmatpush1.msra.mxu0 %v3170
    %3184 = vmatprep.subr.mxu0 0.0
    %3185 = vmatpush1.msra.mxu0 %v3171
    %3186 = vmatprep.subr.mxu0 0.0
    %3187 = vmatpush1.msra.mxu0 %v3172
    %3188 = vmatprep.subr.mxu0 0.0
    %3189 = vmatpush1.msra.mxu0 0.0
    %3190 = vmatprep.subr.mxu0 0.0
    %3191 = vmatpush1.msra.mxu0 0.0
    %3192 = vmatprep.subr.mxu0 0.0
    %3193 = vmatpush1.msra.mxu0 0.0
    %3194 = vmatprep.subr.mxu0 0.0
    %3195 = vmatpush1.msra.mxu0 0.0
    %3196 = vmatprep.subr.mxu0 0.0
    %3197 = vmatpush1.msra.mxu0 0.0
    %3198 = vmatprep.subr.mxu0 0.0
    %3199 = vmatpush1.msra.mxu0 0.0
    %3200 = vmatprep.subr.mxu0 0.0
    %3201 = vmatpush1.msra.mxu0 0.0
    %3202 = vmatprep.subr.mxu0 0.0
    %3203 = vmatpush1.msra.mxu0 0.0
    %3204 = vmatprep.subr.mxu0 0.0
    %3205 = vmatpush1.msra.mxu0 0.0
    %3206 = vmatprep.subr.mxu0 0.0
    %3207 = vmatpush1.msra.mxu0 0.0
    %3208 = vmatprep.subr.mxu0 0.0
    %3209 = vmatpush1.msra.mxu0 0.0
    %3210 = vmatprep.subr.mxu0 0.0
    %3211 = vmatpush1.msra.mxu0 0.0
    %3212 = vmatprep.subr.mxu0 0.0
    %3213 = vmatpush1.msra.mxu0 0.0
    %3214 = vmatprep.subr.mxu0 0.0
    %3215 = vmatpush1.msra.mxu0 0.0
    %3216 = vmatprep.subr.mxu0 0.0
    %3217 = vmatpush1.msra.mxu0 0.0
    %3218 = vmatprep.subr.mxu0 0.0
    %3219 = vmatpush1.msra.mxu0 0.0
    %3220 = vmatprep.subr.mxu0 0.0
    %3221 = vmatpush1.msra.mxu0 0.0
    %3222 = vmatprep.subr.mxu0 0.0
    %3223 = vmatpush1.msra.mxu0 0.0
    %3224 = vmatprep.subr.mxu0 0.0
    %3225 = vmatpush1.msra.mxu0 0.0
    %3226 = vmatprep.subr.mxu0 0.0
    %3227 = vmatpush1.msra.mxu0 0.0
    %3228 = vmatprep.subr.mxu0 0.0
    %3229 = vmatpush1.msra.mxu0 0.0
    %3230 = vmatprep.subr.mxu0 0.0
    %3231 = vmatpush1.msra.mxu0 0.0
    %3232 = vmatprep.subr.mxu0 0.0
    %3233 = vmatpush1.msra.mxu0 0.0
    %3234 = vmatprep.subr.mxu0 0.0
    %3235 = vmatpush1.msra.mxu0 0.0
    %3236 = vmatprep.subr.mxu0 0.0
    %3237 = vmatpush1.msra.mxu0 0.0
    %3238 = vmatprep.subr.mxu0 0.0
    %3239 = vmatpush1.msra.mxu0 0.0
    %3240 = vmatprep.mubr.f32.mxu0 0.0
    %3241 = vmatmul.mubr.f32.gmra.mrb[0].mxu0 %v3174
    %v3242 = vpop.f32.mrb[0].mxu0
    %v3243 = vadd.f32 0.0, %v3242
    %v3244 = vpop.f32.mrb[0].mxu0
    %3245 = vdwg.mxu0
    %v3246 = vadd.f32 %v3165, %v3243
    %s3247 = scalar_lea.vmem %s14, 336
    %v3248 = vld [vmem:[%s3247] sm:$0xff]
    %v3249 = vld [vmem:[%s3247 + $0x8] sm:$0xff]
    %v3250 = vld [vmem:[%s3247 + $0x10] sm:$0xff]
    %v3251 = vld [vmem:[%s3247 + $0x18] sm:$0xff]
    %v3252 = vld [vmem:[%s3247 + $0x20] sm:$0xff]
    %v3253 = vld [vmem:[%s3247 + $0x28] sm:$0xff]
    %v3254 = vrot.slane %v2679, 7
    %v3255 = vsel %vm2686, %v3254, 0
    %3257 = vmatprep.subr.mxu0 0.0
    %3258 = vmatpush1.msra.mxu0 %v3248
    %3259 = vmatprep.subr.mxu0 0.0
    %3260 = vmatpush1.msra.mxu0 %v3249
    %3261 = vmatprep.subr.mxu0 0.0
    %3262 = vmatpush1.msra.mxu0 %v3250
    %3263 = vmatprep.subr.mxu0 0.0
    %3264 = vmatpush1.msra.mxu0 %v3251
    %3265 = vmatprep.subr.mxu0 0.0
    %3266 = vmatpush1.msra.mxu0 %v3252
    %3267 = vmatprep.subr.mxu0 0.0
    %3268 = vmatpush1.msra.mxu0 %v3253
    %3269 = vmatprep.subr.mxu0 0.0
    %3270 = vmatpush1.msra.mxu0 0.0
    %3271 = vmatprep.subr.mxu0 0.0
    %3272 = vmatpush1.msra.mxu0 0.0
    %3273 = vmatprep.subr.mxu0 0.0
    %3274 = vmatpush1.msra.mxu0 0.0
    %3275 = vmatprep.subr.mxu0 0.0
    %3276 = vmatpush1.msra.mxu0 0.0
    %3277 = vmatprep.subr.mxu0 0.0
    %3278 = vmatpush1.msra.mxu0 0.0
    %3279 = vmatprep.subr.mxu0 0.0
    %3280 = vmatpush1.msra.mxu0 0.0
    %3281 = vmatprep.subr.mxu0 0.0
    %3282 = vmatpush1.msra.mxu0 0.0
    %3283 = vmatprep.subr.mxu0 0.0
    %3284 = vmatpush1.msra.mxu0 0.0
    %3285 = vmatprep.subr.mxu0 0.0
    %3286 = vmatpush1.msra.mxu0 0.0
    %3287 = vmatprep.subr.mxu0 0.0
    %3288 = vmatpush1.msra.mxu0 0.0
    %3289 = vmatprep.subr.mxu0 0.0
    %3290 = vmatpush1.msra.mxu0 0.0
    %3291 = vmatprep.subr.mxu0 0.0
    %3292 = vmatpush1.msra.mxu0 0.0
    %3293 = vmatprep.subr.mxu0 0.0
    %3294 = vmatpush1.msra.mxu0 0.0
    %3295 = vmatprep.subr.mxu0 0.0
    %3296 = vmatpush1.msra.mxu0 0.0
    %3297 = vmatprep.subr.mxu0 0.0
    %3298 = vmatpush1.msra.mxu0 0.0
    %3299 = vmatprep.subr.mxu0 0.0
    %3300 = vmatpush1.msra.mxu0 0.0
    %3301 = vmatprep.subr.mxu0 0.0
    %3302 = vmatpush1.msra.mxu0 0.0
    %3303 = vmatprep.subr.mxu0 0.0
    %3304 = vmatpush1.msra.mxu0 0.0
    %3305 = vmatprep.subr.mxu0 0.0
    %3306 = vmatpush1.msra.mxu0 0.0
    %3307 = vmatprep.subr.mxu0 0.0
    %3308 = vmatpush1.msra.mxu0 0.0
    %3309 = vmatprep.subr.mxu0 0.0
    %3310 = vmatpush1.msra.mxu0 0.0
    %3311 = vmatprep.subr.mxu0 0.0
    %3312 = vmatpush1.msra.mxu0 0.0
    %3313 = vmatprep.subr.mxu0 0.0
    %3314 = vmatpush1.msra.mxu0 0.0
    %3315 = vmatprep.subr.mxu0 0.0
    %3316 = vmatpush1.msra.mxu0 0.0
    %3317 = vmatprep.subr.mxu0 0.0
    %3318 = vmatpush1.msra.mxu0 0.0
    %3319 = vmatprep.subr.mxu0 0.0
    %3320 = vmatpush1.msra.mxu0 0.0
    %3321 = vmatprep.mubr.f32.mxu0 0.0
    %3322 = vmatmul.mubr.f32.gmra.mrb[0].mxu0 %v3255
    %v3323 = vpop.f32.mrb[0].mxu0
    %v3324 = vadd.f32 0.0, %v3323
    %v3325 = vpop.f32.mrb[0].mxu0
    %3326 = vdwg.mxu0
    %v3327 = vadd.f32 %v3246, %v3324
    %vm3328 = vcmask 24576
    %3329 = vst.msk [vmem:[#allocation4] sm:$0x1] %vm3328, %v3327
    %v3330 = vld [vmem:[#allocation3 + $0x8] sm:$0xff]
    %v3332 = vsel %vm154, %v3330, 0
    %3334 = vmatprep.subr.mxu0 0.0
    %3335 = vmatpush1.msra.mxu0 %v2179
    %3336 = vmatprep.subr.mxu0 0.0
    %3337 = vmatpush1.msra.mxu0 %v2180
    %3338 = vmatprep.subr.mxu0 0.0
    %3339 = vmatpush1.msra.mxu0 %v2181
    %3340 = vmatprep.subr.mxu0 0.0
    %3341 = vmatpush1.msra.mxu0 %v2182
    %3342 = vmatprep.subr.mxu0 0.0
    %3343 = vmatpush1.msra.mxu0 0.0
    %3344 = vmatprep.subr.mxu0 0.0
    %3345 = vmatpush1.msra.mxu0 0.0
    %3346 = vmatprep.subr.mxu0 0.0
    %3347 = vmatpush1.msra.mxu0 0.0
    %3348 = vmatprep.subr.mxu0 0.0
    %3349 = vmatpush1.msra.mxu0 0.0
    %3350 = vmatprep.subr.mxu0 0.0
    %3351 = vmatpush1.msra.mxu0 0.0
    %3352 = vmatprep.subr.mxu0 0.0
    %3353 = vmatpush1.msra.mxu0 0.0
    %3354 = vmatprep.subr.mxu0 0.0
    %3355 = vmatpush1.msra.mxu0 0.0
    %3356 = vmatprep.subr.mxu0 0.0
    %3357 = vmatpush1.msra.mxu0 0.0
    %3358 = vmatprep.subr.mxu0 0.0
    %3359 = vmatpush1.msra.mxu0 0.0
    %3360 = vmatprep.subr.mxu0 0.0
    %3361 = vmatpush1.msra.mxu0 0.0
    %3362 = vmatprep.subr.mxu0 0.0
    %3363 = vmatpush1.msra.mxu0 0.0
    %3364 = vmatprep.subr.mxu0 0.0
    %3365 = vmatpush1.msra.mxu0 0.0
    %3366 = vmatprep.subr.mxu0 0.0
    %3367 = vmatpush1.msra.mxu0 0.0
    %3368 = vmatprep.subr.mxu0 0.0
    %3369 = vmatpush1.msra.mxu0 0.0
    %3370 = vmatprep.subr.mxu0 0.0
    %3371 = vmatpush1.msra.mxu0 0.0
    %3372 = vmatprep.subr.mxu0 0.0
    %3373 = vmatpush1.msra.mxu0 0.0
    %3374 = vmatprep.subr.mxu0 0.0
    %3375 = vmatpush1.msra.mxu0 0.0
    %3376 = vmatprep.subr.mxu0 0.0
    %3377 = vmatpush1.msra.mxu0 0.0
    %3378 = vmatprep.subr.mxu0 0.0
    %3379 = vmatpush1.msra.mxu0 0.0
    %3380 = vmatprep.subr.mxu0 0.0
    %3381 = vmatpush1.msra.mxu0 0.0
    %3382 = vmatprep.subr.mxu0 0.0
    %3383 = vmatpush1.msra.mxu0 0.0
    %3384 = vmatprep.subr.mxu0 0.0
    %3385 = vmatpush1.msra.mxu0 0.0
    %3386 = vmatprep.subr.mxu0 0.0
    %3387 = vmatpush1.msra.mxu0 0.0
    %3388 = vmatprep.subr.mxu0 0.0
    %3389 = vmatpush1.msra.mxu0 0.0
    %3390 = vmatprep.subr.mxu0 0.0
    %3391 = vmatpush1.msra.mxu0 0.0
    %3392 = vmatprep.subr.mxu0 0.0
    %3393 = vmatpush1.msra.mxu0 0.0
    %3394 = vmatprep.subr.mxu0 0.0
    %3395 = vmatpush1.msra.mxu0 0.0
    %3396 = vmatprep.subr.mxu0 0.0
    %3397 = vmatpush1.msra.mxu0 0.0
    %3398 = vmatprep.mubr.f32.mxu0 0.0
    %3399 = vmatmul.mubr.f32.gmra.mrb[0].mxu0 %v3332
    %v3400 = vpop.f32.mrb[0].mxu0
    %v3401 = vadd.f32 0.0, %v3400
    %v3402 = vpop.f32.mrb[0].mxu0
    %3403 = vdwg.mxu0
    %v3404 = vrot.slane %v2102, 2
    %v3406 = vsel %vm72, %v3401, 0
    %v3408 = vsel %vm72, %v3404, 0
    %3410 = vmatprep.subr.mxu0 0.0
    %3411 = vmatpush1.xpose.msra.mxu0 %v3408
    %3412 = vmatprep.subr.mxu0 0.0
    %3413 = vmatpush1.xpose.msra.mxu0 0.0
    %3414 = vmatprep.subr.mxu0 0.0
    %3415 = vmatpush1.xpose.msra.mxu0 0.0
    %3416 = vmatprep.subr.mxu0 0.0
    %3417 = vmatpush1.xpose.msra.mxu0 0.0
    %3418 = vmatprep.subr.mxu0 0.0
    %3419 = vmatpush1.xpose.msra.mxu0 0.0
    %3420 = vmatprep.subr.mxu0 0.0
    %3421 = vmatpush1.xpose.msra.mxu0 0.0
    %3422 = vmatprep.subr.mxu0 0.0
    %3423 = vmatpush1.xpose.msra.mxu0 0.0
    %3424 = vmatprep.subr.mxu0 0.0
    %3425 = vmatpush1.xpose.msra.mxu0 0.0
    %3426 = vmatprep.subr.mxu0 0.0
    %3427 = vmatpush1.xpose.msra.mxu0 0.0
    %3428 = vmatprep.subr.mxu0 0.0
    %3429 = vmatpush1.xpose.msra.mxu0 0.0
    %3430 = vmatprep.subr.mxu0 0.0
    %3431 = vmatpush1.xpose.msra.mxu0 0.0
    %3432 = vmatprep.subr.mxu0 0.0
    %3433 = vmatpush1.xpose.msra.mxu0 0.0
    %3434 = vmatprep.subr.mxu0 0.0
    %3435 = vmatpush1.xpose.msra.mxu0 0.0
    %3436 = vmatprep.subr.mxu0 0.0
    %3437 = vmatpush1.xpose.msra.mxu0 0.0
    %3438 = vmatprep.subr.mxu0 0.0
    %3439 = vmatpush1.xpose.msra.mxu0 0.0
    %3440 = vmatprep.subr.mxu0 0.0
    %3441 = vmatpush1.xpose.msra.mxu0 0.0
    %3442 = vmatprep.subr.mxu0 0.0
    %3443 = vmatpush1.xpose.msra.mxu0 0.0
    %3444 = vmatprep.subr.mxu0 0.0
    %3445 = vmatpush1.xpose.msra.mxu0 0.0
    %3446 = vmatprep.subr.mxu0 0.0
    %3447 = vmatpush1.xpose.msra.mxu0 0.0
    %3448 = vmatprep.subr.mxu0 0.0
    %3449 = vmatpush1.xpose.msra.mxu0 0.0
    %3450 = vmatprep.subr.mxu0 0.0
    %3451 = vmatpush1.xpose.msra.mxu0 0.0
    %3452 = vmatprep.subr.mxu0 0.0
    %3453 = vmatpush1.xpose.msra.mxu0 0.0
    %3454 = vmatprep.subr.mxu0 0.0
    %3455 = vmatpush1.xpose.msra.mxu0 0.0
    %3456 = vmatprep.subr.mxu0 0.0
    %3457 = vmatpush1.xpose.msra.mxu0 0.0
    %3458 = vmatprep.subr.mxu0 0.0
    %3459 = vmatpush1.xpose.msra.mxu0 0.0
    %3460 = vmatprep.subr.mxu0 0.0
    %3461 = vmatpush1.xpose.msra.mxu0 0.0
    %3462 = vmatprep.subr.mxu0 0.0
    %3463 = vmatpush1.xpose.msra.mxu0 0.0
    %3464 = vmatprep.subr.mxu0 0.0
    %3465 = vmatpush1.xpose.msra.mxu0 0.0
    %3466 = vmatprep.subr.mxu0 0.0
    %3467 = vmatpush1.xpose.msra.mxu0 0.0
    %3468 = vmatprep.subr.mxu0 0.0
    %3469 = vmatpush1.xpose.msra.mxu0 0.0
    %3470 = vmatprep.subr.mxu0 0.0
    %3471 = vmatpush1.xpose.msra.mxu0 0.0
    %3472 = vmatprep.subr.mxu0 0.0
    %3473 = vmatpush1.xpose.msra.mxu0 0.0
    %3474 = vmatprep.mubr.f32.mxu0 0.0
    %3475 = vmatmul.mubr.f32.gmra.mrb[0].mxu0 %v3406
    %v3476 = vpop.f32.mrb[0].mxu0
    %v3477 = vadd.f32 0.0, %v3476
    %v3478 = vpop.f32.mrb[0].mxu0
    %3479 = vdwg.mxu0
    %v3480 = vmul.f32 %v3477, 0.35355338
    %v3481 = vsel %vm2337, %v3480, -inf
    %3482 = vmax.xlane.f32.xlu0 %v3481
    %v3483 = vpop.xlane.xlu0 %3482
    %v3484 = vsub.f32 %v3480, %v3483
    %v3485 = vmul.f32 %v3484, 1.442695
    %v3486 = vpow.pop %v3485
    %v3487 = vsel %vm2337, %v3486, 0.0
    %3488 = vadd.xlane.f32.xlu0 %v3487
    %v3489 = vpop.xlane.xlu0 %3488
    %v3490 = vrcp.pop %v3489
    %v3491 = vmul.f32 %v3486, %v3490
    %s3492 = scalar_lea.vmem %s17, 16
    %3493 = vst.msk [vmem:[%s3492] sm:$0xff] %vm2337, %v3491
    %v3494 = vrot.slane %v2176, 2
    %v3496 = vsel %vm2337, %v3491, 0
    %v3498 = vsel %vm2353, %v3494, 0
    %3500 = vmatprep.subr.mxu0 0.0
    %3501 = vmatpush1.msra.mxu0 %v3498
    %3502 = vmatprep.subr.mxu0 0.0
    %3503 = vmatpush1.msra.mxu0 0.0
    %3504 = vmatprep.subr.mxu0 0.0
    %3505 = vmatpush1.msra.mxu0 0.0
    %3506 = vmatprep.subr.mxu0 0.0
    %3507 = vmatpush1.msra.mxu0 0.0
    %3508 = vmatprep.subr.mxu0 0.0
    %3509 = vmatpush1.msra.mxu0 0.0
    %3510 = vmatprep.subr.mxu0 0.0
    %3511 = vmatpush1.msra.mxu0 0.0
    %3512 = vmatprep.subr.mxu0 0.0
    %3513 = vmatpush1.msra.mxu0 0.0
    %3514 = vmatprep.subr.mxu0 0.0
    %3515 = vmatpush1.msra.mxu0 0.0
    %3516 = vmatprep.subr.mxu0 0.0
    %3517 = vmatpush1.msra.mxu0 0.0
    %3518 = vmatprep.subr.mxu0 0.0
    %3519 = vmatpush1.msra.mxu0 0.0
    %3520 = vmatprep.subr.mxu0 0.0
    %3521 = vmatpush1.msra.mxu0 0.0
    %3522 = vmatprep.subr.mxu0 0.0
    %3523 = vmatpush1.msra.mxu0 0.0
    %3524 = vmatprep.subr.mxu0 0.0
    %3525 = vmatpush1.msra.mxu0 0.0
    %3526 = vmatprep.subr.mxu0 0.0
    %3527 = vmatpush1.msra.mxu0 0.0
    %3528 = vmatprep.subr.mxu0 0.0
    %3529 = vmatpush1.msra.mxu0 0.0
    %3530 = vmatprep.subr.mxu0 0.0
    %3531 = vmatpush1.msra.mxu0 0.0
    %3532 = vmatprep.subr.mxu0 0.0
    %3533 = vmatpush1.msra.mxu0 0.0
    %3534 = vmatprep.subr.mxu0 0.0
    %3535 = vmatpush1.msra.mxu0 0.0
    %3536 = vmatprep.subr.mxu0 0.0
    %3537 = vmatpush1.msra.mxu0 0.0
    %3538 = vmatprep.subr.mxu0 0.0
    %3539 = vmatpush1.msra.mxu0 0.0
    %3540 = vmatprep.subr.mxu0 0.0
    %3541 = vmatpush1.msra.mxu0 0.0
    %3542 = vmatprep.subr.mxu0 0.0
    %3543 = vmatpush1.msra.mxu0 0.0
    %3544 = vmatprep.subr.mxu0 0.0
    %3545 = vmatpush1.msra.mxu0 0.0
    %3546 = vmatprep.subr.mxu0 0.0
    %3547 = vmatpush1.msra.mxu0 0.0
    %3548 = vmatprep.subr.mxu0 0.0
    %3549 = vmatpush1.msra.mxu0 0.0
    %3550 = vmatprep.subr.mxu0 0.0
    %3551 = vmatpush1.msra.mxu0 0.0
    %3552 = vmatprep.subr.mxu0 0.0
    %3553 = vmatpush1.msra.mxu0 0.0
    %3554 = vmatprep.subr.mxu0 0.0
    %3555 = vmatpush1.msra.mxu0 0.0
    %3556 = vmatprep.subr.mxu0 0.0
    %3557 = vmatpush1.msra.mxu0 0.0
    %3558 = vmatprep.subr.mxu0 0.0
    %3559 = vmatpush1.msra.mxu0 0.0
    %3560 = vmatprep.subr.mxu0 0.0
    %3561 = vmatpush1.msra.mxu0 0.0
    %3562 = vmatprep.subr.mxu0 0.0
    %3563 = vmatpush1.msra.mxu0 0.0
    %3564 = vmatprep.mubr.f32.mxu0 0.0
    %3565 = vmatmul.mubr.f32.gmra.mrb[0].mxu0 %v3496
    %v3566 = vpop.f32.mrb[0].mxu0
    %v3567 = vadd.f32 0.0, %v3566
    %v3568 = vpop.f32.mrb[0].mxu0
    %3569 = vdwg.mxu0
    %3570 = vrot.lane.b32.xlu0 %v3401, 120
    %v3571 = vpop.permute.xlu0 %3570
    %3572 = vrot.lane.b32.xlu0 %v3404, 120
    %v3573 = vpop.permute.xlu0 %3572
    %v3574 = vsel %vm72, %v3571, 0
    %v3576 = vsel %vm72, %v3573, 0
    %3578 = vmatprep.subr.mxu0 0.0
    %3579 = vmatpush1.xpose.msra.mxu0 %v3576
    %3580 = vmatprep.subr.mxu0 0.0
    %3581 = vmatpush1.xpose.msra.mxu0 0.0
    %3582 = vmatprep.subr.mxu0 0.0
    %3583 = vmatpush1.xpose.msra.mxu0 0.0
    %3584 = vmatprep.subr.mxu0 0.0
    %3585 = vmatpush1.xpose.msra.mxu0 0.0
    %3586 = vmatprep.subr.mxu0 0.0
    %3587 = vmatpush1.xpose.msra.mxu0 0.0
    %3588 = vmatprep.subr.mxu0 0.0
    %3589 = vmatpush1.xpose.msra.mxu0 0.0
    %3590 = vmatprep.subr.mxu0 0.0
    %3591 = vmatpush1.xpose.msra.mxu0 0.0
    %3592 = vmatprep.subr.mxu0 0.0
    %3593 = vmatpush1.xpose.msra.mxu0 0.0
    %3594 = vmatprep.subr.mxu0 0.0
    %3595 = vmatpush1.xpose.msra.mxu0 0.0
    %3596 = vmatprep.subr.mxu0 0.0
    %3597 = vmatpush1.xpose.msra.mxu0 0.0
    %3598 = vmatprep.subr.mxu0 0.0
    %3599 = vmatpush1.xpose.msra.mxu0 0.0
    %3600 = vmatprep.subr.mxu0 0.0
    %3601 = vmatpush1.xpose.msra.mxu0 0.0
    %3602 = vmatprep.subr.mxu0 0.0
    %3603 = vmatpush1.xpose.msra.mxu0 0.0
    %3604 = vmatprep.subr.mxu0 0.0
    %3605 = vmatpush1.xpose.msra.mxu0 0.0
    %3606 = vmatprep.subr.mxu0 0.0
    %3607 = vmatpush1.xpose.msra.mxu0 0.0
    %3608 = vmatprep.subr.mxu0 0.0
    %3609 = vmatpush1.xpose.msra.mxu0 0.0
    %3610 = vmatprep.subr.mxu0 0.0
    %3611 = vmatpush1.xpose.msra.mxu0 0.0
    %3612 = vmatprep.subr.mxu0 0.0
    %3613 = vmatpush1.xpose.msra.mxu0 0.0
    %3614 = vmatprep.subr.mxu0 0.0
    %3615 = vmatpush1.xpose.msra.mxu0 0.0
    %3616 = vmatprep.subr.mxu0 0.0
    %3617 = vmatpush1.xpose.msra.mxu0 0.0
    %3618 = vmatprep.subr.mxu0 0.0
    %3619 = vmatpush1.xpose.msra.mxu0 0.0
    %3620 = vmatprep.subr.mxu0 0.0
    %3621 = vmatpush1.xpose.msra.mxu0 0.0
    %3622 = vmatprep.subr.mxu0 0.0
    %3623 = vmatpush1.xpose.msra.mxu0 0.0
    %3624 = vmatprep.subr.mxu0 0.0
    %3625 = vmatpush1.xpose.msra.mxu0 0.0
    %3626 = vmatprep.subr.mxu0 0.0
    %3627 = vmatpush1.xpose.msra.mxu0 0.0
    %3628 = vmatprep.subr.mxu0 0.0
    %3629 = vmatpush1.xpose.msra.mxu0 0.0
    %3630 = vmatprep.subr.mxu0 0.0
    %3631 = vmatpush1.xpose.msra.mxu0 0.0
    %3632 = vmatprep.subr.mxu0 0.0
    %3633 = vmatpush1.xpose.msra.mxu0 0.0
    %3634 = vmatprep.subr.mxu0 0.0
    %3635 = vmatpush1.xpose.msra.mxu0 0.0
    %3636 = vmatprep.subr.mxu0 0.0
    %3637 = vmatpush1.xpose.msra.mxu0 0.0
    %3638 = vmatprep.subr.mxu0 0.0
    %3639 = vmatpush1.xpose.msra.mxu0 0.0
    %3640 = vmatprep.subr.mxu0 0.0
    %3641 = vmatpush1.xpose.msra.mxu0 0.0
    %3642 = vmatprep.mubr.f32.mxu0 0.0
    %3643 = vmatmul.mubr.f32.gmra.mrb[0].mxu0 %v3574
    %v3644 = vpop.f32.mrb[0].mxu0
    %v3645 = vadd.f32 0.0, %v3644
    %v3646 = vpop.f32.mrb[0].mxu0
    %3647 = vdwg.mxu0
    %v3648 = vmul.f32 %v3645, 0.35355338
    %v3649 = vsel %vm2337, %v3648, -inf
    %3650 = vmax.xlane.f32.xlu0 %v3649
    %v3651 = vpop.xlane.xlu0 %3650
    %v3652 = vsub.f32 %v3648, %v3651
    %v3653 = vmul.f32 %v3652, 1.442695
    %v3654 = vpow.pop %v3653
    %v3655 = vsel %vm2337, %v3654, 0.0
    %3656 = vadd.xlane.f32.xlu0 %v3655
    %v3657 = vpop.xlane.xlu0 %3656
    %v3658 = vrcp.pop %v3657
    %v3659 = vmul.f32 %v3654, %v3658
    %s3660 = scalar_lea.vmem %s17, 24
    %3661 = vst.msk [vmem:[%s3660] sm:$0xff] %vm2337, %v3659
    %3662 = vrot.lane.b32.xlu0 %v3494, 120
    %v3663 = vpop.permute.xlu0 %3662
    %v3665 = vsel %vm2337, %v3659, 0
    %v3667 = vsel %vm2353, %v3663, 0
    %3669 = vmatprep.subr.mxu0 0.0
    %3670 = vmatpush1.msra.mxu0 %v3667
    %3671 = vmatprep.subr.mxu0 0.0
    %3672 = vmatpush1.msra.mxu0 0.0
    %3673 = vmatprep.subr.mxu0 0.0
    %3674 = vmatpush1.msra.mxu0 0.0
    %3675 = vmatprep.subr.mxu0 0.0
    %3676 = vmatpush1.msra.mxu0 0.0
    %3677 = vmatprep.subr.mxu0 0.0
    %3678 = vmatpush1.msra.mxu0 0.0
    %3679 = vmatprep.subr.mxu0 0.0
    %3680 = vmatpush1.msra.mxu0 0.0
    %3681 = vmatprep.subr.mxu0 0.0
    %3682 = vmatpush1.msra.mxu0 0.0
    %3683 = vmatprep.subr.mxu0 0.0
    %3684 = vmatpush1.msra.mxu0 0.0
    %3685 = vmatprep.subr.mxu0 0.0
    %3686 = vmatpush1.msra.mxu0 0.0
    %3687 = vmatprep.subr.mxu0 0.0
    %3688 = vmatpush1.msra.mxu0 0.0
    %3689 = vmatprep.subr.mxu0 0.0
    %3690 = vmatpush1.msra.mxu0 0.0
    %3691 = vmatprep.subr.mxu0 0.0
    %3692 = vmatpush1.msra.mxu0 0.0
    %3693 = vmatprep.subr.mxu0 0.0
    %3694 = vmatpush1.msra.mxu0 0.0
    %3695 = vmatprep.subr.mxu0 0.0
    %3696 = vmatpush1.msra.mxu0 0.0
    %3697 = vmatprep.subr.mxu0 0.0
    %3698 = vmatpush1.msra.mxu0 0.0
    %3699 = vmatprep.subr.mxu0 0.0
    %3700 = vmatpush1.msra.mxu0 0.0
    %3701 = vmatprep.subr.mxu0 0.0
    %3702 = vmatpush1.msra.mxu0 0.0
    %3703 = vmatprep.subr.mxu0 0.0
    %3704 = vmatpush1.msra.mxu0 0.0
    %3705 = vmatprep.subr.mxu0 0.0
    %3706 = vmatpush1.msra.mxu0 0.0
    %3707 = vmatprep.subr.mxu0 0.0
    %3708 = vmatpush1.msra.mxu0 0.0
    %3709 = vmatprep.subr.mxu0 0.0
    %3710 = vmatpush1.msra.mxu0 0.0
    %3711 = vmatprep.subr.mxu0 0.0
    %3712 = vmatpush1.msra.mxu0 0.0
    %3713 = vmatprep.subr.mxu0 0.0
    %3714 = vmatpush1.msra.mxu0 0.0
    %3715 = vmatprep.subr.mxu0 0.0
    %3716 = vmatpush1.msra.mxu0 0.0
    %3717 = vmatprep.subr.mxu0 0.0
    %3718 = vmatpush1.msra.mxu0 0.0
    %3719 = vmatprep.subr.mxu0 0.0
    %3720 = vmatpush1.msra.mxu0 0.0
    %3721 = vmatprep.subr.mxu0 0.0
    %3722 = vmatpush1.msra.mxu0 0.0
    %3723 = vmatprep.subr.mxu0 0.0
    %3724 = vmatpush1.msra.mxu0 0.0
    %3725 = vmatprep.subr.mxu0 0.0
    %3726 = vmatpush1.msra.mxu0 0.0
    %3727 = vmatprep.subr.mxu0 0.0
    %3728 = vmatpush1.msra.mxu0 0.0
    %3729 = vmatprep.subr.mxu0 0.0
    %3730 = vmatpush1.msra.mxu0 0.0
    %3731 = vmatprep.subr.mxu0 0.0
    %3732 = vmatpush1.msra.mxu0 0.0
    %3733 = vmatprep.mubr.f32.mxu0 0.0
    %3734 = vmatmul.mubr.f32.gmra.mrb[0].mxu0 %v3665
    %v3735 = vpop.f32.mrb[0].mxu0
    %v3736 = vadd.f32 0.0, %v3735
    %v3737 = vpop.f32.mrb[0].mxu0
    %3738 = vdwg.mxu0
    %3740 = vrot.lane.b32.xlu0 %v3736, 8
    %v3741 = vpop.permute.xlu0 %3740
    %v3743 = vsel %vm72, %v3567, %v3741
    %v3745 = vsel %vm2601, %v3743, 0
    %3747 = vmatprep.subr.mxu0 0.0
    %3748 = vmatpush1.msra.mxu0 %v2183
    %3749 = vmatprep.subr.mxu0 0.0
    %3750 = vmatpush1.msra.mxu0 %v2184
    %3751 = vmatprep.subr.mxu0 0.0
    %3752 = vmatpush1.msra.mxu0 0.0
    %3753 = vmatprep.subr.mxu0 0.0
    %3754 = vmatpush1.msra.mxu0 0.0
    %3755 = vmatprep.subr.mxu0 0.0
    %3756 = vmatpush1.msra.mxu0 0.0
    %3757 = vmatprep.subr.mxu0 0.0
    %3758 = vmatpush1.msra.mxu0 0.0
    %3759 = vmatprep.subr.mxu0 0.0
    %3760 = vmatpush1.msra.mxu0 0.0
    %3761 = vmatprep.subr.mxu0 0.0
    %3762 = vmatpush1.msra.mxu0 0.0
    %3763 = vmatprep.subr.mxu0 0.0
    %3764 = vmatpush1.msra.mxu0 0.0
    %3765 = vmatprep.subr.mxu0 0.0
    %3766 = vmatpush1.msra.mxu0 0.0
    %3767 = vmatprep.subr.mxu0 0.0
    %3768 = vmatpush1.msra.mxu0 0.0
    %3769 = vmatprep.subr.mxu0 0.0
    %3770 = vmatpush1.msra.mxu0 0.0
    %3771 = vmatprep.subr.mxu0 0.0
    %3772 = vmatpush1.msra.mxu0 0.0
    %3773 = vmatprep.subr.mxu0 0.0
    %3774 = vmatpush1.msra.mxu0 0.0
    %3775 = vmatprep.subr.mxu0 0.0
    %3776 = vmatpush1.msra.mxu0 0.0
    %3777 = vmatprep.subr.mxu0 0.0
    %3778 = vmatpush1.msra.mxu0 0.0
    %3779 = vmatprep.subr.mxu0 0.0
    %3780 = vmatpush1.msra.mxu0 0.0
    %3781 = vmatprep.subr.mxu0 0.0
    %3782 = vmatpush1.msra.mxu0 0.0
    %3783 = vmatprep.subr.mxu0 0.0
    %3784 = vmatpush1.msra.mxu0 0.0
    %3785 = vmatprep.subr.mxu0 0.0
    %3786 = vmatpush1.msra.mxu0 0.0
    %3787 = vmatprep.subr.mxu0 0.0
    %3788 = vmatpush1.msra.mxu0 0.0
    %3789 = vmatprep.subr.mxu0 0.0
    %3790 = vmatpush1.msra.mxu0 0.0
    %3791 = vmatprep.subr.mxu0 0.0
    %3792 = vmatpush1.msra.mxu0 0.0
    %3793 = vmatprep.subr.mxu0 0.0
    %3794 = vmatpush1.msra.mxu0 0.0
    %3795 = vmatprep.subr.mxu0 0.0
    %3796 = vmatpush1.msra.mxu0 0.0
    %3797 = vmatprep.subr.mxu0 0.0
    %3798 = vmatpush1.msra.mxu0 0.0
    %3799 = vmatprep.subr.mxu0 0.0
    %3800 = vmatpush1.msra.mxu0 0.0
    %3801 = vmatprep.subr.mxu0 0.0
    %3802 = vmatpush1.msra.mxu0 0.0
    %3803 = vmatprep.subr.mxu0 0.0
    %3804 = vmatpush1.msra.mxu0 0.0
    %3805 = vmatprep.subr.mxu0 0.0
    %3806 = vmatpush1.msra.mxu0 0.0
    %3807 = vmatprep.subr.mxu0 0.0
    %3808 = vmatpush1.msra.mxu0 0.0
    %3809 = vmatprep.subr.mxu0 0.0
    %3810 = vmatpush1.msra.mxu0 0.0
    %3811 = vmatprep.mubr.f32.mxu0 0.0
    %3812 = vmatmul.mubr.f32.gmra.mrb[0].mxu0 %v3745
    %v3813 = vpop.f32.mrb[0].mxu0
    %v3814 = vadd.f32 0.0, %v3813
    %v3815 = vpop.f32.mrb[0].mxu0
    %3816 = vdwg.mxu0
    %3817 = vrot.lane.b32.xlu0 %v3330, 16
    %v3818 = vpop.permute.xlu0 %3817
    %v3820 = vsel %vm2601, %v3814, %v3818
    %v3821 = vmax.f32 %v3820, 0.0
    %v3822 = vld [vmem:[%s14] sm:$0xff]
    %v3823 = vld [vmem:[%s14 + $0x8] sm:$0xff]
    %v3824 = vld [vmem:[%s14 + $0x10] sm:$0xff]
    %v3825 = vld [vmem:[%s14 + $0x18] sm:$0xff]
    %v3826 = vld [vmem:[%s14 + $0x20] sm:$0xff]
    %v3827 = vld [vmem:[%s14 + $0x28] sm:$0xff]
    %v3829 = vsel %vm2686, %v3821, 0
    %3831 = vmatprep.subr.mxu0 0.0
    %3832 = vmatpush1.msra.mxu0 %v3822
    %3833 = vmatprep.subr.mxu0 0.0
    %3834 = vmatpush1.msra.mxu0 %v3823
    %3835 = vmatprep.subr.mxu0 0.0
    %3836 = vmatpush1.msra.mxu0 %v3824
    %3837 = vmatprep.subr.mxu0 0.0
    %3838 = vmatpush1.msra.mxu0 %v3825
    %3839 = vmatprep.subr.mxu0 0.0
    %3840 = vmatpush1.msra.mxu0 %v3826
    %3841 = vmatprep.subr.mxu0 0.0
    %3842 = vmatpush1.msra.mxu0 %v3827
    %3843 = vmatprep.subr.mxu0 0.0
    %3844 = vmatpush1.msra.mxu0 0.0
    %3845 = vmatprep.subr.mxu0 0.0
    %3846 = vmatpush1.msra.mxu0 0.0
    %3847 = vmatprep.subr.mxu0 0.0
    %3848 = vmatpush1.msra.mxu0 0.0
    %3849 = vmatprep.subr.mxu0 0.0
    %3850 = vmatpush1.msra.mxu0 0.0
    %3851 = vmatprep.subr.mxu0 0.0
    %3852 = vmatpush1.msra.mxu0 0.0
    %3853 = vmatprep.subr.mxu0 0.0
    %3854 = vmatpush1.msra.mxu0 0.0
    %3855 = vmatprep.subr.mxu0 0.0
    %3856 = vmatpush1.msra.mxu0 0.0
    %3857 = vmatprep.subr.mxu0 0.0
    %3858 = vmatpush1.msra.mxu0 0.0
    %3859 = vmatprep.subr.mxu0 0.0
    %3860 = vmatpush1.msra.mxu0 0.0
    %3861 = vmatprep.subr.mxu0 0.0
    %3862 = vmatpush1.msra.mxu0 0.0
    %3863 = vmatprep.subr.mxu0 0.0
    %3864 = vmatpush1.msra.mxu0 0.0
    %3865 = vmatprep.subr.mxu0 0.0
    %3866 = vmatpush1.msra.mxu0 0.0
    %3867 = vmatprep.subr.mxu0 0.0
    %3868 = vmatpush1.msra.mxu0 0.0
    %3869 = vmatprep.subr.mxu0 0.0
    %3870 = vmatpush1.msra.mxu0 0.0
    %3871 = vmatprep.subr.mxu0 0.0
    %3872 = vmatpush1.msra.mxu0 0.0
    %3873 = vmatprep.subr.mxu0 0.0
    %3874 = vmatpush1.msra.mxu0 0.0
    %3875 = vmatprep.subr.mxu0 0.0
    %3876 = vmatpush1.msra.mxu0 0.0
    %3877 = vmatprep.subr.mxu0 0.0
    %3878 = vmatpush1.msra.mxu0 0.0
    %3879 = vmatprep.subr.mxu0 0.0
    %3880 = vmatpush1.msra.mxu0 0.0
    %3881 = vmatprep.subr.mxu0 0.0
    %3882 = vmatpush1.msra.mxu0 0.0
    %3883 = vmatprep.subr.mxu0 0.0
    %3884 = vmatpush1.msra.mxu0 0.0
    %3885 = vmatprep.subr.mxu0 0.0
    %3886 = vmatpush1.msra.mxu0 0.0
    %3887 = vmatprep.subr.mxu0 0.0
    %3888 = vmatpush1.msra.mxu0 0.0
    %3889 = vmatprep.subr.mxu0 0.0
    %3890 = vmatpush1.msra.mxu0 0.0
    %3891 = vmatprep.subr.mxu0 0.0
    %3892 = vmatpush1.msra.mxu0 0.0
    %3893 = vmatprep.subr.mxu0 0.0
    %3894 = vmatpush1.msra.mxu0 0.0
    %3895 = vmatprep.mubr.f32.mxu0 0.0
    %3896 = vmatmul.mubr.f32.gmra.mrb[0].mxu0 %v3829
    %v3897 = vpop.f32.mrb[0].mxu0
    %v3898 = vadd.f32 0.0, %v3897
    %v3899 = vpop.f32.mrb[0].mxu0
    %3900 = vdwg.mxu0
    %v3901 = vadd.f32 %v2185, %v3898
    %v3902 = vld [vmem:[%s2761] sm:$0xff]
    %v3903 = vld [vmem:[%s2761 + $0x8] sm:$0xff]
    %v3904 = vld [vmem:[%s2761 + $0x10] sm:$0xff]
    %v3905 = vld [vmem:[%s2761 + $0x18] sm:$0xff]
    %v3906 = vld [vmem:[%s2761 + $0x20] sm:$0xff]
    %v3907 = vld [vmem:[%s2761 + $0x28] sm:$0xff]
    %v3908 = vrot.slane %v3821, 1
    %v3909 = vsel %vm2686, %v3908, 0
    %3911 = vmatprep.subr.mxu0 0.0
    %3912 = vmatpush1.msra.mxu0 %v3902
    %3913 = vmatprep.subr.mxu0 0.0
    %3914 = vmatpush1.msra.mxu0 %v3903
    %3915 = vmatprep.subr.mxu0 0.0
    %3916 = vmatpush1.msra.mxu0 %v3904
    %3917 = vmatprep.subr.mxu0 0.0
    %3918 = vmatpush1.msra.mxu0 %v3905
    %3919 = vmatprep.subr.mxu0 0.0
    %3920 = vmatpush1.msra.mxu0 %v3906
    %3921 = vmatprep.subr.mxu0 0.0
    %3922 = vmatpush1.msra.mxu0 %v3907
    %3923 = vmatprep.subr.mxu0 0.0
    %3924 = vmatpush1.msra.mxu0 0.0
    %3925 = vmatprep.subr.mxu0 0.0
    %3926 = vmatpush1.msra.mxu0 0.0
    %3927 = vmatprep.subr.mxu0 0.0
    %3928 = vmatpush1.msra.mxu0 0.0
    %3929 = vmatprep.subr.mxu0 0.0
    %3930 = vmatpush1.msra.mxu0 0.0
    %3931 = vmatprep.subr.mxu0 0.0
    %3932 = vmatpush1.msra.mxu0 0.0
    %3933 = vmatprep.subr.mxu0 0.0
    %3934 = vmatpush1.msra.mxu0 0.0
    %3935 = vmatprep.subr.mxu0 0.0
    %3936 = vmatpush1.msra.mxu0 0.0
    %3937 = vmatprep.subr.mxu0 0.0
    %3938 = vmatpush1.msra.mxu0 0.0
    %3939 = vmatprep.subr.mxu0 0.0
    %3940 = vmatpush1.msra.mxu0 0.0
    %3941 = vmatprep.subr.mxu0 0.0
    %3942 = vmatpush1.msra.mxu0 0.0
    %3943 = vmatprep.subr.mxu0 0.0
    %3944 = vmatpush1.msra.mxu0 0.0
    %3945 = vmatprep.subr.mxu0 0.0
    %3946 = vmatpush1.msra.mxu0 0.0
    %3947 = vmatprep.subr.mxu0 0.0
    %3948 = vmatpush1.msra.mxu0 0.0
    %3949 = vmatprep.subr.mxu0 0.0
    %3950 = vmatpush1.msra.mxu0 0.0
    %3951 = vmatprep.subr.mxu0 0.0
    %3952 = vmatpush1.msra.mxu0 0.0
    %3953 = vmatprep.subr.mxu0 0.0
    %3954 = vmatpush1.msra.mxu0 0.0
    %3955 = vmatprep.subr.mxu0 0.0
    %3956 = vmatpush1.msra.mxu0 0.0
    %3957 = vmatprep.subr.mxu0 0.0
    %3958 = vmatpush1.msra.mxu0 0.0
    %3959 = vmatprep.subr.mxu0 0.0
    %3960 = vmatpush1.msra.mxu0 0.0
    %3961 = vmatprep.subr.mxu0 0.0
    %3962 = vmatpush1.msra.mxu0 0.0
    %3963 = vmatprep.subr.mxu0 0.0
    %3964 = vmatpush1.msra.mxu0 0.0
    %3965 = vmatprep.subr.mxu0 0.0
    %3966 = vmatpush1.msra.mxu0 0.0
    %3967 = vmatprep.subr.mxu0 0.0
    %3968 = vmatpush1.msra.mxu0 0.0
    %3969 = vmatprep.subr.mxu0 0.0
    %3970 = vmatpush1.msra.mxu0 0.0
    %3971 = vmatprep.subr.mxu0 0.0
    %3972 = vmatpush1.msra.mxu0 0.0
    %3973 = vmatprep.subr.mxu0 0.0
    %3974 = vmatpush1.msra.mxu0 0.0
    %3975 = vmatprep.mubr.f32.mxu0 0.0
    %3976 = vmatmul.mubr.f32.gmra.mrb[0].mxu0 %v3909
    %v3977 = vpop.f32.mrb[0].mxu0
    %v3978 = vadd.f32 0.0, %v3977
    %v3979 = vpop.f32.mrb[0].mxu0
    %3980 = vdwg.mxu0
    %v3981 = vadd.f32 %v3901, %v3978
    %v3982 = vld [vmem:[%s2842] sm:$0xff]
    %v3983 = vld [vmem:[%s2842 + $0x8] sm:$0xff]
    %v3984 = vld [vmem:[%s2842 + $0x10] sm:$0xff]
    %v3985 = vld [vmem:[%s2842 + $0x18] sm:$0xff]
    %v3986 = vld [vmem:[%s2842 + $0x20] sm:$0xff]
    %v3987 = vld [vmem:[%s2842 + $0x28] sm:$0xff]
    %v3988 = vrot.slane %v3821, 2
    %v3989 = vsel %vm2686, %v3988, 0
    %3991 = vmatprep.subr.mxu0 0.0
    %3992 = vmatpush1.msra.mxu0 %v3982
    %3993 = vmatprep.subr.mxu0 0.0
    %3994 = vmatpush1.msra.mxu0 %v3983
    %3995 = vmatprep.subr.mxu0 0.0
    %3996 = vmatpush1.msra.mxu0 %v3984
    %3997 = vmatprep.subr.mxu0 0.0
    %3998 = vmatpush1.msra.mxu0 %v3985
    %3999 = vmatprep.subr.mxu0 0.0
    %4000 = vmatpush1.msra.mxu0 %v3986
    %4001 = vmatprep.subr.mxu0 0.0
    %4002 = vmatpush1.msra.mxu0 %v3987
    %4003 = vmatprep.subr.mxu0 0.0
    %4004 = vmatpush1.msra.mxu0 0.0
    %4005 = vmatprep.subr.mxu0 0.0
    %4006 = vmatpush1.msra.mxu0 0.0
    %4007 = vmatprep.subr.mxu0 0.0
    %4008 = vmatpush1.msra.mxu0 0.0
    %4009 = vmatprep.subr.mxu0 0.0
    %4010 = vmatpush1.msra.mxu0 0.0
    %4011 = vmatprep.subr.mxu0 0.0
    %4012 = vmatpush1.msra.mxu0 0.0
    %4013 = vmatprep.subr.mxu0 0.0
    %4014 = vmatpush1.msra.mxu0 0.0
    %4015 = vmatprep.subr.mxu0 0.0
    %4016 = vmatpush1.msra.mxu0 0.0
    %4017 = vmatprep.subr.mxu0 0.0
    %4018 = vmatpush1.msra.mxu0 0.0
    %4019 = vmatprep.subr.mxu0 0.0
    %4020 = vmatpush1.msra.mxu0 0.0
    %4021 = vmatprep.subr.mxu0 0.0
    %4022 = vmatpush1.msra.mxu0 0.0
    %4023 = vmatprep.subr.mxu0 0.0
    %4024 = vmatpush1.msra.mxu0 0.0
    %4025 = vmatprep.subr.mxu0 0.0
    %4026 = vmatpush1.msra.mxu0 0.0
    %4027 = vmatprep.subr.mxu0 0.0
    %4028 = vmatpush1.msra.mxu0 0.0
    %4029 = vmatprep.subr.mxu0 0.0
    %4030 = vmatpush1.msra.mxu0 0.0
    %4031 = vmatprep.subr.mxu0 0.0
    %4032 = vmatpush1.msra.mxu0 0.0
    %4033 = vmatprep.subr.mxu0 0.0
    %4034 = vmatpush1.msra.mxu0 0.0
    %4035 = vmatprep.subr.mxu0 0.0
    %4036 = vmatpush1.msra.mxu0 0.0
    %4037 = vmatprep.subr.mxu0 0.0
    %4038 = vmatpush1.msra.mxu0 0.0
    %4039 = vmatprep.subr.mxu0 0.0
    %4040 = vmatpush1.msra.mxu0 0.0
    %4041 = vmatprep.subr.mxu0 0.0
    %4042 = vmatpush1.msra.mxu0 0.0
    %4043 = vmatprep.subr.mxu0 0.0
    %4044 = vmatpush1.msra.mxu0 0.0
    %4045 = vmatprep.subr.mxu0 0.0
    %4046 = vmatpush1.msra.mxu0 0.0
    %4047 = vmatprep.subr.mxu0 0.0
    %4048 = vmatpush1.msra.mxu0 0.0
    %4049 = vmatprep.subr.mxu0 0.0
    %4050 = vmatpush1.msra.mxu0 0.0
    %4051 = vmatprep.subr.mxu0 0.0
    %4052 = vmatpush1.msra.mxu0 0.0
    %4053 = vmatprep.subr.mxu0 0.0
    %4054 = vmatpush1.msra.mxu0 0.0
    %4055 = vmatprep.mubr.f32.mxu0 0.0
    %4056 = vmatmul.mubr.f32.gmra.mrb[0].mxu0 %v3989
    %v4057 = vpop.f32.mrb[0].mxu0
    %v4058 = vadd.f32 0.0, %v4057
    %v4059 = vpop.f32.mrb[0].mxu0
    %4060 = vdwg.mxu0
    %v4061 = vadd.f32 %v3981, %v4058
    %v4062 = vld [vmem:[%s2923] sm:$0xff]
    %v4063 = vld [vmem:[%s2923 + $0x8] sm:$0xff]
    %v4064 = vld [vmem:[%s2923 + $0x10] sm:$0xff]
    %v4065 = vld [vmem:[%s2923 + $0x18] sm:$0xff]
    %v4066 = vld [vmem:[%s2923 + $0x20] sm:$0xff]
    %v4067 = vld [vmem:[%s2923 + $0x28] sm:$0xff]
    %v4068 = vrot.slane %v3821, 3
    %v4069 = vsel %vm2686, %v4068, 0
    %4071 = vmatprep.subr.mxu0 0.0
    %4072 = vmatpush1.msra.mxu0 %v4062
    %4073 = vmatprep.subr.mxu0 0.0
    %4074 = vmatpush1.msra.mxu0 %v4063
    %4075 = vmatprep.subr.mxu0 0.0
    %4076 = vmatpush1.msra.mxu0 %v4064
    %4077 = vmatprep.subr.mxu0 0.0
    %4078 = vmatpush1.msra.mxu0 %v4065
    %4079 = vmatprep.subr.mxu0 0.0
    %4080 = vmatpush1.msra.mxu0 %v4066
    %4081 = vmatprep.subr.mxu0 0.0
    %4082 = vmatpush1.msra.mxu0 %v4067
    %4083 = vmatprep.subr.mxu0 0.0
    %4084 = vmatpush1.msra.mxu0 0.0
    %4085 = vmatprep.subr.mxu0 0.0
    %4086 = vmatpush1.msra.mxu0 0.0
    %4087 = vmatprep.subr.mxu0 0.0
    %4088 = vmatpush1.msra.mxu0 0.0
    %4089 = vmatprep.subr.mxu0 0.0
    %4090 = vmatpush1.msra.mxu0 0.0
    %4091 = vmatprep.subr.mxu0 0.0
    %4092 = vmatpush1.msra.mxu0 0.0
    %4093 = vmatprep.subr.mxu0 0.0
    %4094 = vmatpush1.msra.mxu0 0.0
    %4095 = vmatprep.subr.mxu0 0.0
    %4096 = vmatpush1.msra.mxu0 0.0
    %4097 = vmatprep.subr.mxu0 0.0
    %4098 = vmatpush1.msra.mxu0 0.0
    %4099 = vmatprep.subr.mxu0 0.0
    %4100 = vmatpush1.msra.mxu0 0.0
    %4101 = vmatprep.subr.mxu0 0.0
    %4102 = vmatpush1.msra.mxu0 0.0
    %4103 = vmatprep.subr.mxu0 0.0
    %4104 = vmatpush1.msra.mxu0 0.0
    %4105 = vmatprep.subr.mxu0 0.0
    %4106 = vmatpush1.msra.mxu0 0.0
    %4107 = vmatprep.subr.mxu0 0.0
    %4108 = vmatpush1.msra.mxu0 0.0
    %4109 = vmatprep.subr.mxu0 0.0
    %4110 = vmatpush1.msra.mxu0 0.0
    %4111 = vmatprep.subr.mxu0 0.0
    %4112 = vmatpush1.msra.mxu0 0.0
    %4113 = vmatprep.subr.mxu0 0.0
    %4114 = vmatpush1.msra.mxu0 0.0
    %4115 = vmatprep.subr.mxu0 0.0
    %4116 = vmatpush1.msra.mxu0 0.0
    %4117 = vmatprep.subr.mxu0 0.0
    %4118 = vmatpush1.msra.mxu0 0.0
    %4119 = vmatprep.subr.mxu0 0.0
    %4120 = vmatpush1.msra.mxu0 0.0
    %4121 = vmatprep.subr.mxu0 0.0
    %4122 = vmatpush1.msra.mxu0 0.0
    %4123 = vmatprep.subr.mxu0 0.0
    %4124 = vmatpush1.msra.mxu0 0.0
    %4125 = vmatprep.subr.mxu0 0.0
    %4126 = vmatpush1.msra.mxu0 0.0
    %4127 = vmatprep.subr.mxu0 0.0
    %4128 = vmatpush1.msra.mxu0 0.0
    %4129 = vmatprep.subr.mxu0 0.0
    %4130 = vmatpush1.msra.mxu0 0.0
    %4131 = vmatprep.subr.mxu0 0.0
    %4132 = vmatpush1.msra.mxu0 0.0
    %4133 = vmatprep.subr.mxu0 0.0
    %4134 = vmatpush1.msra.mxu0 0.0
    %4135 = vmatprep.mubr.f32.mxu0 0.0
    %4136 = vmatmul.mubr.f32.gmra.mrb[0].mxu0 %v4069
    %v4137 = vpop.f32.mrb[0].mxu0
    %v4138 = vadd.f32 0.0, %v4137
    %v4139 = vpop.f32.mrb[0].mxu0
    %4140 = vdwg.mxu0
    %v4141 = vadd.f32 %v4061, %v4138
    %v4142 = vld [vmem:[%s3004] sm:$0xff]
    %v4143 = vld [vmem:[%s3004 + $0x8] sm:$0xff]
    %v4144 = vld [vmem:[%s3004 + $0x10] sm:$0xff]
    %v4145 = vld [vmem:[%s3004 + $0x18] sm:$0xff]
    %v4146 = vld [vmem:[%s3004 + $0x20] sm:$0xff]
    %v4147 = vld [vmem:[%s3004 + $0x28] sm:$0xff]
    %v4148 = vrot.slane %v3821, 4
    %v4149 = vsel %vm2686, %v4148, 0
    %4151 = vmatprep.subr.mxu0 0.0
    %4152 = vmatpush1.msra.mxu0 %v4142
    %4153 = vmatprep.subr.mxu0 0.0
    %4154 = vmatpush1.msra.mxu0 %v4143
    %4155 = vmatprep.subr.mxu0 0.0
    %4156 = vmatpush1.msra.mxu0 %v4144
    %4157 = vmatprep.subr.mxu0 0.0
    %4158 = vmatpush1.msra.mxu0 %v4145
    %4159 = vmatprep.subr.mxu0 0.0
    %4160 = vmatpush1.msra.mxu0 %v4146
    %4161 = vmatprep.subr.mxu0 0.0
    %4162 = vmatpush1.msra.mxu0 %v4147
    %4163 = vmatprep.subr.mxu0 0.0
    %4164 = vmatpush1.msra.mxu0 0.0
    %4165 = vmatprep.subr.mxu0 0.0
    %4166 = vmatpush1.msra.mxu0 0.0
    %4167 = vmatprep.subr.mxu0 0.0
    %4168 = vmatpush1.msra.mxu0 0.0
    %4169 = vmatprep.subr.mxu0 0.0
    %4170 = vmatpush1.msra.mxu0 0.0
    %4171 = vmatprep.subr.mxu0 0.0
    %4172 = vmatpush1.msra.mxu0 0.0
    %4173 = vmatprep.subr.mxu0 0.0
    %4174 = vmatpush1.msra.mxu0 0.0
    %4175 = vmatprep.subr.mxu0 0.0
    %4176 = vmatpush1.msra.mxu0 0.0
    %4177 = vmatprep.subr.mxu0 0.0
    %4178 = vmatpush1.msra.mxu0 0.0
    %4179 = vmatprep.subr.mxu0 0.0
    %4180 = vmatpush1.msra.mxu0 0.0
    %4181 = vmatprep.subr.mxu0 0.0
    %4182 = vmatpush1.msra.mxu0 0.0
    %4183 = vmatprep.subr.mxu0 0.0
    %4184 = vmatpush1.msra.mxu0 0.0
    %4185 = vmatprep.subr.mxu0 0.0
    %4186 = vmatpush1.msra.mxu0 0.0
    %4187 = vmatprep.subr.mxu0 0.0
    %4188 = vmatpush1.msra.mxu0 0.0
    %4189 = vmatprep.subr.mxu0 0.0
    %4190 = vmatpush1.msra.mxu0 0.0
    %4191 = vmatprep.subr.mxu0 0.0
    %4192 = vmatpush1.msra.mxu0 0.0
    %4193 = vmatprep.subr.mxu0 0.0
    %4194 = vmatpush1.msra.mxu0 0.0
    %4195 = vmatprep.subr.mxu0 0.0
    %4196 = vmatpush1.msra.mxu0 0.0
    %4197 = vmatprep.subr.mxu0 0.0
    %4198 = vmatpush1.msra.mxu0 0.0
    %4199 = vmatprep.subr.mxu0 0.0
    %4200 = vmatpush1.msra.mxu0 0.0
    %4201 = vmatprep.subr.mxu0 0.0
    %4202 = vmatpush1.msra.mxu0 0.0
    %4203 = vmatprep.subr.mxu0 0.0
    %4204 = vmatpush1.msra.mxu0 0.0
    %4205 = vmatprep.subr.mxu0 0.0
    %4206 = vmatpush1.msra.mxu0 0.0
    %4207 = vmatprep.subr.mxu0 0.0
    %4208 = vmatpush1.msra.mxu0 0.0
    %4209 = vmatprep.subr.mxu0 0.0
    %4210 = vmatpush1.msra.mxu0 0.0
    %4211 = vmatprep.subr.mxu0 0.0
    %4212 = vmatpush1.msra.mxu0 0.0
    %4213 = vmatprep.subr.mxu0 0.0
    %4214 = vmatpush1.msra.mxu0 0.0
    %4215 = vmatprep.mubr.f32.mxu0 0.0
    %4216 = vmatmul.mubr.f32.gmra.mrb[0].mxu0 %v4149
    %v4217 = vpop.f32.mrb[0].mxu0
    %v4218 = vadd.f32 0.0, %v4217
    %v4219 = vpop.f32.mrb[0].mxu0
    %4220 = vdwg.mxu0
    %v4221 = vadd.f32 %v4141, %v4218
    %v4222 = vld [vmem:[%s3085] sm:$0xff]
    %v4223 = vld [vmem:[%s3085 + $0x8] sm:$0xff]
    %v4224 = vld [vmem:[%s3085 + $0x10] sm:$0xff]
    %v4225 = vld [vmem:[%s3085 + $0x18] sm:$0xff]
    %v4226 = vld [vmem:[%s3085 + $0x20] sm:$0xff]
    %v4227 = vld [vmem:[%s3085 + $0x28] sm:$0xff]
    %v4228 = vrot.slane %v3821, 5
    %v4229 = vsel %vm2686, %v4228, 0
    %4231 = vmatprep.subr.mxu0 0.0
    %4232 = vmatpush1.msra.mxu0 %v4222
    %4233 = vmatprep.subr.mxu0 0.0
    %4234 = vmatpush1.msra.mxu0 %v4223
    %4235 = vmatprep.subr.mxu0 0.0
    %4236 = vmatpush1.msra.mxu0 %v4224
    %4237 = vmatprep.subr.mxu0 0.0
    %4238 = vmatpush1.msra.mxu0 %v4225
    %4239 = vmatprep.subr.mxu0 0.0
    %4240 = vmatpush1.msra.mxu0 %v4226
    %4241 = vmatprep.subr.mxu0 0.0
    %4242 = vmatpush1.msra.mxu0 %v4227
    %4243 = vmatprep.subr.mxu0 0.0
    %4244 = vmatpush1.msra.mxu0 0.0
    %4245 = vmatprep.subr.mxu0 0.0
    %4246 = vmatpush1.msra.mxu0 0.0
    %4247 = vmatprep.subr.mxu0 0.0
    %4248 = vmatpush1.msra.mxu0 0.0
    %4249 = vmatprep.subr.mxu0 0.0
    %4250 = vmatpush1.msra.mxu0 0.0
    %4251 = vmatprep.subr.mxu0 0.0
    %4252 = vmatpush1.msra.mxu0 0.0
    %4253 = vmatprep.subr.mxu0 0.0
    %4254 = vmatpush1.msra.mxu0 0.0
    %4255 = vmatprep.subr.mxu0 0.0
    %4256 = vmatpush1.msra.mxu0 0.0
    %4257 = vmatprep.subr.mxu0 0.0
    %4258 = vmatpush1.msra.mxu0 0.0
    %4259 = vmatprep.subr.mxu0 0.0
    %4260 = vmatpush1.msra.mxu0 0.0
    %4261 = vmatprep.subr.mxu0 0.0
    %4262 = vmatpush1.msra.mxu0 0.0
    %4263 = vmatprep.subr.mxu0 0.0
    %4264 = vmatpush1.msra.mxu0 0.0
    %4265 = vmatprep.subr.mxu0 0.0
    %4266 = vmatpush1.msra.mxu0 0.0
    %4267 = vmatprep.subr.mxu0 0.0
    %4268 = vmatpush1.msra.mxu0 0.0
    %4269 = vmatprep.subr.mxu0 0.0
    %4270 = vmatpush1.msra.mxu0 0.0
    %4271 = vmatprep.subr.mxu0 0.0
    %4272 = vmatpush1.msra.mxu0 0.0
    %4273 = vmatprep.subr.mxu0 0.0
    %4274 = vmatpush1.msra.mxu0 0.0
    %4275 = vmatprep.subr.mxu0 0.0
    %4276 = vmatpush1.msra.mxu0 0.0
    %4277 = vmatprep.subr.mxu0 0.0
    %4278 = vmatpush1.msra.mxu0 0.0
    %4279 = vmatprep.subr.mxu0 0.0
    %4280 = vmatpush1.msra.mxu0 0.0
    %4281 = vmatprep.subr.mxu0 0.0
    %4282 = vmatpush1.msra.mxu0 0.0
    %4283 = vmatprep.subr.mxu0 0.0
    %4284 = vmatpush1.msra.mxu0 0.0
    %4285 = vmatprep.subr.mxu0 0.0
    %4286 = vmatpush1.msra.mxu0 0.0
    %4287 = vmatprep.subr.mxu0 0.0
    %4288 = vmatpush1.msra.mxu0 0.0
    %4289 = vmatprep.subr.mxu0 0.0
    %4290 = vmatpush1.msra.mxu0 0.0
    %4291 = vmatprep.subr.mxu0 0.0
    %4292 = vmatpush1.msra.mxu0 0.0
    %4293 = vmatprep.subr.mxu0 0.0
    %4294 = vmatpush1.msra.mxu0 0.0
    %4295 = vmatprep.mubr.f32.mxu0 0.0
    %4296 = vmatmul.mubr.f32.gmra.mrb[0].mxu0 %v4229
    %v4297 = vpop.f32.mrb[0].mxu0
    %v4298 = vadd.f32 0.0, %v4297
    %v4299 = vpop.f32.mrb[0].mxu0
    %4300 = vdwg.mxu0
    %v4301 = vadd.f32 %v4221, %v4298
    %v4302 = vld [vmem:[%s3166] sm:$0xff]
    %v4303 = vld [vmem:[%s3166 + $0x8] sm:$0xff]
    %v4304 = vld [vmem:[%s3166 + $0x10] sm:$0xff]
    %v4305 = vld [vmem:[%s3166 + $0x18] sm:$0xff]
    %v4306 = vld [vmem:[%s3166 + $0x20] sm:$0xff]
    %v4307 = vld [vmem:[%s3166 + $0x28] sm:$0xff]
    %v4308 = vrot.slane %v3821, 6
    %v4309 = vsel %vm2686, %v4308, 0
    %4311 = vmatprep.subr.mxu0 0.0
    %4312 = vmatpush1.msra.mxu0 %v4302
    %4313 = vmatprep.subr.mxu0 0.0
    %4314 = vmatpush1.msra.mxu0 %v4303
    %4315 = vmatprep.subr.mxu0 0.0
    %4316 = vmatpush1.msra.mxu0 %v4304
    %4317 = vmatprep.subr.mxu0 0.0
    %4318 = vmatpush1.msra.mxu0 %v4305
    %4319 = vmatprep.subr.mxu0 0.0
    %4320 = vmatpush1.msra.mxu0 %v4306
    %4321 = vmatprep.subr.mxu0 0.0
    %4322 = vmatpush1.msra.mxu0 %v4307
    %4323 = vmatprep.subr.mxu0 0.0
    %4324 = vmatpush1.msra.mxu0 0.0
    %4325 = vmatprep.subr.mxu0 0.0
    %4326 = vmatpush1.msra.mxu0 0.0
    %4327 = vmatprep.subr.mxu0 0.0
    %4328 = vmatpush1.msra.mxu0 0.0
    %4329 = vmatprep.subr.mxu0 0.0
    %4330 = vmatpush1.msra.mxu0 0.0
    %4331 = vmatprep.subr.mxu0 0.0
    %4332 = vmatpush1.msra.mxu0 0.0
    %4333 = vmatprep.subr.mxu0 0.0
    %4334 = vmatpush1.msra.mxu0 0.0
    %4335 = vmatprep.subr.mxu0 0.0
    %4336 = vmatpush1.msra.mxu0 0.0
    %4337 = vmatprep.subr.mxu0 0.0
    %4338 = vmatpush1.msra.mxu0 0.0
    %4339 = vmatprep.subr.mxu0 0.0
    %4340 = vmatpush1.msra.mxu0 0.0
    %4341 = vmatprep.subr.mxu0 0.0
    %4342 = vmatpush1.msra.mxu0 0.0
    %4343 = vmatprep.subr.mxu0 0.0
    %4344 = vmatpush1.msra.mxu0 0.0
    %4345 = vmatprep.subr.mxu0 0.0
    %4346 = vmatpush1.msra.mxu0 0.0
    %4347 = vmatprep.subr.mxu0 0.0
    %4348 = vmatpush1.msra.mxu0 0.0
    %4349 = vmatprep.subr.mxu0 0.0
    %4350 = vmatpush1.msra.mxu0 0.0
    %4351 = vmatprep.subr.mxu0 0.0
    %4352 = vmatpush1.msra.mxu0 0.0
    %4353 = vmatprep.subr.mxu0 0.0
    %4354 = vmatpush1.msra.mxu0 0.0
    %4355 = vmatprep.subr.mxu0 0.0
    %4356 = vmatpush1.msra.mxu0 0.0
    %4357 = vmatprep.subr.mxu0 0.0
    %4358 = vmatpush1.msra.mxu0 0.0
    %4359 = vmatprep.subr.mxu0 0.0
    %4360 = vmatpush1.msra.mxu0 0.0
    %4361 = vmatprep.subr.mxu0 0.0
    %4362 = vmatpush1.msra.mxu0 0.0
    %4363 = vmatprep.subr.mxu0 0.0
    %4364 = vmatpush1.msra.mxu0 0.0
    %4365 = vmatprep.subr.mxu0 0.0
    %4366 = vmatpush1.msra.mxu0 0.0
    %4367 = vmatprep.subr.mxu0 0.0
    %4368 = vmatpush1.msra.mxu0 0.0
    %4369 = vmatprep.subr.mxu0 0.0
    %4370 = vmatpush1.msra.mxu0 0.0
    %4371 = vmatprep.subr.mxu0 0.0
    %4372 = vmatpush1.msra.mxu0 0.0
    %4373 = vmatprep.subr.mxu0 0.0
    %4374 = vmatpush1.msra.mxu0 0.0
    %4375 = vmatprep.mubr.f32.mxu0 0.0
    %4376 = vmatmul.mubr.f32.gmra.mrb[0].mxu0 %v4309
    %v4377 = vpop.f32.mrb[0].mxu0
    %v4378 = vadd.f32 0.0, %v4377
    %v4379 = vpop.f32.mrb[0].mxu0
    %4380 = vdwg.mxu0
    %v4381 = vadd.f32 %v4301, %v4378
    %v4382 = vld [vmem:[%s3247] sm:$0xff]
    %v4383 = vld [vmem:[%s3247 + $0x8] sm:$0xff]
    %v4384 = vld [vmem:[%s3247 + $0x10] sm:$0xff]
    %v4385 = vld [vmem:[%s3247 + $0x18] sm:$0xff]
    %v4386 = vld [vmem:[%s3247 + $0x20] sm:$0xff]
    %v4387 = vld [vmem:[%s3247 + $0x28] sm:$0xff]
    %v4388 = vrot.slane %v3821, 7
    %v4389 = vsel %vm2686, %v4388, 0
    %4391 = vmatprep.subr.mxu0 0.0
    %4392 = vmatpush1.msra.mxu0 %v4382
    %4393 = vmatprep.subr.mxu0 0.0
    %4394 = vmatpush1.msra.mxu0 %v4383
    %4395 = vmatprep.subr.mxu0 0.0
    %4396 = vmatpush1.msra.mxu0 %v4384
    %4397 = vmatprep.subr.mxu0 0.0
    %4398 = vmatpush1.msra.mxu0 %v4385
    %4399 = vmatprep.subr.mxu0 0.0
    %4400 = vmatpush1.msra.mxu0 %v4386
    %4401 = vmatprep.subr.mxu0 0.0
    %4402 = vmatpush1.msra.mxu0 %v4387
    %4403 = vmatprep.subr.mxu0 0.0
    %4404 = vmatpush1.msra.mxu0 0.0
    %4405 = vmatprep.subr.mxu0 0.0
    %4406 = vmatpush1.msra.mxu0 0.0
    %4407 = vmatprep.subr.mxu0 0.0
    %4408 = vmatpush1.msra.mxu0 0.0
    %4409 = vmatprep.subr.mxu0 0.0
    %4410 = vmatpush1.msra.mxu0 0.0
    %4411 = vmatprep.subr.mxu0 0.0
    %4412 = vmatpush1.msra.mxu0 0.0
    %4413 = vmatprep.subr.mxu0 0.0
    %4414 = vmatpush1.msra.mxu0 0.0
    %4415 = vmatprep.subr.mxu0 0.0
    %4416 = vmatpush1.msra.mxu0 0.0
    %4417 = vmatprep.subr.mxu0 0.0
    %4418 = vmatpush1.msra.mxu0 0.0
    %4419 = vmatprep.subr.mxu0 0.0
    %4420 = vmatpush1.msra.mxu0 0.0
    %4421 = vmatprep.subr.mxu0 0.0
    %4422 = vmatpush1.msra.mxu0 0.0
    %4423 = vmatprep.subr.mxu0 0.0
    %4424 = vmatpush1.msra.mxu0 0.0
    %4425 = vmatprep.subr.mxu0 0.0
    %4426 = vmatpush1.msra.mxu0 0.0
    %4427 = vmatprep.subr.mxu0 0.0
    %4428 = vmatpush1.msra.mxu0 0.0
    %4429 = vmatprep.subr.mxu0 0.0
    %4430 = vmatpush1.msra.mxu0 0.0
    %4431 = vmatprep.subr.mxu0 0.0
    %4432 = vmatpush1.msra.mxu0 0.0
    %4433 = vmatprep.subr.mxu0 0.0
    %4434 = vmatpush1.msra.mxu0 0.0
    %4435 = vmatprep.subr.mxu0 0.0
    %4436 = vmatpush1.msra.mxu0 0.0
    %4437 = vmatprep.subr.mxu0 0.0
    %4438 = vmatpush1.msra.mxu0 0.0
    %4439 = vmatprep.subr.mxu0 0.0
    %4440 = vmatpush1.msra.mxu0 0.0
    %4441 = vmatprep.subr.mxu0 0.0
    %4442 = vmatpush1.msra.mxu0 0.0
    %4443 = vmatprep.subr.mxu0 0.0
    %4444 = vmatpush1.msra.mxu0 0.0
    %4445 = vmatprep.subr.mxu0 0.0
    %4446 = vmatpush1.msra.mxu0 0.0
    %4447 = vmatprep.subr.mxu0 0.0
    %4448 = vmatpush1.msra.mxu0 0.0
    %4449 = vmatprep.subr.mxu0 0.0
    %4450 = vmatpush1.msra.mxu0 0.0
    %4451 = vmatprep.subr.mxu0 0.0
    %4452 = vmatpush1.msra.mxu0 0.0
    %4453 = vmatprep.subr.mxu0 0.0
    %4454 = vmatpush1.msra.mxu0 0.0
    %4455 = vmatprep.mubr.f32.mxu0 0.0
    %4456 = vmatmul.mubr.f32.gmra.mrb[0].mxu0 %v4389
    %v4457 = vpop.f32.mrb[0].mxu0
    %v4458 = vadd.f32 0.0, %v4457
    %v4459 = vpop.f32.mrb[0].mxu0
    %4460 = vdwg.mxu0
    %v4461 = vadd.f32 %v4381, %v4458
    %4462 = vst.msk [vmem:[#allocation4 + $0x1] sm:$0x1] %vm3328, %v4461
    // Predicated region
    $region66: #{lstm_dec_forward.1} parent=1 // pred_check
      _
    $region67: #{lstm_dec_forward.1} parent=1 // pred_check_branch
      %4464 = sbr.rel (0) target = $region69
    $region68: #{lstm_dec_forward.1} parent=1 // pred_region
      %s4466 = ssub.s32 32, 32
      %4467 = vsyncadd [#allocation5], %s4466
      %s4469 = sshll.u32 [#allocation4], 4
      %s4470 = int_to_ptr.vmem [resolvable:$true] %s4469
      %4472 = dma.vmem_to_hbm [thread:$0]  %s4470, 32, %s16, [#allocation5]
    $region69: #{lstm_dec_forward.1} parent=1 // pred_fallthru
      _
    // Predicated region
    $region70: #{lstm_dec_forward.1} parent=1 // pred_check
      _
    $region71: #{lstm_dec_forward.1} parent=1 // pred_check_branch
      %4474 = sbr.rel (0) target = $region73
    $region72: #{lstm_dec_forward.1} parent=1 // pred_region
      _
    $region73: #{lstm_dec_forward.1} parent=1 // pred_fallthru
      _
    // Predicated region
    $region74: #{lstm_dec_forward.1} parent=1 // pred_check
      _
    $region75: #{lstm_dec_forward.1} parent=1 // pred_check_branch
      %4476 = sbr.rel (0) target = $region77
    $region76: #{lstm_dec_forward.1} parent=1 // pred_region
      %4477 = dma.done [#allocation5], 32
    $region77: #{lstm_dec_forward.1} parent=1 // pred_fallthru
      _
    // Predicated region
    $region78: #{lstm_dec_forward.1} parent=1 // pred_check
      _
    $region79: #{lstm_dec_forward.1} parent=1 // pred_check_branch
      %4479 = sbr.rel (0) target = $region81
    $region80: #{lstm_dec_forward.1} parent=1 // pred_region
      _
    $region81: #{lstm_dec_forward.1} parent=1 // pred_fallthru
      _
    %4480 = vsyncpa [#allocation5], 1

</llo_original>
